<compile_context>
chip_gen: v7x
topology: tpu7x:2x2x1
jax: 0.10.0
libtpu: 0.0.40
codegen_flags: <defaults>
</compile_context>

<pallas_src>
import jax
import jax.numpy as jnp
from jax.experimental import pallas as pl
from jax.experimental.pallas import tpu as pltpu

IN_DIM = 17
CLUSTER = 5
PAD = 128  # uniform padded feature width (one full vreg lane width)

# Original 10 linear layers of the module (weights stored (in, out): y = x @ W + b).
LAYER_DIMS = [
    (IN_DIM, 10), (10, 10), (10, 10), (10, 40), (40, CLUSTER),   # encoder
    (CLUSTER, 40), (40, 10), (10, 10), (10, 10), (10, IN_DIM),   # decoder
]
# ReLU(True) after every Linear except the encoder's last (idx 4) and decoder's last (idx 9).
RELU_AFTER = {0, 1, 2, 3, 5, 6, 7, 8}

# After fusing layers 4 and 5 (no ReLU between them) there are 9 layers; ReLU after all but last.
N_FUSED = 9
FUSED_RELU = (True,) * 8 + (False,)


def ae_kernel(x_ref, w_ref, b_ref, o_ref):
    """x_ref: (tile_m, PAD); w_ref: (N_FUSED, PAD, PAD); b_ref: (N_FUSED, PAD); o_ref: (tile_m, PAD)."""
    h = x_ref[...]
    # Static unroll keeps the 9-matmul chain visible to the LLO scheduler; each weight /
    # bias read is a single one-time VMEM load per batch tile.
    for li in range(N_FUSED):
        w = w_ref[li]                    # (PAD, PAD)
        b = b_ref[pl.ds(li, 1), :]       # (1, PAD), broadcasts over the batch tile
        h = jnp.dot(h, w, preferred_element_type=jnp.float32) + b
        if FUSED_RELU[li]:
            h = jnp.maximum(h, 0.0)
    o_ref[...] = h                       # lane-dense, unmasked 128-wide store


def _round_up(x, m):
    return ((x + m - 1) // m) * m


def init_params(key):
    """Deterministic synthetic parameters (PyTorch-Linear-style uniform init)."""
    params = []
    for (din, dout) in LAYER_DIMS:
        key, kw, kb = jax.random.split(key, 3)
        bound = 1.0 / jnp.sqrt(jnp.float32(din))
        w = jax.random.uniform(kw, (din, dout), jnp.float32, -bound, bound)
        b = jax.random.uniform(kb, (1, dout), jnp.float32, -bound, bound)
        params.append((w, b))
    return params


def fuse_latent_pair(params):
    """Exactly fuse encoder-last (40->5) and decoder-first (5->40): no ReLU sits between them."""
    (w4, b4), (w5, b5) = params[4], params[5]
    w45 = w4 @ w5            # (40, 40)
    b45 = b4 @ w5 + b5       # (1, 40)
    return params[:4] + [(w45, b45)] + params[6:]


def pack_params(fused_params):
    """Zero-pad every layer to a uniform (PAD, PAD) weight block and (PAD,) bias row."""
    w_packed = jnp.zeros((N_FUSED, PAD, PAD), jnp.float32)
    b_packed = jnp.zeros((N_FUSED, PAD), jnp.float32)
    for li, (w, b) in enumerate(fused_params):
        din, dout = w.shape
        w_packed = w_packed.at[li, :din, :dout].set(w)
        b_packed = b_packed.at[li, :dout].set(b[0])
    return w_packed, b_packed


def autoencoder_forward(x, params, *, tile_m=512):
    B, D = x.shape
    assert D == IN_DIM

    w_packed, b_packed = pack_params(fuse_latent_pair(params))

    # Large batch tile (per-grid-step overhead ~0.35us), but keep >= 2 grid steps when the
    # batch allows it so v7x's two TensorCores both get work.  Rows must be a multiple of 8.
    tile_m = max(8, min(tile_m, _round_up(pl.cdiv(B, 2), 8)))
    b_pad = _round_up(B, tile_m)

    # Lane-dense input: pad features to 128 lanes, batch to a tile multiple (zeros).
    x_pad = jnp.zeros((b_pad, PAD), jnp.float32).at[:B, :D].set(x.astype(jnp.float32))

    out = pl.pallas_call(
        ae_kernel,
        out_shape=jax.ShapeDtypeStruct((b_pad, PAD), jnp.float32),
        grid_spec=pltpu.PrefetchScalarGridSpec(
            num_scalar_prefetch=0,
            grid=(b_pad // tile_m,),
            in_specs=[
                pl.BlockSpec((tile_m, PAD), lambda i: (i, 0)),
                # Grid-invariant packed weights / biases: one constant-index block each
                # (~580 KiB total), instead of 20 separately-blocked tiny inputs.
                pl.BlockSpec((N_FUSED, PAD, PAD), lambda i: (0, 0, 0)),
                pl.BlockSpec((N_FUSED, PAD), lambda i: (0, 0)),
            ],
            out_specs=pl.BlockSpec((tile_m, PAD), lambda i: (i, 0)),
        ),
        compiler_params=pltpu.CompilerParams(
            # Whole working set (double-buffered 512x128 f32 tiles + weight slab) is a few
            # MiB -- comfortably under the default 32 MiB scoped-VMEM limit on v5e/v6e/v7x.
            dimension_semantics=("parallel",),
        ),
    )(x_pad, w_packed, b_packed)

    # Slice padded lanes / padded batch rows away outside the kernel (cheap layout plumbing).
    return out[:B, :IN_DIM]


def reference_forward(x, params):
    """Pure-JAX reference of the original (un-fused, un-padded) 10-layer forward pass."""
    h = x
    for li, (w, b) in enumerate(params):
        h = h @ w + b
        if li in RELU_AFTER:
            h = jnp.maximum(h, 0.0)
    return h


if __name__ == "__main__":
    key = jax.random.PRNGKey(0)
    kx, kp = jax.random.split(key)

    B = 1024  # with tile_m=512 -> grid of 2 batch tiles
    x = jax.random.normal(kx, (B, IN_DIM), dtype=jnp.float32)
    params = init_params(kp)

    out = autoencoder_forward(x, params)
    out = jax.block_until_ready(out)

    ref = reference_forward(x, params)
    assert out.shape == (B, IN_DIM)
    assert jnp.allclose(out, ref, atol=1e-4, rtol=1e-4)

    print("KERNEL_OK")
</pallas_src>

<mosaic_0001>
module attributes {stable_mosaic.version = 11 : i64} {
  func.func @ae_kernel(%arg0: i32, %arg1: memref<512x128xf32, #tpu.memory_space<vmem>>, %arg2: memref<9x128x128xf32, #tpu.memory_space<vmem>>, %arg3: memref<9x128xf32, #tpu.memory_space<vmem>>, %arg4: memref<512x128xf32, #tpu.memory_space<vmem>>) attributes {dimension_semantics = [#tpu.dimension_semantics<parallel>], iteration_bounds = array<i64: 2>, scalar_prefetch = 0 : i64, scratch_operands = 0 : i64, tpu.core_type = #tpu.core_type<tc>, window_params = [{transform_indices = @transform_0, window_bounds = array<i64: 512, 128>}, {pipeline_mode = #tpu.pipeline_mode<synchronous>, transform_indices = @transform_1, window_bounds = array<i64: 9, 128, 128>}, {pipeline_mode = #tpu.pipeline_mode<synchronous>, transform_indices = @transform_2, window_bounds = array<i64: 9, 128>}, {transform_indices = @transform_3, window_bounds = array<i64: 512, 128>}]} {
    %c0 = arith.constant 0 : index
    %c0_0 = arith.constant 0 : index
    %0 = vector.load %arg1[%c0, %c0_0] : memref<512x128xf32, #tpu.memory_space<vmem>>, vector<512x128xf32>
    %c0_1 = arith.constant 0 : index
    %c0_2 = arith.constant 0 : index
    %c0_3 = arith.constant 0 : index
    %1 = vector.load %arg2[%c0_1, %c0_2, %c0_3] : memref<9x128x128xf32, #tpu.memory_space<vmem>>, vector<1x128x128xf32>
    %2 = vector.shape_cast %1 : vector<1x128x128xf32> to vector<128x128xf32>
    %c0_4 = arith.constant 0 : index
    %c0_5 = arith.constant 0 : index
    %3 = vector.load %arg3[%c0_4, %c0_5] : memref<9x128xf32, #tpu.memory_space<vmem>>, vector<1x128xf32>
    %cst = arith.constant dense<0.000000e+00> : vector<512x128xf32>
    %4 = tpu.matmul %0, %2, %cst {dimension_numbers = #tpu.dot_dimension_numbers<[1], [0], [0], [1], [0, 0, 1, 1], [], []>} : vector<512x128xf32>, vector<128x128xf32>, vector<512x128xf32> -> vector<512x128xf32>
    %5 = vector.broadcast %3 : vector<1x128xf32> to vector<512x128xf32>
    %6 = arith.addf %4, %5 : vector<512x128xf32>
    %cst_6 = arith.constant 0.000000e+00 : f32
    %7 = vector.broadcast %cst_6 : f32 to vector<512x128xf32>
    %8 = arith.maximumf %6, %7 : vector<512x128xf32>
    %c1 = arith.constant 1 : index
    %c0_7 = arith.constant 0 : index
    %c0_8 = arith.constant 0 : index
    %9 = vector.load %arg2[%c1, %c0_7, %c0_8] : memref<9x128x128xf32, #tpu.memory_space<vmem>>, vector<1x128x128xf32>
    %10 = vector.shape_cast %9 : vector<1x128x128xf32> to vector<128x128xf32>
    %c1_9 = arith.constant 1 : index
    %c0_10 = arith.constant 0 : index
    %11 = vector.load %arg3[%c1_9, %c0_10] : memref<9x128xf32, #tpu.memory_space<vmem>>, vector<1x128xf32>
    %cst_11 = arith.constant dense<0.000000e+00> : vector<512x128xf32>
    %12 = tpu.matmul %8, %10, %cst_11 {dimension_numbers = #tpu.dot_dimension_numbers<[1], [0], [0], [1], [0, 0, 1, 1], [], []>} : vector<512x128xf32>, vector<128x128xf32>, vector<512x128xf32> -> vector<512x128xf32>
    %13 = vector.broadcast %11 : vector<1x128xf32> to vector<512x128xf32>
    %14 = arith.addf %12, %13 : vector<512x128xf32>
    %cst_12 = arith.constant 0.000000e+00 : f32
    %15 = vector.broadcast %cst_12 : f32 to vector<512x128xf32>
    %16 = arith.maximumf %14, %15 : vector<512x128xf32>
    %c2 = arith.constant 2 : index
    %c0_13 = arith.constant 0 : index
    %c0_14 = arith.constant 0 : index
    %17 = vector.load %arg2[%c2, %c0_13, %c0_14] : memref<9x128x128xf32, #tpu.memory_space<vmem>>, vector<1x128x128xf32>
    %18 = vector.shape_cast %17 : vector<1x128x128xf32> to vector<128x128xf32>
    %c2_15 = arith.constant 2 : index
    %c0_16 = arith.constant 0 : index
    %19 = vector.load %arg3[%c2_15, %c0_16] : memref<9x128xf32, #tpu.memory_space<vmem>>, vector<1x128xf32>
    %cst_17 = arith.constant dense<0.000000e+00> : vector<512x128xf32>
    %20 = tpu.matmul %16, %18, %cst_17 {dimension_numbers = #tpu.dot_dimension_numbers<[1], [0], [0], [1], [0, 0, 1, 1], [], []>} : vector<512x128xf32>, vector<128x128xf32>, vector<512x128xf32> -> vector<512x128xf32>
    %21 = vector.broadcast %19 : vector<1x128xf32> to vector<512x128xf32>
    %22 = arith.addf %20, %21 : vector<512x128xf32>
    %cst_18 = arith.constant 0.000000e+00 : f32
    %23 = vector.broadcast %cst_18 : f32 to vector<512x128xf32>
    %24 = arith.maximumf %22, %23 : vector<512x128xf32>
    %c3 = arith.constant 3 : index
    %c0_19 = arith.constant 0 : index
    %c0_20 = arith.constant 0 : index
    %25 = vector.load %arg2[%c3, %c0_19, %c0_20] : memref<9x128x128xf32, #tpu.memory_space<vmem>>, vector<1x128x128xf32>
    %26 = vector.shape_cast %25 : vector<1x128x128xf32> to vector<128x128xf32>
    %c3_21 = arith.constant 3 : index
    %c0_22 = arith.constant 0 : index
    %27 = vector.load %arg3[%c3_21, %c0_22] : memref<9x128xf32, #tpu.memory_space<vmem>>, vector<1x128xf32>
    %cst_23 = arith.constant dense<0.000000e+00> : vector<512x128xf32>
    %28 = tpu.matmul %24, %26, %cst_23 {dimension_numbers = #tpu.dot_dimension_numbers<[1], [0], [0], [1], [0, 0, 1, 1], [], []>} : vector<512x128xf32>, vector<128x128xf32>, vector<512x128xf32> -> vector<512x128xf32>
    %29 = vector.broadcast %27 : vector<1x128xf32> to vector<512x128xf32>
    %30 = arith.addf %28, %29 : vector<512x128xf32>
    %cst_24 = arith.constant 0.000000e+00 : f32
    %31 = vector.broadcast %cst_24 : f32 to vector<512x128xf32>
    %32 = arith.maximumf %30, %31 : vector<512x128xf32>
    %c4 = arith.constant 4 : index
    %c0_25 = arith.constant 0 : index
    %c0_26 = arith.constant 0 : index
    %33 = vector.load %arg2[%c4, %c0_25, %c0_26] : memref<9x128x128xf32, #tpu.memory_space<vmem>>, vector<1x128x128xf32>
    %34 = vector.shape_cast %33 : vector<1x128x128xf32> to vector<128x128xf32>
    %c4_27 = arith.constant 4 : index
    %c0_28 = arith.constant 0 : index
    %35 = vector.load %arg3[%c4_27, %c0_28] : memref<9x128xf32, #tpu.memory_space<vmem>>, vector<1x128xf32>
    %cst_29 = arith.constant dense<0.000000e+00> : vector<512x128xf32>
    %36 = tpu.matmul %32, %34, %cst_29 {dimension_numbers = #tpu.dot_dimension_numbers<[1], [0], [0], [1], [0, 0, 1, 1], [], []>} : vector<512x128xf32>, vector<128x128xf32>, vector<512x128xf32> -> vector<512x128xf32>
    %37 = vector.broadcast %35 : vector<1x128xf32> to vector<512x128xf32>
    %38 = arith.addf %36, %37 : vector<512x128xf32>
    %cst_30 = arith.constant 0.000000e+00 : f32
    %39 = vector.broadcast %cst_30 : f32 to vector<512x128xf32>
    %40 = arith.maximumf %38, %39 : vector<512x128xf32>
    %c5 = arith.constant 5 : index
    %c0_31 = arith.constant 0 : index
    %c0_32 = arith.constant 0 : index
    %41 = vector.load %arg2[%c5, %c0_31, %c0_32] : memref<9x128x128xf32, #tpu.memory_space<vmem>>, vector<1x128x128xf32>
    %42 = vector.shape_cast %41 : vector<1x128x128xf32> to vector<128x128xf32>
    %c5_33 = arith.constant 5 : index
    %c0_34 = arith.constant 0 : index
    %43 = vector.load %arg3[%c5_33, %c0_34] : memref<9x128xf32, #tpu.memory_space<vmem>>, vector<1x128xf32>
    %cst_35 = arith.constant dense<0.000000e+00> : vector<512x128xf32>
    %44 = tpu.matmul %40, %42, %cst_35 {dimension_numbers = #tpu.dot_dimension_numbers<[1], [0], [0], [1], [0, 0, 1, 1], [], []>} : vector<512x128xf32>, vector<128x128xf32>, vector<512x128xf32> -> vector<512x128xf32>
    %45 = vector.broadcast %43 : vector<1x128xf32> to vector<512x128xf32>
    %46 = arith.addf %44, %45 : vector<512x128xf32>
    %cst_36 = arith.constant 0.000000e+00 : f32
    %47 = vector.broadcast %cst_36 : f32 to vector<512x128xf32>
    %48 = arith.maximumf %46, %47 : vector<512x128xf32>
    %c6 = arith.constant 6 : index
    %c0_37 = arith.constant 0 : index
    %c0_38 = arith.constant 0 : index
    %49 = vector.load %arg2[%c6, %c0_37, %c0_38] : memref<9x128x128xf32, #tpu.memory_space<vmem>>, vector<1x128x128xf32>
    %50 = vector.shape_cast %49 : vector<1x128x128xf32> to vector<128x128xf32>
    %c6_39 = arith.constant 6 : index
    %c0_40 = arith.constant 0 : index
    %51 = vector.load %arg3[%c6_39, %c0_40] : memref<9x128xf32, #tpu.memory_space<vmem>>, vector<1x128xf32>
    %cst_41 = arith.constant dense<0.000000e+00> : vector<512x128xf32>
    %52 = tpu.matmul %48, %50, %cst_41 {dimension_numbers = #tpu.dot_dimension_numbers<[1], [0], [0], [1], [0, 0, 1, 1], [], []>} : vector<512x128xf32>, vector<128x128xf32>, vector<512x128xf32> -> vector<512x128xf32>
    %53 = vector.broadcast %51 : vector<1x128xf32> to vector<512x128xf32>
    %54 = arith.addf %52, %53 : vector<512x128xf32>
    %cst_42 = arith.constant 0.000000e+00 : f32
    %55 = vector.broadcast %cst_42 : f32 to vector<512x128xf32>
    %56 = arith.maximumf %54, %55 : vector<512x128xf32>
    %c7 = arith.constant 7 : index
    %c0_43 = arith.constant 0 : index
    %c0_44 = arith.constant 0 : index
    %57 = vector.load %arg2[%c7, %c0_43, %c0_44] : memref<9x128x128xf32, #tpu.memory_space<vmem>>, vector<1x128x128xf32>
    %58 = vector.shape_cast %57 : vector<1x128x128xf32> to vector<128x128xf32>
    %c7_45 = arith.constant 7 : index
    %c0_46 = arith.constant 0 : index
    %59 = vector.load %arg3[%c7_45, %c0_46] : memref<9x128xf32, #tpu.memory_space<vmem>>, vector<1x128xf32>
    %cst_47 = arith.constant dense<0.000000e+00> : vector<512x128xf32>
    %60 = tpu.matmul %56, %58, %cst_47 {dimension_numbers = #tpu.dot_dimension_numbers<[1], [0], [0], [1], [0, 0, 1, 1], [], []>} : vector<512x128xf32>, vector<128x128xf32>, vector<512x128xf32> -> vector<512x128xf32>
    %61 = vector.broadcast %59 : vector<1x128xf32> to vector<512x128xf32>
    %62 = arith.addf %60, %61 : vector<512x128xf32>
    %cst_48 = arith.constant 0.000000e+00 : f32
    %63 = vector.broadcast %cst_48 : f32 to vector<512x128xf32>
    %64 = arith.maximumf %62, %63 : vector<512x128xf32>
    %c8 = arith.constant 8 : index
    %c0_49 = arith.constant 0 : index
    %c0_50 = arith.constant 0 : index
    %65 = vector.load %arg2[%c8, %c0_49, %c0_50] : memref<9x128x128xf32, #tpu.memory_space<vmem>>, vector<1x128x128xf32>
    %66 = vector.shape_cast %65 : vector<1x128x128xf32> to vector<128x128xf32>
    %c8_51 = arith.constant 8 : index
    %c0_52 = arith.constant 0 : index
    %67 = vector.load %arg3[%c8_51, %c0_52] : memref<9x128xf32, #tpu.memory_space<vmem>>, vector<1x128xf32>
    %cst_53 = arith.constant dense<0.000000e+00> : vector<512x128xf32>
    %68 = tpu.matmul %64, %66, %cst_53 {dimension_numbers = #tpu.dot_dimension_numbers<[1], [0], [0], [1], [0, 0, 1, 1], [], []>} : vector<512x128xf32>, vector<128x128xf32>, vector<512x128xf32> -> vector<512x128xf32>
    %69 = vector.broadcast %67 : vector<1x128xf32> to vector<512x128xf32>
    %70 = arith.addf %68, %69 : vector<512x128xf32>
    %c0_54 = arith.constant 0 : index
    %c0_55 = arith.constant 0 : index
    %71 = vector.load %arg4[%c0_54, %c0_55] : memref<512x128xf32, #tpu.memory_space<vmem>>, vector<512x128xf32>
    tpu.vector_store %arg4[%c0_54, %c0_55], %70 {strides = array<i32>} : memref<512x128xf32, #tpu.memory_space<vmem>>, vector<512x128xf32>,
    return
  }
  func.func @transform_0(%arg0: i32) -> (i32, i32) {
    %c0_i32 = arith.constant 0 : i32
    %c0_i32_0 = arith.constant 0 : i32
    return %arg0, %c0_i32 : i32, i32
  }
  func.func @transform_1(%arg0: i32) -> (i32, i32, i32) {
    %c0_i32 = arith.constant 0 : i32
    %c0_i32_0 = arith.constant 0 : i32
    %c0_i32_1 = arith.constant 0 : i32
    %c0_i32_2 = arith.constant 0 : i32
    return %c0_i32, %c0_i32_0, %c0_i32_1 : i32, i32, i32
  }
  func.func @transform_2(%arg0: i32) -> (i32, i32) {
    %c0_i32 = arith.constant 0 : i32
    %c0_i32_0 = arith.constant 0 : i32
    %c0_i32_1 = arith.constant 0 : i32
    return %c0_i32, %c0_i32_0 : i32, i32
  }
  func.func @transform_3(%arg0: i32) -> (i32, i32) {
    %c0_i32 = arith.constant 0 : i32
    %c0_i32_0 = arith.constant 0 : i32
    return %arg0, %c0_i32 : i32, i32
  }
}

</mosaic_0001>

<llo_original>
// kernel: tpu_custom_call.1
$region0: #{tpu_custom_call.1}
  #allocation0 [shape = 'u32[]', space=smem, size = 0x4, offset = 0x4, fixed_abs, tag = 'smem constant byte address 0x4 - core index']
  #allocation1 [shape = 'u32[144,128]{1,0:T(1,128)}', space=vmem, size = 0x12000, scoped, tag = 'internal scratch']
  %s0 = inlined_call_operand.hbm [shape: f32[1024,128], index: 0, kind: input, shape index: {}]
  %s1 = inlined_call_operand.hbm [shape: f32[9,128,128], index: 1, kind: input, shape index: {}]
  %s2 = inlined_call_operand.hbm [shape: f32[9,128], index: 2, kind: input, shape index: {}]
  %s3 = inlined_call_operand.hbm [shape: f32[1024,128], index: 3, kind: output, shape index: {}]
  %s4 = sld [smem:[#allocation0]]
  $region57: #{tpu_custom_call.1} parent=0
    _
  %s6 = ssub.s32 1, %s4
  %s7 = scalar_select 0, %s6, %s4
  $region1: #{tpu_custom_call.1} parent=0
    #allocation2 [shape = 'u8[524288]{0}', space=vmem, size = 0x80000, scoped, tag = 'input window, operand 0']
    #allocation3 [shape = 's32[2]{0}', space=sflag, size = 0x8, scoped, tag = 'scoped memory for tpu_custom_call.1']
    #allocation4 [shape = 's32[2]{0}', space=sflag, size = 0x8, scoped, tag = 'scoped memory for tpu_custom_call.1']
    #allocation5 [shape = 'u8[589824]{0}', space=vmem, size = 0x90000, scoped, tag = 'input window, operand 1, single buffered']
    #allocation6 [shape = 's32[1]{0}', space=sflag, size = 0x4, scoped, tag = 'scoped memory for tpu_custom_call.1']
    #allocation7 [shape = 'u8[8192]{0}', space=vmem, size = 0x2000, scoped, tag = 'input window, operand 2, single buffered']
    #allocation8 [shape = 'u8[524288]{0}', space=vmem, size = 0x80000, scoped, tag = 'output window, operand 0']
    %8 = vsyncpa [#allocation3], 0
    %s9 = scalar_lea.sflag [#allocation3], 1
    %10 = vsyncpa %s9, 0
    %11 = vsyncpa [#allocation6], 0
    %12 = vsyncpa [#allocation4], 0
    %s13 = scalar_lea.sflag [#allocation4], 1
    %14 = vsyncpa %s13, 0
    loop: start=0, step=1, limit=4
    $region2: #{tpu_custom_call.1} parent=1 // loop_pre_header
      _
    $region3: #{tpu_custom_call.1} parent=1 // loop_header
      %s16 = sphi 0, %s20
      %p17 = scmp.ge.s32.totalorder %s16, 4
      %s26 = sphi 0, %s28
      %s29 = sphi 0, %s26
      %s30 = sphi 0, %s29
      %s46 = sphi 0, %s30
      %s50 = sphi 0, %s50
      %s52 = sphi 0, %s50
      %s53 = sphi 0, %s52
      %s67 = sphi 0, %s53
      %s71 = sphi 0, %s71
      %s73 = sphi 0, %s71
      %s74 = sphi 0, %s73
      %s88 = sphi 0, %s74
      %s94 = sphi 0, %s96
      %s97 = sphi 0, %s94
      %s98 = sphi 0, %s97
      %s114 = sphi 0, %s98
    $region4: #{tpu_custom_call.1} parent=1 // loop_header_branch
      %19 = sbr.rel (%p17) target = $region8
    $region5: #{tpu_custom_call.1} parent=1 // loop_body
      %s21 = ssub.s32 %s16, 1
      %s22 = ssub.s32 %s16, 2
      %s23 = sadd.s32 %s16, 1
      %s24 = ssub.s32 %s16, %s23
      %p25 = scmp.eq.s32.totalorder %s24, 0
      %s27 = sadd.s32 %s26, 1
      %s28 = scalar_select %p25, %s26, %s27
      %p31 = pneg %p25
      %p32 = scmp.eq.s32.totalorder %s16, 1
      %p33 = por %p31, %p32
      %p34 = scmp.ne.s32.totalorder %s26, %s29
      %p35 = scmp.eq.s32.totalorder %s16, 0
      %p36 = por %p34, %p35
      %p37 = scmp.ne.s32.totalorder %s26, %s29
      %p38 = scmp.eq.s32.totalorder %s21, 1
      %p39 = por %p37, %p38
      %p40 = scmp.ne.s32.totalorder %s29, %s30
      %p41 = scmp.eq.s32.totalorder %s21, 0
      %p42 = por %p40, %p41
      %p43 = scmp.ne.s32.totalorder %s29, %s30
      %p44 = scmp.eq.s32.totalorder %s22, 1
      %p45 = por %p43, %p44
      %p47 = scmp.ne.s32.totalorder %s30, %s46
      %p48 = scmp.eq.s32.totalorder %s22, 0
      %p49 = por %p47, %p48
      %s51 = sadd.s32 %s50, 1
      %p54 = scmp.eq.s32.totalorder %s16, 1
      %p55 = scmp.ne.s32.totalorder %s50, %s52
      %p56 = scmp.eq.s32.totalorder %s16, 0
      %p57 = por %p55, %p56
      %p58 = scmp.ne.s32.totalorder %s50, %s52
      %p59 = scmp.eq.s32.totalorder %s21, 1
      %p60 = por %p58, %p59
      %p61 = scmp.ne.s32.totalorder %s52, %s53
      %p62 = scmp.eq.s32.totalorder %s21, 0
      %p63 = por %p61, %p62
      %p64 = scmp.ne.s32.totalorder %s52, %s53
      %p65 = scmp.eq.s32.totalorder %s22, 1
      %p66 = por %p64, %p65
      %p68 = scmp.ne.s32.totalorder %s53, %s67
      %p69 = scmp.eq.s32.totalorder %s22, 0
      %p70 = por %p68, %p69
      %s72 = sadd.s32 %s71, 1
      %p75 = scmp.eq.s32.totalorder %s16, 1
      %p76 = scmp.ne.s32.totalorder %s71, %s73
      %p77 = scmp.eq.s32.totalorder %s16, 0
      %p78 = por %p76, %p77
      %p79 = scmp.ne.s32.totalorder %s71, %s73
      %p80 = scmp.eq.s32.totalorder %s21, 1
      %p81 = por %p79, %p80
      %p82 = scmp.ne.s32.totalorder %s73, %s74
      %p83 = scmp.eq.s32.totalorder %s21, 0
      %p84 = por %p82, %p83
      %p85 = scmp.ne.s32.totalorder %s73, %s74
      %p86 = scmp.eq.s32.totalorder %s22, 1
      %p87 = por %p85, %p86
      %p89 = scmp.ne.s32.totalorder %s74, %s88
      %p90 = scmp.eq.s32.totalorder %s22, 0
      %p91 = por %p89, %p90
      %s92 = ssub.s32 %s16, %s23
      %p93 = scmp.eq.s32.totalorder %s92, 0
      %s95 = sadd.s32 %s94, 1
      %s96 = scalar_select %p93, %s94, %s95
      %p99 = pneg %p93
      %p100 = scmp.eq.s32.totalorder %s16, 1
      %p101 = por %p99, %p100
      %p102 = scmp.ne.s32.totalorder %s94, %s97
      %p103 = scmp.eq.s32.totalorder %s16, 0
      %p104 = por %p102, %p103
      %p105 = scmp.ne.s32.totalorder %s94, %s97
      %p106 = scmp.eq.s32.totalorder %s21, 1
      %p107 = por %p105, %p106
      %p108 = scmp.ne.s32.totalorder %s97, %s98
      %p109 = scmp.eq.s32.totalorder %s21, 0
      %p110 = por %p108, %p109
      %p111 = scmp.ne.s32.totalorder %s97, %s98
      %p112 = scmp.eq.s32.totalorder %s22, 1
      %p113 = por %p111, %p112
      %p115 = scmp.ne.s32.totalorder %s98, %s114
      %p116 = scmp.eq.s32.totalorder %s22, 0
      %p117 = por %p115, %p116
      %p118 = scmp.le.s32.totalorder 1, %s16
      %p119 = scmp.lt.s32.totalorder %s16, 3
      %p120 = pnand %p118, %p119
      %p121 = pneg %p120
      // Predicated region
      $region9: #{tpu_custom_call.1} parent=5 // pred_check
        _
      $region10: #{tpu_custom_call.1} parent=5 // pred_check_branch
        %123 = sbr.rel (%p120) target = $region12
      $region11: #{tpu_custom_call.1} parent=5 // pred_region
        %s124 = ssub.s32 %s16, 1
        // Predicated region
        $region13: #{tpu_custom_call.1} parent=11 // pred_check
          %p125 = pneg %p63
        $region14: #{tpu_custom_call.1} parent=11 // pred_check_branch
          %127 = sbr.rel (%p125) target = $region16
        $region15: #{tpu_custom_call.1} parent=11 // pred_region
          %s129 = ssub.s32 18432, 18432
          %130 = vsyncadd [#allocation6], %s129
          %s131 = sshll.u32 [#allocation5], 4
          %s132 = int_to_ptr.vmem [resolvable:$true] %s131
          %137 = dma.hbm_to_vmem [thread:$0]  %s1, 18432, %s132, [#allocation6], 128, 128, 8
        $region16: #{tpu_custom_call.1} parent=11 // pred_fallthru
          _
        // Predicated region
        $region17: #{tpu_custom_call.1} parent=11 // pred_check
          %p138 = pneg %p84
        $region18: #{tpu_custom_call.1} parent=11 // pred_check_branch
          %140 = sbr.rel (%p138) target = $region20
        $region19: #{tpu_custom_call.1} parent=11 // pred_region
          %s142 = ssub.s32 256, 256
          %143 = vsyncadd [#allocation6], %s142
          %s144 = sshll.u32 [#allocation7], 4
          %s145 = int_to_ptr.vmem [resolvable:$true] %s144
          %150 = dma.hbm_to_vmem [thread:$0]  %s2, 256, %s145, [#allocation6], 128, 128, 8
        $region20: #{tpu_custom_call.1} parent=11 // pred_fallthru
          _
      $region12: #{tpu_custom_call.1} parent=5 // pred_fallthru
        _
      %p151 = scmp.lt.s32.totalorder %s16, 2
      // Predicated region
      $region21: #{tpu_custom_call.1} parent=5 // pred_check
        %p152 = pneg %p151
      $region22: #{tpu_custom_call.1} parent=5 // pred_check_branch
        %154 = sbr.rel (%p152) target = $region24
      $region23: #{tpu_custom_call.1} parent=5 // pred_region
        // Predicated region
        $region25: #{tpu_custom_call.1} parent=23 // pred_check
          %p155 = pneg %p36
        $region26: #{tpu_custom_call.1} parent=23 // pred_check_branch
          %157 = sbr.rel (%p155) target = $region28
        $region27: #{tpu_custom_call.1} parent=23 // pred_region
          %s158 = sand.u32 %s26, 1
          %s159 = scalar_lea.sflag [#allocation3], %s158
          %s160 = sand.u32 %s26, 1
          %s161 = smul.addr %s160, 512
          %s162 = scalar_lea.vmem [#allocation2], %s161
          %s163 = smul.u32 64, %s16
          %s165 = ssub.s32 8192, 8192
          %166 = vsyncadd %s159, %s165
          %s167 = smul.addr %s163, 128
          %s168 = scalar_lea.hbm %s0, %s167
          %s169 = sshll.u32 %s162, 4
          %s170 = int_to_ptr.vmem [resolvable:$true] %s169
          %175 = dma.hbm_to_vmem [thread:$0]  %s168, 8192, %s170, %s159, 128, 128, 8
        $region28: #{tpu_custom_call.1} parent=23 // pred_fallthru
          _
      $region24: #{tpu_custom_call.1} parent=5 // pred_fallthru
        _
      %p176 = scmp.le.s32.totalorder 1, %s16
      %p177 = scmp.lt.s32.totalorder %s16, 3
      %p178 = pnand %p176, %p177
      %p179 = pneg %p178
      // Predicated region
      $region29: #{tpu_custom_call.1} parent=5 // pred_check
        _
      $region30: #{tpu_custom_call.1} parent=5 // pred_check_branch
        %181 = sbr.rel (%p178) target = $region32
      $region31: #{tpu_custom_call.1} parent=5 // pred_region
        %s182 = ssub.s32 %s16, 1
        %s183 = sand.u32 %s29, 1
        %s184 = scalar_lea.sflag [#allocation3], %s183
        %s185 = sand.u32 %s29, 1
        %s186 = smul.addr %s185, 512
        %s187 = scalar_lea.vmem [#allocation2], %s186
        // Predicated region
        $region33: #{tpu_custom_call.1} parent=31 // pred_check
          %p188 = pneg %p42
        $region34: #{tpu_custom_call.1} parent=31 // pred_check_branch
          %190 = sbr.rel (%p188) target = $region36
        $region35: #{tpu_custom_call.1} parent=31 // pred_region
          %191 = dma.done %s184, 8192
        $region36: #{tpu_custom_call.1} parent=31 // pred_fallthru
          _
        // Predicated region
        $region37: #{tpu_custom_call.1} parent=31 // pred_check
          %p192 = pneg %p63
        $region38: #{tpu_custom_call.1} parent=31 // pred_check_branch
          %194 = sbr.rel (%p192) target = $region40
        $region39: #{tpu_custom_call.1} parent=31 // pred_region
          %195 = dma.done [#allocation6], 18432
        $region40: #{tpu_custom_call.1} parent=31 // pred_fallthru
          _
        // Predicated region
        $region41: #{tpu_custom_call.1} parent=31 // pred_check
          %p196 = pneg %p84
        $region42: #{tpu_custom_call.1} parent=31 // pred_check_branch
          %198 = sbr.rel (%p196) target = $region44
        $region43: #{tpu_custom_call.1} parent=31 // pred_region
          %199 = dma.done [#allocation6], 256
        $region44: #{tpu_custom_call.1} parent=31 // pred_fallthru
          _
        %s200 = sand.u32 %s29, 1
        %s201 = scalar_lea.sflag [#allocation3], %s200
        %s202 = sand.u32 %s29, 1
        %s203 = smul.addr %s202, 512
        %s204 = scalar_lea.vmem [#allocation2], %s203
        %p205 = pneg %p42
        %p206 = pneg %p39
        %p207 = pneg %p63
        %p208 = pneg %p60
        %p209 = pneg %p84
        %p210 = pneg %p81
        %p211 = pneg %p110
        %p212 = pneg %p107
        %s213 = sand.u32 %s97, 1
        %s214 = scalar_lea.sflag [#allocation4], %s213
        %s215 = sand.u32 %s97, 1
        %s216 = smul.addr %s215, 512
        %s217 = scalar_lea.vmem [#allocation8], %s216
        %s218 = smul.u32 64, %s21
        %s219 = smul.u32 64, %s21
        %v220 = vld [vmem:[%s187] sm:$0xff]
        %v221 = vld [vmem:[%s187 + $0x8] sm:$0xff]
        %v222 = vld [vmem:[%s187 + $0x10] sm:$0xff]
        %v223 = vld [vmem:[%s187 + $0x18] sm:$0xff]
        %v224 = vld [vmem:[%s187 + $0x20] sm:$0xff]
        %v225 = vld [vmem:[%s187 + $0x28] sm:$0xff]
        %v226 = vld [vmem:[%s187 + $0x30] sm:$0xff]
        %v227 = vld [vmem:[%s187 + $0x38] sm:$0xff]
        %v228 = vld [vmem:[%s187 + $0x40] sm:$0xff]
        %v229 = vld [vmem:[%s187 + $0x48] sm:$0xff]
        %v230 = vld [vmem:[%s187 + $0x50] sm:$0xff]
        %v231 = vld [vmem:[%s187 + $0x58] sm:$0xff]
        %v232 = vld [vmem:[%s187 + $0x60] sm:$0xff]
        %v233 = vld [vmem:[%s187 + $0x68] sm:$0xff]
        %v234 = vld [vmem:[%s187 + $0x70] sm:$0xff]
        %v235 = vld [vmem:[%s187 + $0x78] sm:$0xff]
        %v236 = vld [vmem:[%s187 + $0x80] sm:$0xff]
        %v237 = vld [vmem:[%s187 + $0x88] sm:$0xff]
        %v238 = vld [vmem:[%s187 + $0x90] sm:$0xff]
        %v239 = vld [vmem:[%s187 + $0x98] sm:$0xff]
        %v240 = vld [vmem:[%s187 + $0xa0] sm:$0xff]
        %v241 = vld [vmem:[%s187 + $0xa8] sm:$0xff]
        %v242 = vld [vmem:[%s187 + $0xb0] sm:$0xff]
        %v243 = vld [vmem:[%s187 + $0xb8] sm:$0xff]
        %v244 = vld [vmem:[%s187 + $0xc0] sm:$0xff]
        %v245 = vld [vmem:[%s187 + $0xc8] sm:$0xff]
        %v246 = vld [vmem:[%s187 + $0xd0] sm:$0xff]
        %v247 = vld [vmem:[%s187 + $0xd8] sm:$0xff]
        %v248 = vld [vmem:[%s187 + $0xe0] sm:$0xff]
        %v249 = vld [vmem:[%s187 + $0xe8] sm:$0xff]
        %v250 = vld [vmem:[%s187 + $0xf0] sm:$0xff]
        %v251 = vld [vmem:[%s187 + $0xf8] sm:$0xff]
        %v252 = vld [vmem:[%s187 + $0x100] sm:$0xff]
        %v253 = vld [vmem:[%s187 + $0x108] sm:$0xff]
        %v254 = vld [vmem:[%s187 + $0x110] sm:$0xff]
        %v255 = vld [vmem:[%s187 + $0x118] sm:$0xff]
        %v256 = vld [vmem:[%s187 + $0x120] sm:$0xff]
        %v257 = vld [vmem:[%s187 + $0x128] sm:$0xff]
        %v258 = vld [vmem:[%s187 + $0x130] sm:$0xff]
        %v259 = vld [vmem:[%s187 + $0x138] sm:$0xff]
        %v260 = vld [vmem:[%s187 + $0x140] sm:$0xff]
        %v261 = vld [vmem:[%s187 + $0x148] sm:$0xff]
        %v262 = vld [vmem:[%s187 + $0x150] sm:$0xff]
        %v263 = vld [vmem:[%s187 + $0x158] sm:$0xff]
        %v264 = vld [vmem:[%s187 + $0x160] sm:$0xff]
        %v265 = vld [vmem:[%s187 + $0x168] sm:$0xff]
        %v266 = vld [vmem:[%s187 + $0x170] sm:$0xff]
        %v267 = vld [vmem:[%s187 + $0x178] sm:$0xff]
        %v268 = vld [vmem:[%s187 + $0x180] sm:$0xff]
        %v269 = vld [vmem:[%s187 + $0x188] sm:$0xff]
        %v270 = vld [vmem:[%s187 + $0x190] sm:$0xff]
        %v271 = vld [vmem:[%s187 + $0x198] sm:$0xff]
        %v272 = vld [vmem:[%s187 + $0x1a0] sm:$0xff]
        %v273 = vld [vmem:[%s187 + $0x1a8] sm:$0xff]
        %v274 = vld [vmem:[%s187 + $0x1b0] sm:$0xff]
        %v275 = vld [vmem:[%s187 + $0x1b8] sm:$0xff]
        %v276 = vld [vmem:[%s187 + $0x1c0] sm:$0xff]
        %v277 = vld [vmem:[%s187 + $0x1c8] sm:$0xff]
        %v278 = vld [vmem:[%s187 + $0x1d0] sm:$0xff]
        %v279 = vld [vmem:[%s187 + $0x1d8] sm:$0xff]
        %v280 = vld [vmem:[%s187 + $0x1e0] sm:$0xff]
        %v281 = vld [vmem:[%s187 + $0x1e8] sm:$0xff]
        %v282 = vld [vmem:[%s187 + $0x1f0] sm:$0xff]
        %v283 = vld [vmem:[%s187 + $0x1f8] sm:$0xff]
        %v284 = vld [vmem:[#allocation5] sm:$0xff]
        %v285 = vld [vmem:[#allocation5 + $0x8] sm:$0xff]
        %v286 = vld [vmem:[#allocation5 + $0x10] sm:$0xff]
        %v287 = vld [vmem:[#allocation5 + $0x18] sm:$0xff]
        %v288 = vld [vmem:[#allocation5 + $0x20] sm:$0xff]
        %v289 = vld [vmem:[#allocation5 + $0x28] sm:$0xff]
        %v290 = vld [vmem:[#allocation5 + $0x30] sm:$0xff]
        %v291 = vld [vmem:[#allocation5 + $0x38] sm:$0xff]
        %v292 = vld [vmem:[#allocation5 + $0x40] sm:$0xff]
        %v293 = vld [vmem:[#allocation5 + $0x48] sm:$0xff]
        %v294 = vld [vmem:[#allocation5 + $0x50] sm:$0xff]
        %v295 = vld [vmem:[#allocation5 + $0x58] sm:$0xff]
        %v296 = vld [vmem:[#allocation5 + $0x60] sm:$0xff]
        %v297 = vld [vmem:[#allocation5 + $0x68] sm:$0xff]
        %v298 = vld [vmem:[#allocation5 + $0x70] sm:$0xff]
        %v299 = vld [vmem:[#allocation5 + $0x78] sm:$0xff]
        %v300 = vld [vmem:[#allocation7] sm:$0x1]
        %v301 = vlaneseq
        %v302 = vshrl.u32 %v301, 7
        %v303 = vsub.s32 0, %v302
        %v304 = vrot.slane %v300, %v303
        %305 = vmatprep.subr.mxu0 0.0
        %306 = vmatpush1.msra.mxu0 %v284
        %307 = vmatprep.subr.mxu0 0.0
        %308 = vmatpush1.msra.mxu0 %v285
        %309 = vmatprep.subr.mxu0 0.0
        %310 = vmatpush1.msra.mxu0 %v286
        %311 = vmatprep.subr.mxu0 0.0
        %312 = vmatpush1.msra.mxu0 %v287
        %313 = vmatprep.subr.mxu0 0.0
        %314 = vmatpush1.msra.mxu0 %v288
        %315 = vmatprep.subr.mxu0 0.0
        %316 = vmatpush1.msra.mxu0 %v289
        %317 = vmatprep.subr.mxu0 0.0
        %318 = vmatpush1.msra.mxu0 %v290
        %319 = vmatprep.subr.mxu0 0.0
        %320 = vmatpush1.msra.mxu0 %v291
        %321 = vmatprep.subr.mxu0 0.0
        %322 = vmatpush1.msra.mxu0 %v292
        %323 = vmatprep.subr.mxu0 0.0
        %324 = vmatpush1.msra.mxu0 %v293
        %325 = vmatprep.subr.mxu0 0.0
        %326 = vmatpush1.msra.mxu0 %v294
        %327 = vmatprep.subr.mxu0 0.0
        %328 = vmatpush1.msra.mxu0 %v295
        %329 = vmatprep.subr.mxu0 0.0
        %330 = vmatpush1.msra.mxu0 %v296
        %331 = vmatprep.subr.mxu0 0.0
        %332 = vmatpush1.msra.mxu0 %v297
        %333 = vmatprep.subr.mxu0 0.0
        %334 = vmatpush1.msra.mxu0 %v298
        %335 = vmatprep.subr.mxu0 0.0
        %336 = vmatpush1.msra.mxu0 %v299
        %337 = vmatprep.subr.mxu0 0.0
        %338 = vmatpush1.msra.mxu0 0.0
        %339 = vmatprep.subr.mxu0 0.0
        %340 = vmatpush1.msra.mxu0 0.0
        %341 = vmatprep.subr.mxu0 0.0
        %342 = vmatpush1.msra.mxu0 0.0
        %343 = vmatprep.subr.mxu0 0.0
        %344 = vmatpush1.msra.mxu0 0.0
        %345 = vmatprep.subr.mxu0 0.0
        %346 = vmatpush1.msra.mxu0 0.0
        %347 = vmatprep.subr.mxu0 0.0
        %348 = vmatpush1.msra.mxu0 0.0
        %349 = vmatprep.subr.mxu0 0.0
        %350 = vmatpush1.msra.mxu0 0.0
        %351 = vmatprep.subr.mxu0 0.0
        %352 = vmatpush1.msra.mxu0 0.0
        %353 = vmatprep.subr.mxu0 0.0
        %354 = vmatpush1.msra.mxu0 0.0
        %355 = vmatprep.subr.mxu0 0.0
        %356 = vmatpush1.msra.mxu0 0.0
        %357 = vmatprep.subr.mxu0 0.0
        %358 = vmatpush1.msra.mxu0 0.0
        %359 = vmatprep.subr.mxu0 0.0
        %360 = vmatpush1.msra.mxu0 0.0
        %361 = vmatprep.subr.mxu0 0.0
        %362 = vmatpush1.msra.mxu0 0.0
        %363 = vmatprep.subr.mxu0 0.0
        %364 = vmatpush1.msra.mxu0 0.0
        %365 = vmatprep.subr.mxu0 0.0
        %366 = vmatpush1.msra.mxu0 0.0
        %367 = vmatprep.subr.mxu0 0.0
        %368 = vmatpush1.msra.mxu0 0.0
        %369 = vmatprep.mubr.f32.mxu0 0.0
        %370 = vmatmul.mubr.f32.gmra.mrb[0].mxu0 %v220
        %v371 = vpop.f32.mrb[0].mxu0
        %v372 = vadd.f32 %v304, %v371
        %v373 = vpop.f32.mrb[0].mxu0
        %374 = vmatprep.mubr.f32.mxu0 0.0
        %375 = vmatmul.mubr.f32.gmra.mrb[0].mxu0 %v221
        %v376 = vpop.f32.mrb[0].mxu0
        %v377 = vadd.f32 %v304, %v376
        %v378 = vpop.f32.mrb[0].mxu0
        %379 = vmatprep.mubr.f32.mxu0 0.0
        %380 = vmatmul.mubr.f32.gmra.mrb[0].mxu0 %v222
        %v381 = vpop.f32.mrb[0].mxu0
        %v382 = vadd.f32 %v304, %v381
        %v383 = vpop.f32.mrb[0].mxu0
        %384 = vmatprep.mubr.f32.mxu0 0.0
        %385 = vmatmul.mubr.f32.gmra.mrb[0].mxu0 %v223
        %v386 = vpop.f32.mrb[0].mxu0
        %v387 = vadd.f32 %v304, %v386
        %v388 = vpop.f32.mrb[0].mxu0
        %389 = vmatprep.mubr.f32.mxu0 0.0
        %390 = vmatmul.mubr.f32.gmra.mrb[0].mxu0 %v224
        %v391 = vpop.f32.mrb[0].mxu0
        %v392 = vadd.f32 %v304, %v391
        %v393 = vpop.f32.mrb[0].mxu0
        %394 = vmatprep.mubr.f32.mxu0 0.0
        %395 = vmatmul.mubr.f32.gmra.mrb[0].mxu0 %v225
        %v396 = vpop.f32.mrb[0].mxu0
        %v397 = vadd.f32 %v304, %v396
        %v398 = vpop.f32.mrb[0].mxu0
        %399 = vmatprep.mubr.f32.mxu0 0.0
        %400 = vmatmul.mubr.f32.gmra.mrb[0].mxu0 %v226
        %v401 = vpop.f32.mrb[0].mxu0
        %v402 = vadd.f32 %v304, %v401
        %v403 = vpop.f32.mrb[0].mxu0
        %404 = vmatprep.mubr.f32.mxu0 0.0
        %405 = vmatmul.mubr.f32.gmra.mrb[0].mxu0 %v227
        %v406 = vpop.f32.mrb[0].mxu0
        %v407 = vadd.f32 %v304, %v406
        %v408 = vpop.f32.mrb[0].mxu0
        %409 = vmatprep.mubr.f32.mxu0 0.0
        %410 = vmatmul.mubr.f32.gmra.mrb[0].mxu0 %v228
        %v411 = vpop.f32.mrb[0].mxu0
        %v412 = vadd.f32 %v304, %v411
        %v413 = vpop.f32.mrb[0].mxu0
        %414 = vmatprep.mubr.f32.mxu0 0.0
        %415 = vmatmul.mubr.f32.gmra.mrb[0].mxu0 %v229
        %v416 = vpop.f32.mrb[0].mxu0
        %v417 = vadd.f32 %v304, %v416
        %v418 = vpop.f32.mrb[0].mxu0
        %419 = vmatprep.mubr.f32.mxu0 0.0
        %420 = vmatmul.mubr.f32.gmra.mrb[0].mxu0 %v230
        %v421 = vpop.f32.mrb[0].mxu0
        %v422 = vadd.f32 %v304, %v421
        %v423 = vpop.f32.mrb[0].mxu0
        %424 = vmatprep.mubr.f32.mxu0 0.0
        %425 = vmatmul.mubr.f32.gmra.mrb[0].mxu0 %v231
        %v426 = vpop.f32.mrb[0].mxu0
        %v427 = vadd.f32 %v304, %v426
        %v428 = vpop.f32.mrb[0].mxu0
        %429 = vmatprep.mubr.f32.mxu0 0.0
        %430 = vmatmul.mubr.f32.gmra.mrb[0].mxu0 %v232
        %v431 = vpop.f32.mrb[0].mxu0
        %v432 = vadd.f32 %v304, %v431
        %v433 = vpop.f32.mrb[0].mxu0
        %434 = vmatprep.mubr.f32.mxu0 0.0
        %435 = vmatmul.mubr.f32.gmra.mrb[0].mxu0 %v233
        %v436 = vpop.f32.mrb[0].mxu0
        %v437 = vadd.f32 %v304, %v436
        %v438 = vpop.f32.mrb[0].mxu0
        %439 = vmatprep.mubr.f32.mxu0 0.0
        %440 = vmatmul.mubr.f32.gmra.mrb[0].mxu0 %v234
        %v441 = vpop.f32.mrb[0].mxu0
        %v442 = vadd.f32 %v304, %v441
        %v443 = vpop.f32.mrb[0].mxu0
        %444 = vmatprep.mubr.f32.mxu0 0.0
        %445 = vmatmul.mubr.f32.gmra.mrb[0].mxu0 %v235
        %v446 = vpop.f32.mrb[0].mxu0
        %v447 = vadd.f32 %v304, %v446
        %v448 = vpop.f32.mrb[0].mxu0
        %449 = vmatprep.mubr.f32.mxu0 0.0
        %450 = vmatmul.mubr.f32.gmra.mrb[0].mxu0 %v236
        %v451 = vpop.f32.mrb[0].mxu0
        %v452 = vadd.f32 %v304, %v451
        %v453 = vpop.f32.mrb[0].mxu0
        %454 = vmatprep.mubr.f32.mxu0 0.0
        %455 = vmatmul.mubr.f32.gmra.mrb[0].mxu0 %v237
        %v456 = vpop.f32.mrb[0].mxu0
        %v457 = vadd.f32 %v304, %v456
        %v458 = vpop.f32.mrb[0].mxu0
        %459 = vmatprep.mubr.f32.mxu0 0.0
        %460 = vmatmul.mubr.f32.gmra.mrb[0].mxu0 %v238
        %v461 = vpop.f32.mrb[0].mxu0
        %v462 = vadd.f32 %v304, %v461
        %v463 = vpop.f32.mrb[0].mxu0
        %464 = vmatprep.mubr.f32.mxu0 0.0
        %465 = vmatmul.mubr.f32.gmra.mrb[0].mxu0 %v239
        %v466 = vpop.f32.mrb[0].mxu0
        %v467 = vadd.f32 %v304, %v466
        %v468 = vpop.f32.mrb[0].mxu0
        %469 = vmatprep.mubr.f32.mxu0 0.0
        %470 = vmatmul.mubr.f32.gmra.mrb[0].mxu0 %v240
        %v471 = vpop.f32.mrb[0].mxu0
        %v472 = vadd.f32 %v304, %v471
        %v473 = vpop.f32.mrb[0].mxu0
        %474 = vmatprep.mubr.f32.mxu0 0.0
        %475 = vmatmul.mubr.f32.gmra.mrb[0].mxu0 %v241
        %v476 = vpop.f32.mrb[0].mxu0
        %v477 = vadd.f32 %v304, %v476
        %v478 = vpop.f32.mrb[0].mxu0
        %479 = vmatprep.mubr.f32.mxu0 0.0
        %480 = vmatmul.mubr.f32.gmra.mrb[0].mxu0 %v242
        %v481 = vpop.f32.mrb[0].mxu0
        %v482 = vadd.f32 %v304, %v481
        %v483 = vpop.f32.mrb[0].mxu0
        %484 = vmatprep.mubr.f32.mxu0 0.0
        %485 = vmatmul.mubr.f32.gmra.mrb[0].mxu0 %v243
        %v486 = vpop.f32.mrb[0].mxu0
        %v487 = vadd.f32 %v304, %v486
        %v488 = vpop.f32.mrb[0].mxu0
        %489 = vmatprep.mubr.f32.mxu0 0.0
        %490 = vmatmul.mubr.f32.gmra.mrb[0].mxu0 %v244
        %v491 = vpop.f32.mrb[0].mxu0
        %v492 = vadd.f32 %v304, %v491
        %v493 = vpop.f32.mrb[0].mxu0
        %494 = vmatprep.mubr.f32.mxu0 0.0
        %495 = vmatmul.mubr.f32.gmra.mrb[0].mxu0 %v245
        %v496 = vpop.f32.mrb[0].mxu0
        %v497 = vadd.f32 %v304, %v496
        %v498 = vpop.f32.mrb[0].mxu0
        %499 = vmatprep.mubr.f32.mxu0 0.0
        %500 = vmatmul.mubr.f32.gmra.mrb[0].mxu0 %v246
        %v501 = vpop.f32.mrb[0].mxu0
        %v502 = vadd.f32 %v304, %v501
        %v503 = vpop.f32.mrb[0].mxu0
        %504 = vmatprep.mubr.f32.mxu0 0.0
        %505 = vmatmul.mubr.f32.gmra.mrb[0].mxu0 %v247
        %v506 = vpop.f32.mrb[0].mxu0
        %v507 = vadd.f32 %v304, %v506
        %v508 = vpop.f32.mrb[0].mxu0
        %509 = vmatprep.mubr.f32.mxu0 0.0
        %510 = vmatmul.mubr.f32.gmra.mrb[0].mxu0 %v248
        %v511 = vpop.f32.mrb[0].mxu0
        %v512 = vadd.f32 %v304, %v511
        %v513 = vpop.f32.mrb[0].mxu0
        %514 = vmatprep.mubr.f32.mxu0 0.0
        %515 = vmatmul.mubr.f32.gmra.mrb[0].mxu0 %v249
        %v516 = vpop.f32.mrb[0].mxu0
        %v517 = vadd.f32 %v304, %v516
        %v518 = vpop.f32.mrb[0].mxu0
        %519 = vmatprep.mubr.f32.mxu0 0.0
        %520 = vmatmul.mubr.f32.gmra.mrb[0].mxu0 %v250
        %v521 = vpop.f32.mrb[0].mxu0
        %v522 = vadd.f32 %v304, %v521
        %v523 = vpop.f32.mrb[0].mxu0
        %524 = vmatprep.mubr.f32.mxu0 0.0
        %525 = vmatmul.mubr.f32.gmra.mrb[0].mxu0 %v251
        %v526 = vpop.f32.mrb[0].mxu0
        %v527 = vadd.f32 %v304, %v526
        %v528 = vpop.f32.mrb[0].mxu0
        %529 = vmatprep.mubr.f32.mxu0 0.0
        %530 = vmatmul.mubr.f32.gmra.mrb[0].mxu0 %v252
        %v531 = vpop.f32.mrb[0].mxu0
        %v532 = vadd.f32 %v304, %v531
        %v533 = vpop.f32.mrb[0].mxu0
        %534 = vmatprep.mubr.f32.mxu0 0.0
        %535 = vmatmul.mubr.f32.gmra.mrb[0].mxu0 %v253
        %v536 = vpop.f32.mrb[0].mxu0
        %v537 = vadd.f32 %v304, %v536
        %v538 = vpop.f32.mrb[0].mxu0
        %539 = vmatprep.mubr.f32.mxu0 0.0
        %540 = vmatmul.mubr.f32.gmra.mrb[0].mxu0 %v254
        %v541 = vpop.f32.mrb[0].mxu0
        %v542 = vadd.f32 %v304, %v541
        %v543 = vpop.f32.mrb[0].mxu0
        %544 = vmatprep.mubr.f32.mxu0 0.0
        %545 = vmatmul.mubr.f32.gmra.mrb[0].mxu0 %v255
        %v546 = vpop.f32.mrb[0].mxu0
        %v547 = vadd.f32 %v304, %v546
        %v548 = vpop.f32.mrb[0].mxu0
        %549 = vmatprep.mubr.f32.mxu0 0.0
        %550 = vmatmul.mubr.f32.gmra.mrb[0].mxu0 %v256
        %v551 = vpop.f32.mrb[0].mxu0
        %v552 = vadd.f32 %v304, %v551
        %v553 = vpop.f32.mrb[0].mxu0
        %554 = vmatprep.mubr.f32.mxu0 0.0
        %555 = vmatmul.mubr.f32.gmra.mrb[0].mxu0 %v257
        %v556 = vpop.f32.mrb[0].mxu0
        %v557 = vadd.f32 %v304, %v556
        %v558 = vpop.f32.mrb[0].mxu0
        %559 = vmatprep.mubr.f32.mxu0 0.0
        %560 = vmatmul.mubr.f32.gmra.mrb[0].mxu0 %v258
        %v561 = vpop.f32.mrb[0].mxu0
        %v562 = vadd.f32 %v304, %v561
        %v563 = vpop.f32.mrb[0].mxu0
        %564 = vmatprep.mubr.f32.mxu0 0.0
        %565 = vmatmul.mubr.f32.gmra.mrb[0].mxu0 %v259
        %v566 = vpop.f32.mrb[0].mxu0
        %v567 = vadd.f32 %v304, %v566
        %v568 = vpop.f32.mrb[0].mxu0
        %569 = vmatprep.mubr.f32.mxu0 0.0
        %570 = vmatmul.mubr.f32.gmra.mrb[0].mxu0 %v260
        %v571 = vpop.f32.mrb[0].mxu0
        %v572 = vadd.f32 %v304, %v571
        %v573 = vpop.f32.mrb[0].mxu0
        %574 = vmatprep.mubr.f32.mxu0 0.0
        %575 = vmatmul.mubr.f32.gmra.mrb[0].mxu0 %v261
        %v576 = vpop.f32.mrb[0].mxu0
        %v577 = vadd.f32 %v304, %v576
        %v578 = vpop.f32.mrb[0].mxu0
        %579 = vmatprep.mubr.f32.mxu0 0.0
        %580 = vmatmul.mubr.f32.gmra.mrb[0].mxu0 %v262
        %v581 = vpop.f32.mrb[0].mxu0
        %v582 = vadd.f32 %v304, %v581
        %v583 = vpop.f32.mrb[0].mxu0
        %584 = vmatprep.mubr.f32.mxu0 0.0
        %585 = vmatmul.mubr.f32.gmra.mrb[0].mxu0 %v263
        %v586 = vpop.f32.mrb[0].mxu0
        %v587 = vadd.f32 %v304, %v586
        %v588 = vpop.f32.mrb[0].mxu0
        %589 = vmatprep.mubr.f32.mxu0 0.0
        %590 = vmatmul.mubr.f32.gmra.mrb[0].mxu0 %v264
        %v591 = vpop.f32.mrb[0].mxu0
        %v592 = vadd.f32 %v304, %v591
        %v593 = vpop.f32.mrb[0].mxu0
        %594 = vmatprep.mubr.f32.mxu0 0.0
        %595 = vmatmul.mubr.f32.gmra.mrb[0].mxu0 %v265
        %v596 = vpop.f32.mrb[0].mxu0
        %v597 = vadd.f32 %v304, %v596
        %v598 = vpop.f32.mrb[0].mxu0
        %599 = vmatprep.mubr.f32.mxu0 0.0
        %600 = vmatmul.mubr.f32.gmra.mrb[0].mxu0 %v266
        %v601 = vpop.f32.mrb[0].mxu0
        %v602 = vadd.f32 %v304, %v601
        %v603 = vpop.f32.mrb[0].mxu0
        %604 = vmatprep.mubr.f32.mxu0 0.0
        %605 = vmatmul.mubr.f32.gmra.mrb[0].mxu0 %v267
        %v606 = vpop.f32.mrb[0].mxu0
        %v607 = vadd.f32 %v304, %v606
        %v608 = vpop.f32.mrb[0].mxu0
        %609 = vmatprep.mubr.f32.mxu0 0.0
        %610 = vmatmul.mubr.f32.gmra.mrb[0].mxu0 %v268
        %v611 = vpop.f32.mrb[0].mxu0
        %v612 = vadd.f32 %v304, %v611
        %v613 = vpop.f32.mrb[0].mxu0
        %614 = vmatprep.mubr.f32.mxu0 0.0
        %615 = vmatmul.mubr.f32.gmra.mrb[0].mxu0 %v269
        %v616 = vpop.f32.mrb[0].mxu0
        %v617 = vadd.f32 %v304, %v616
        %v618 = vpop.f32.mrb[0].mxu0
        %619 = vmatprep.mubr.f32.mxu0 0.0
        %620 = vmatmul.mubr.f32.gmra.mrb[0].mxu0 %v270
        %v621 = vpop.f32.mrb[0].mxu0
        %v622 = vadd.f32 %v304, %v621
        %v623 = vpop.f32.mrb[0].mxu0
        %624 = vmatprep.mubr.f32.mxu0 0.0
        %625 = vmatmul.mubr.f32.gmra.mrb[0].mxu0 %v271
        %v626 = vpop.f32.mrb[0].mxu0
        %v627 = vadd.f32 %v304, %v626
        %v628 = vpop.f32.mrb[0].mxu0
        %629 = vmatprep.mubr.f32.mxu0 0.0
        %630 = vmatmul.mubr.f32.gmra.mrb[0].mxu0 %v272
        %v631 = vpop.f32.mrb[0].mxu0
        %v632 = vadd.f32 %v304, %v631
        %v633 = vpop.f32.mrb[0].mxu0
        %634 = vmatprep.mubr.f32.mxu0 0.0
        %635 = vmatmul.mubr.f32.gmra.mrb[0].mxu0 %v273
        %v636 = vpop.f32.mrb[0].mxu0
        %v637 = vadd.f32 %v304, %v636
        %v638 = vpop.f32.mrb[0].mxu0
        %639 = vmatprep.mubr.f32.mxu0 0.0
        %640 = vmatmul.mubr.f32.gmra.mrb[0].mxu0 %v274
        %v641 = vpop.f32.mrb[0].mxu0
        %v642 = vadd.f32 %v304, %v641
        %v643 = vpop.f32.mrb[0].mxu0
        %644 = vmatprep.mubr.f32.mxu0 0.0
        %645 = vmatmul.mubr.f32.gmra.mrb[0].mxu0 %v275
        %v646 = vpop.f32.mrb[0].mxu0
        %v647 = vadd.f32 %v304, %v646
        %v648 = vpop.f32.mrb[0].mxu0
        %649 = vmatprep.mubr.f32.mxu0 0.0
        %650 = vmatmul.mubr.f32.gmra.mrb[0].mxu0 %v276
        %v651 = vpop.f32.mrb[0].mxu0
        %v652 = vadd.f32 %v304, %v651
        %v653 = vpop.f32.mrb[0].mxu0
        %654 = vmatprep.mubr.f32.mxu0 0.0
        %655 = vmatmul.mubr.f32.gmra.mrb[0].mxu0 %v277
        %v656 = vpop.f32.mrb[0].mxu0
        %v657 = vadd.f32 %v304, %v656
        %v658 = vpop.f32.mrb[0].mxu0
        %659 = vmatprep.mubr.f32.mxu0 0.0
        %660 = vmatmul.mubr.f32.gmra.mrb[0].mxu0 %v278
        %v661 = vpop.f32.mrb[0].mxu0
        %v662 = vadd.f32 %v304, %v661
        %v663 = vpop.f32.mrb[0].mxu0
        %664 = vmatprep.mubr.f32.mxu0 0.0
        %665 = vmatmul.mubr.f32.gmra.mrb[0].mxu0 %v279
        %v666 = vpop.f32.mrb[0].mxu0
        %v667 = vadd.f32 %v304, %v666
        %v668 = vpop.f32.mrb[0].mxu0
        %669 = vmatprep.mubr.f32.mxu0 0.0
        %670 = vmatmul.mubr.f32.gmra.mrb[0].mxu0 %v280
        %v671 = vpop.f32.mrb[0].mxu0
        %v672 = vadd.f32 %v304, %v671
        %v673 = vpop.f32.mrb[0].mxu0
        %674 = vmatprep.mubr.f32.mxu0 0.0
        %675 = vmatmul.mubr.f32.gmra.mrb[0].mxu0 %v281
        %v676 = vpop.f32.mrb[0].mxu0
        %v677 = vadd.f32 %v304, %v676
        %v678 = vpop.f32.mrb[0].mxu0
        %679 = vmatprep.mubr.f32.mxu0 0.0
        %680 = vmatmul.mubr.f32.gmra.mrb[0].mxu0 %v282
        %v681 = vpop.f32.mrb[0].mxu0
        %v682 = vadd.f32 %v304, %v681
        %v683 = vpop.f32.mrb[0].mxu0
        %684 = vmatprep.mubr.f32.mxu0 0.0
        %685 = vmatmul.mubr.f32.gmra.mrb[0].mxu0 %v283
        %v686 = vpop.f32.mrb[0].mxu0
        %v687 = vadd.f32 %v304, %v686
        %v688 = vpop.f32.mrb[0].mxu0
        %689 = vdwg.mxu0
        %v690 = vmax.f32 %v372, 0.0
        %v691 = vmax.f32 %v377, 0.0
        %v692 = vmax.f32 %v382, 0.0
        %v693 = vmax.f32 %v387, 0.0
        %v694 = vmax.f32 %v392, 0.0
        %v695 = vmax.f32 %v397, 0.0
        %v696 = vmax.f32 %v402, 0.0
        %v697 = vmax.f32 %v407, 0.0
        %v698 = vmax.f32 %v412, 0.0
        %v699 = vmax.f32 %v417, 0.0
        %v700 = vmax.f32 %v422, 0.0
        %v701 = vmax.f32 %v427, 0.0
        %v702 = vmax.f32 %v432, 0.0
        %v703 = vmax.f32 %v437, 0.0
        %v704 = vmax.f32 %v442, 0.0
        %v705 = vmax.f32 %v447, 0.0
        %v706 = vmax.f32 %v452, 0.0
        %v707 = vmax.f32 %v457, 0.0
        %v708 = vmax.f32 %v462, 0.0
        %v709 = vmax.f32 %v467, 0.0
        %v710 = vmax.f32 %v472, 0.0
        %v711 = vmax.f32 %v477, 0.0
        %v712 = vmax.f32 %v482, 0.0
        %v713 = vmax.f32 %v487, 0.0
        %v714 = vmax.f32 %v492, 0.0
        %v715 = vmax.f32 %v497, 0.0
        %v716 = vmax.f32 %v502, 0.0
        %v717 = vmax.f32 %v507, 0.0
        %v718 = vmax.f32 %v512, 0.0
        %v719 = vmax.f32 %v517, 0.0
        %v720 = vmax.f32 %v522, 0.0
        %v721 = vmax.f32 %v527, 0.0
        %v722 = vmax.f32 %v532, 0.0
        %v723 = vmax.f32 %v537, 0.0
        %v724 = vmax.f32 %v542, 0.0
        %v725 = vmax.f32 %v547, 0.0
        %v726 = vmax.f32 %v552, 0.0
        %v727 = vmax.f32 %v557, 0.0
        %v728 = vmax.f32 %v562, 0.0
        %v729 = vmax.f32 %v567, 0.0
        %v730 = vmax.f32 %v572, 0.0
        %v731 = vmax.f32 %v577, 0.0
        %v732 = vmax.f32 %v582, 0.0
        %v733 = vmax.f32 %v587, 0.0
        %v734 = vmax.f32 %v592, 0.0
        %v735 = vmax.f32 %v597, 0.0
        %v736 = vmax.f32 %v602, 0.0
        %v737 = vmax.f32 %v607, 0.0
        %v738 = vmax.f32 %v612, 0.0
        %v739 = vmax.f32 %v617, 0.0
        %v740 = vmax.f32 %v622, 0.0
        %v741 = vmax.f32 %v627, 0.0
        %v742 = vmax.f32 %v632, 0.0
        %v743 = vmax.f32 %v637, 0.0
        %v744 = vmax.f32 %v642, 0.0
        %v745 = vmax.f32 %v647, 0.0
        %v746 = vmax.f32 %v652, 0.0
        %v747 = vmax.f32 %v657, 0.0
        %v748 = vmax.f32 %v662, 0.0
        %v749 = vmax.f32 %v667, 0.0
        %v750 = vmax.f32 %v672, 0.0
        %v751 = vmax.f32 %v677, 0.0
        %v752 = vmax.f32 %v682, 0.0
        %v753 = vmax.f32 %v687, 0.0
        %s754 = scalar_lea.vmem [#allocation5], 128
        %v755 = vld [vmem:[%s754] sm:$0xff]
        %v756 = vld [vmem:[%s754 + $0x8] sm:$0xff]
        %v757 = vld [vmem:[%s754 + $0x10] sm:$0xff]
        %v758 = vld [vmem:[%s754 + $0x18] sm:$0xff]
        %v759 = vld [vmem:[%s754 + $0x20] sm:$0xff]
        %v760 = vld [vmem:[%s754 + $0x28] sm:$0xff]
        %v761 = vld [vmem:[%s754 + $0x30] sm:$0xff]
        %v762 = vld [vmem:[%s754 + $0x38] sm:$0xff]
        %v763 = vld [vmem:[%s754 + $0x40] sm:$0xff]
        %v764 = vld [vmem:[%s754 + $0x48] sm:$0xff]
        %v765 = vld [vmem:[%s754 + $0x50] sm:$0xff]
        %v766 = vld [vmem:[%s754 + $0x58] sm:$0xff]
        %v767 = vld [vmem:[%s754 + $0x60] sm:$0xff]
        %v768 = vld [vmem:[%s754 + $0x68] sm:$0xff]
        %v769 = vld [vmem:[%s754 + $0x70] sm:$0xff]
        %v770 = vld [vmem:[%s754 + $0x78] sm:$0xff]
        %v771 = vld [vmem:[#allocation7 + $0x1] sm:$0x1]
        %v772 = vlaneseq
        %v773 = vshrl.u32 %v772, 7
        %v774 = vsub.s32 0, %v773
        %v775 = vrot.slane %v771, %v774
        %776 = vmatprep.subr.mxu0 0.0
        %777 = vmatpush1.msra.mxu0 %v755
        %778 = vmatprep.subr.mxu0 0.0
        %779 = vmatpush1.msra.mxu0 %v756
        %780 = vmatprep.subr.mxu0 0.0
        %781 = vmatpush1.msra.mxu0 %v757
        %782 = vmatprep.subr.mxu0 0.0
        %783 = vmatpush1.msra.mxu0 %v758
        %784 = vmatprep.subr.mxu0 0.0
        %785 = vmatpush1.msra.mxu0 %v759
        %786 = vmatprep.subr.mxu0 0.0
        %787 = vmatpush1.msra.mxu0 %v760
        %788 = vmatprep.subr.mxu0 0.0
        %789 = vmatpush1.msra.mxu0 %v761
        %790 = vmatprep.subr.mxu0 0.0
        %791 = vmatpush1.msra.mxu0 %v762
        %792 = vmatprep.subr.mxu0 0.0
        %793 = vmatpush1.msra.mxu0 %v763
        %794 = vmatprep.subr.mxu0 0.0
        %795 = vmatpush1.msra.mxu0 %v764
        %796 = vmatprep.subr.mxu0 0.0
        %797 = vmatpush1.msra.mxu0 %v765
        %798 = vmatprep.subr.mxu0 0.0
        %799 = vmatpush1.msra.mxu0 %v766
        %800 = vmatprep.subr.mxu0 0.0
        %801 = vmatpush1.msra.mxu0 %v767
        %802 = vmatprep.subr.mxu0 0.0
        %803 = vmatpush1.msra.mxu0 %v768
        %804 = vmatprep.subr.mxu0 0.0
        %805 = vmatpush1.msra.mxu0 %v769
        %806 = vmatprep.subr.mxu0 0.0
        %807 = vmatpush1.msra.mxu0 %v770
        %808 = vmatprep.subr.mxu0 0.0
        %809 = vmatpush1.msra.mxu0 0.0
        %810 = vmatprep.subr.mxu0 0.0
        %811 = vmatpush1.msra.mxu0 0.0
        %812 = vmatprep.subr.mxu0 0.0
        %813 = vmatpush1.msra.mxu0 0.0
        %814 = vmatprep.subr.mxu0 0.0
        %815 = vmatpush1.msra.mxu0 0.0
        %816 = vmatprep.subr.mxu0 0.0
        %817 = vmatpush1.msra.mxu0 0.0
        %818 = vmatprep.subr.mxu0 0.0
        %819 = vmatpush1.msra.mxu0 0.0
        %820 = vmatprep.subr.mxu0 0.0
        %821 = vmatpush1.msra.mxu0 0.0
        %822 = vmatprep.subr.mxu0 0.0
        %823 = vmatpush1.msra.mxu0 0.0
        %824 = vmatprep.subr.mxu0 0.0
        %825 = vmatpush1.msra.mxu0 0.0
        %826 = vmatprep.subr.mxu0 0.0
        %827 = vmatpush1.msra.mxu0 0.0
        %828 = vmatprep.subr.mxu0 0.0
        %829 = vmatpush1.msra.mxu0 0.0
        %830 = vmatprep.subr.mxu0 0.0
        %831 = vmatpush1.msra.mxu0 0.0
        %832 = vmatprep.subr.mxu0 0.0
        %833 = vmatpush1.msra.mxu0 0.0
        %834 = vmatprep.subr.mxu0 0.0
        %835 = vmatpush1.msra.mxu0 0.0
        %836 = vmatprep.subr.mxu0 0.0
        %837 = vmatpush1.msra.mxu0 0.0
        %838 = vmatprep.subr.mxu0 0.0
        %839 = vmatpush1.msra.mxu0 0.0
        %840 = vmatprep.mubr.f32.mxu0 0.0
        %841 = vmatmul.mubr.f32.gmra.mrb[0].mxu0 %v690
        %v842 = vpop.f32.mrb[0].mxu0
        %v843 = vadd.f32 %v775, %v842
        %v844 = vpop.f32.mrb[0].mxu0
        %845 = vmatprep.mubr.f32.mxu0 0.0
        %846 = vmatmul.mubr.f32.gmra.mrb[0].mxu0 %v691
        %v847 = vpop.f32.mrb[0].mxu0
        %v848 = vadd.f32 %v775, %v847
        %v849 = vpop.f32.mrb[0].mxu0
        %850 = vmatprep.mubr.f32.mxu0 0.0
        %851 = vmatmul.mubr.f32.gmra.mrb[0].mxu0 %v692
        %v852 = vpop.f32.mrb[0].mxu0
        %v853 = vadd.f32 %v775, %v852
        %v854 = vpop.f32.mrb[0].mxu0
        %855 = vmatprep.mubr.f32.mxu0 0.0
        %856 = vmatmul.mubr.f32.gmra.mrb[0].mxu0 %v693
        %v857 = vpop.f32.mrb[0].mxu0
        %v858 = vadd.f32 %v775, %v857
        %v859 = vpop.f32.mrb[0].mxu0
        %860 = vmatprep.mubr.f32.mxu0 0.0
        %861 = vmatmul.mubr.f32.gmra.mrb[0].mxu0 %v694
        %v862 = vpop.f32.mrb[0].mxu0
        %v863 = vadd.f32 %v775, %v862
        %v864 = vpop.f32.mrb[0].mxu0
        %865 = vmatprep.mubr.f32.mxu0 0.0
        %866 = vmatmul.mubr.f32.gmra.mrb[0].mxu0 %v695
        %v867 = vpop.f32.mrb[0].mxu0
        %v868 = vadd.f32 %v775, %v867
        %v869 = vpop.f32.mrb[0].mxu0
        %870 = vmatprep.mubr.f32.mxu0 0.0
        %871 = vmatmul.mubr.f32.gmra.mrb[0].mxu0 %v696
        %v872 = vpop.f32.mrb[0].mxu0
        %v873 = vadd.f32 %v775, %v872
        %v874 = vpop.f32.mrb[0].mxu0
        %875 = vmatprep.mubr.f32.mxu0 0.0
        %876 = vmatmul.mubr.f32.gmra.mrb[0].mxu0 %v697
        %v877 = vpop.f32.mrb[0].mxu0
        %v878 = vadd.f32 %v775, %v877
        %v879 = vpop.f32.mrb[0].mxu0
        %880 = vmatprep.mubr.f32.mxu0 0.0
        %881 = vmatmul.mubr.f32.gmra.mrb[0].mxu0 %v698
        %v882 = vpop.f32.mrb[0].mxu0
        %v883 = vadd.f32 %v775, %v882
        %v884 = vpop.f32.mrb[0].mxu0
        %885 = vmatprep.mubr.f32.mxu0 0.0
        %886 = vmatmul.mubr.f32.gmra.mrb[0].mxu0 %v699
        %v887 = vpop.f32.mrb[0].mxu0
        %v888 = vadd.f32 %v775, %v887
        %v889 = vpop.f32.mrb[0].mxu0
        %890 = vmatprep.mubr.f32.mxu0 0.0
        %891 = vmatmul.mubr.f32.gmra.mrb[0].mxu0 %v700
        %v892 = vpop.f32.mrb[0].mxu0
        %v893 = vadd.f32 %v775, %v892
        %v894 = vpop.f32.mrb[0].mxu0
        %895 = vmatprep.mubr.f32.mxu0 0.0
        %896 = vmatmul.mubr.f32.gmra.mrb[0].mxu0 %v701
        %v897 = vpop.f32.mrb[0].mxu0
        %v898 = vadd.f32 %v775, %v897
        %v899 = vpop.f32.mrb[0].mxu0
        %900 = vmatprep.mubr.f32.mxu0 0.0
        %901 = vmatmul.mubr.f32.gmra.mrb[0].mxu0 %v702
        %v902 = vpop.f32.mrb[0].mxu0
        %v903 = vadd.f32 %v775, %v902
        %v904 = vpop.f32.mrb[0].mxu0
        %905 = vmatprep.mubr.f32.mxu0 0.0
        %906 = vmatmul.mubr.f32.gmra.mrb[0].mxu0 %v703
        %v907 = vpop.f32.mrb[0].mxu0
        %v908 = vadd.f32 %v775, %v907
        %v909 = vpop.f32.mrb[0].mxu0
        %910 = vmatprep.mubr.f32.mxu0 0.0
        %911 = vmatmul.mubr.f32.gmra.mrb[0].mxu0 %v704
        %v912 = vpop.f32.mrb[0].mxu0
        %v913 = vadd.f32 %v775, %v912
        %v914 = vpop.f32.mrb[0].mxu0
        %915 = vmatprep.mubr.f32.mxu0 0.0
        %916 = vmatmul.mubr.f32.gmra.mrb[0].mxu0 %v705
        %v917 = vpop.f32.mrb[0].mxu0
        %v918 = vadd.f32 %v775, %v917
        %v919 = vpop.f32.mrb[0].mxu0
        %920 = vmatprep.mubr.f32.mxu0 0.0
        %921 = vmatmul.mubr.f32.gmra.mrb[0].mxu0 %v706
        %v922 = vpop.f32.mrb[0].mxu0
        %v923 = vadd.f32 %v775, %v922
        %v924 = vpop.f32.mrb[0].mxu0
        %925 = vmatprep.mubr.f32.mxu0 0.0
        %926 = vmatmul.mubr.f32.gmra.mrb[0].mxu0 %v707
        %v927 = vpop.f32.mrb[0].mxu0
        %v928 = vadd.f32 %v775, %v927
        %v929 = vpop.f32.mrb[0].mxu0
        %930 = vmatprep.mubr.f32.mxu0 0.0
        %931 = vmatmul.mubr.f32.gmra.mrb[0].mxu0 %v708
        %v932 = vpop.f32.mrb[0].mxu0
        %v933 = vadd.f32 %v775, %v932
        %v934 = vpop.f32.mrb[0].mxu0
        %935 = vmatprep.mubr.f32.mxu0 0.0
        %936 = vmatmul.mubr.f32.gmra.mrb[0].mxu0 %v709
        %v937 = vpop.f32.mrb[0].mxu0
        %v938 = vadd.f32 %v775, %v937
        %v939 = vpop.f32.mrb[0].mxu0
        %940 = vmatprep.mubr.f32.mxu0 0.0
        %941 = vmatmul.mubr.f32.gmra.mrb[0].mxu0 %v710
        %v942 = vpop.f32.mrb[0].mxu0
        %v943 = vadd.f32 %v775, %v942
        %v944 = vpop.f32.mrb[0].mxu0
        %945 = vmatprep.mubr.f32.mxu0 0.0
        %946 = vmatmul.mubr.f32.gmra.mrb[0].mxu0 %v711
        %v947 = vpop.f32.mrb[0].mxu0
        %v948 = vadd.f32 %v775, %v947
        %v949 = vpop.f32.mrb[0].mxu0
        %950 = vmatprep.mubr.f32.mxu0 0.0
        %951 = vmatmul.mubr.f32.gmra.mrb[0].mxu0 %v712
        %v952 = vpop.f32.mrb[0].mxu0
        %v953 = vadd.f32 %v775, %v952
        %v954 = vpop.f32.mrb[0].mxu0
        %955 = vmatprep.mubr.f32.mxu0 0.0
        %956 = vmatmul.mubr.f32.gmra.mrb[0].mxu0 %v713
        %v957 = vpop.f32.mrb[0].mxu0
        %v958 = vadd.f32 %v775, %v957
        %v959 = vpop.f32.mrb[0].mxu0
        %960 = vmatprep.mubr.f32.mxu0 0.0
        %961 = vmatmul.mubr.f32.gmra.mrb[0].mxu0 %v714
        %v962 = vpop.f32.mrb[0].mxu0
        %v963 = vadd.f32 %v775, %v962
        %v964 = vpop.f32.mrb[0].mxu0
        %965 = vmatprep.mubr.f32.mxu0 0.0
        %966 = vmatmul.mubr.f32.gmra.mrb[0].mxu0 %v715
        %v967 = vpop.f32.mrb[0].mxu0
        %v968 = vadd.f32 %v775, %v967
        %v969 = vpop.f32.mrb[0].mxu0
        %970 = vmatprep.mubr.f32.mxu0 0.0
        %971 = vmatmul.mubr.f32.gmra.mrb[0].mxu0 %v716
        %v972 = vpop.f32.mrb[0].mxu0
        %v973 = vadd.f32 %v775, %v972
        %v974 = vpop.f32.mrb[0].mxu0
        %975 = vmatprep.mubr.f32.mxu0 0.0
        %976 = vmatmul.mubr.f32.gmra.mrb[0].mxu0 %v717
        %v977 = vpop.f32.mrb[0].mxu0
        %v978 = vadd.f32 %v775, %v977
        %v979 = vpop.f32.mrb[0].mxu0
        %980 = vmatprep.mubr.f32.mxu0 0.0
        %981 = vmatmul.mubr.f32.gmra.mrb[0].mxu0 %v718
        %v982 = vpop.f32.mrb[0].mxu0
        %v983 = vadd.f32 %v775, %v982
        %v984 = vpop.f32.mrb[0].mxu0
        %985 = vmatprep.mubr.f32.mxu0 0.0
        %986 = vmatmul.mubr.f32.gmra.mrb[0].mxu0 %v719
        %v987 = vpop.f32.mrb[0].mxu0
        %v988 = vadd.f32 %v775, %v987
        %v989 = vpop.f32.mrb[0].mxu0
        %990 = vmatprep.mubr.f32.mxu0 0.0
        %991 = vmatmul.mubr.f32.gmra.mrb[0].mxu0 %v720
        %v992 = vpop.f32.mrb[0].mxu0
        %v993 = vadd.f32 %v775, %v992
        %v994 = vpop.f32.mrb[0].mxu0
        %995 = vmatprep.mubr.f32.mxu0 0.0
        %996 = vmatmul.mubr.f32.gmra.mrb[0].mxu0 %v721
        %v997 = vpop.f32.mrb[0].mxu0
        %v998 = vadd.f32 %v775, %v997
        %v999 = vpop.f32.mrb[0].mxu0
        %1000 = vmatprep.mubr.f32.mxu0 0.0
        %1001 = vmatmul.mubr.f32.gmra.mrb[0].mxu0 %v722
        %v1002 = vpop.f32.mrb[0].mxu0
        %v1003 = vadd.f32 %v775, %v1002
        %v1004 = vpop.f32.mrb[0].mxu0
        %1005 = vmatprep.mubr.f32.mxu0 0.0
        %1006 = vmatmul.mubr.f32.gmra.mrb[0].mxu0 %v723
        %v1007 = vpop.f32.mrb[0].mxu0
        %v1008 = vadd.f32 %v775, %v1007
        %v1009 = vpop.f32.mrb[0].mxu0
        %1010 = vmatprep.mubr.f32.mxu0 0.0
        %1011 = vmatmul.mubr.f32.gmra.mrb[0].mxu0 %v724
        %v1012 = vpop.f32.mrb[0].mxu0
        %v1013 = vadd.f32 %v775, %v1012
        %v1014 = vpop.f32.mrb[0].mxu0
        %1015 = vmatprep.mubr.f32.mxu0 0.0
        %1016 = vmatmul.mubr.f32.gmra.mrb[0].mxu0 %v725
        %v1017 = vpop.f32.mrb[0].mxu0
        %v1018 = vadd.f32 %v775, %v1017
        %v1019 = vpop.f32.mrb[0].mxu0
        %1020 = vmatprep.mubr.f32.mxu0 0.0
        %1021 = vmatmul.mubr.f32.gmra.mrb[0].mxu0 %v726
        %v1022 = vpop.f32.mrb[0].mxu0
        %v1023 = vadd.f32 %v775, %v1022
        %v1024 = vpop.f32.mrb[0].mxu0
        %1025 = vmatprep.mubr.f32.mxu0 0.0
        %1026 = vmatmul.mubr.f32.gmra.mrb[0].mxu0 %v727
        %v1027 = vpop.f32.mrb[0].mxu0
        %v1028 = vadd.f32 %v775, %v1027
        %v1029 = vpop.f32.mrb[0].mxu0
        %1030 = vmatprep.mubr.f32.mxu0 0.0
        %1031 = vmatmul.mubr.f32.gmra.mrb[0].mxu0 %v728
        %v1032 = vpop.f32.mrb[0].mxu0
        %v1033 = vadd.f32 %v775, %v1032
        %v1034 = vpop.f32.mrb[0].mxu0
        %1035 = vmatprep.mubr.f32.mxu0 0.0
        %1036 = vmatmul.mubr.f32.gmra.mrb[0].mxu0 %v729
        %v1037 = vpop.f32.mrb[0].mxu0
        %v1038 = vadd.f32 %v775, %v1037
        %v1039 = vpop.f32.mrb[0].mxu0
        %1040 = vmatprep.mubr.f32.mxu0 0.0
        %1041 = vmatmul.mubr.f32.gmra.mrb[0].mxu0 %v730
        %v1042 = vpop.f32.mrb[0].mxu0
        %v1043 = vadd.f32 %v775, %v1042
        %v1044 = vpop.f32.mrb[0].mxu0
        %1045 = vmatprep.mubr.f32.mxu0 0.0
        %1046 = vmatmul.mubr.f32.gmra.mrb[0].mxu0 %v731
        %v1047 = vpop.f32.mrb[0].mxu0
        %v1048 = vadd.f32 %v775, %v1047
        %v1049 = vpop.f32.mrb[0].mxu0
        %1050 = vmatprep.mubr.f32.mxu0 0.0
        %1051 = vmatmul.mubr.f32.gmra.mrb[0].mxu0 %v732
        %v1052 = vpop.f32.mrb[0].mxu0
        %v1053 = vadd.f32 %v775, %v1052
        %v1054 = vpop.f32.mrb[0].mxu0
        %1055 = vmatprep.mubr.f32.mxu0 0.0
        %1056 = vmatmul.mubr.f32.gmra.mrb[0].mxu0 %v733
        %v1057 = vpop.f32.mrb[0].mxu0
        %v1058 = vadd.f32 %v775, %v1057
        %v1059 = vpop.f32.mrb[0].mxu0
        %1060 = vmatprep.mubr.f32.mxu0 0.0
        %1061 = vmatmul.mubr.f32.gmra.mrb[0].mxu0 %v734
        %v1062 = vpop.f32.mrb[0].mxu0
        %v1063 = vadd.f32 %v775, %v1062
        %v1064 = vpop.f32.mrb[0].mxu0
        %1065 = vmatprep.mubr.f32.mxu0 0.0
        %1066 = vmatmul.mubr.f32.gmra.mrb[0].mxu0 %v735
        %v1067 = vpop.f32.mrb[0].mxu0
        %v1068 = vadd.f32 %v775, %v1067
        %v1069 = vpop.f32.mrb[0].mxu0
        %1070 = vmatprep.mubr.f32.mxu0 0.0
        %1071 = vmatmul.mubr.f32.gmra.mrb[0].mxu0 %v736
        %v1072 = vpop.f32.mrb[0].mxu0
        %v1073 = vadd.f32 %v775, %v1072
        %v1074 = vpop.f32.mrb[0].mxu0
        %1075 = vmatprep.mubr.f32.mxu0 0.0
        %1076 = vmatmul.mubr.f32.gmra.mrb[0].mxu0 %v737
        %v1077 = vpop.f32.mrb[0].mxu0
        %v1078 = vadd.f32 %v775, %v1077
        %v1079 = vpop.f32.mrb[0].mxu0
        %1080 = vmatprep.mubr.f32.mxu0 0.0
        %1081 = vmatmul.mubr.f32.gmra.mrb[0].mxu0 %v738
        %v1082 = vpop.f32.mrb[0].mxu0
        %v1083 = vadd.f32 %v775, %v1082
        %v1084 = vpop.f32.mrb[0].mxu0
        %1085 = vmatprep.mubr.f32.mxu0 0.0
        %1086 = vmatmul.mubr.f32.gmra.mrb[0].mxu0 %v739
        %v1087 = vpop.f32.mrb[0].mxu0
        %v1088 = vadd.f32 %v775, %v1087
        %v1089 = vpop.f32.mrb[0].mxu0
        %1090 = vmatprep.mubr.f32.mxu0 0.0
        %1091 = vmatmul.mubr.f32.gmra.mrb[0].mxu0 %v740
        %v1092 = vpop.f32.mrb[0].mxu0
        %v1093 = vadd.f32 %v775, %v1092
        %v1094 = vpop.f32.mrb[0].mxu0
        %1095 = vmatprep.mubr.f32.mxu0 0.0
        %1096 = vmatmul.mubr.f32.gmra.mrb[0].mxu0 %v741
        %v1097 = vpop.f32.mrb[0].mxu0
        %v1098 = vadd.f32 %v775, %v1097
        %v1099 = vpop.f32.mrb[0].mxu0
        %1100 = vmatprep.mubr.f32.mxu0 0.0
        %1101 = vmatmul.mubr.f32.gmra.mrb[0].mxu0 %v742
        %v1102 = vpop.f32.mrb[0].mxu0
        %v1103 = vadd.f32 %v775, %v1102
        %v1104 = vpop.f32.mrb[0].mxu0
        %1105 = vmatprep.mubr.f32.mxu0 0.0
        %1106 = vmatmul.mubr.f32.gmra.mrb[0].mxu0 %v743
        %v1107 = vpop.f32.mrb[0].mxu0
        %v1108 = vadd.f32 %v775, %v1107
        %v1109 = vpop.f32.mrb[0].mxu0
        %1110 = vmatprep.mubr.f32.mxu0 0.0
        %1111 = vmatmul.mubr.f32.gmra.mrb[0].mxu0 %v744
        %v1112 = vpop.f32.mrb[0].mxu0
        %v1113 = vadd.f32 %v775, %v1112
        %v1114 = vpop.f32.mrb[0].mxu0
        %1115 = vmatprep.mubr.f32.mxu0 0.0
        %1116 = vmatmul.mubr.f32.gmra.mrb[0].mxu0 %v745
        %v1117 = vpop.f32.mrb[0].mxu0
        %v1118 = vadd.f32 %v775, %v1117
        %v1119 = vpop.f32.mrb[0].mxu0
        %1120 = vmatprep.mubr.f32.mxu0 0.0
        %1121 = vmatmul.mubr.f32.gmra.mrb[0].mxu0 %v746
        %v1122 = vpop.f32.mrb[0].mxu0
        %v1123 = vadd.f32 %v775, %v1122
        %v1124 = vpop.f32.mrb[0].mxu0
        %1125 = vmatprep.mubr.f32.mxu0 0.0
        %1126 = vmatmul.mubr.f32.gmra.mrb[0].mxu0 %v747
        %v1127 = vpop.f32.mrb[0].mxu0
        %v1128 = vadd.f32 %v775, %v1127
        %v1129 = vpop.f32.mrb[0].mxu0
        %1130 = vmatprep.mubr.f32.mxu0 0.0
        %1131 = vmatmul.mubr.f32.gmra.mrb[0].mxu0 %v748
        %v1132 = vpop.f32.mrb[0].mxu0
        %v1133 = vadd.f32 %v775, %v1132
        %v1134 = vpop.f32.mrb[0].mxu0
        %1135 = vmatprep.mubr.f32.mxu0 0.0
        %1136 = vmatmul.mubr.f32.gmra.mrb[0].mxu0 %v749
        %v1137 = vpop.f32.mrb[0].mxu0
        %v1138 = vadd.f32 %v775, %v1137
        %v1139 = vpop.f32.mrb[0].mxu0
        %1140 = vmatprep.mubr.f32.mxu0 0.0
        %1141 = vmatmul.mubr.f32.gmra.mrb[0].mxu0 %v750
        %v1142 = vpop.f32.mrb[0].mxu0
        %v1143 = vadd.f32 %v775, %v1142
        %v1144 = vpop.f32.mrb[0].mxu0
        %1145 = vmatprep.mubr.f32.mxu0 0.0
        %1146 = vmatmul.mubr.f32.gmra.mrb[0].mxu0 %v751
        %v1147 = vpop.f32.mrb[0].mxu0
        %v1148 = vadd.f32 %v775, %v1147
        %v1149 = vpop.f32.mrb[0].mxu0
        %1150 = vmatprep.mubr.f32.mxu0 0.0
        %1151 = vmatmul.mubr.f32.gmra.mrb[0].mxu0 %v752
        %v1152 = vpop.f32.mrb[0].mxu0
        %v1153 = vadd.f32 %v775, %v1152
        %v1154 = vpop.f32.mrb[0].mxu0
        %1155 = vmatprep.mubr.f32.mxu0 0.0
        %1156 = vmatmul.mubr.f32.gmra.mrb[0].mxu0 %v753
        %v1157 = vpop.f32.mrb[0].mxu0
        %v1158 = vadd.f32 %v775, %v1157
        %v1159 = vpop.f32.mrb[0].mxu0
        %1160 = vdwg.mxu0
        %v1161 = vmax.f32 %v843, 0.0
        %v1162 = vmax.f32 %v848, 0.0
        %v1163 = vmax.f32 %v853, 0.0
        %v1164 = vmax.f32 %v858, 0.0
        %v1165 = vmax.f32 %v863, 0.0
        %v1166 = vmax.f32 %v868, 0.0
        %v1167 = vmax.f32 %v873, 0.0
        %v1168 = vmax.f32 %v878, 0.0
        %v1169 = vmax.f32 %v883, 0.0
        %v1170 = vmax.f32 %v888, 0.0
        %v1171 = vmax.f32 %v893, 0.0
        %v1172 = vmax.f32 %v898, 0.0
        %v1173 = vmax.f32 %v903, 0.0
        %v1174 = vmax.f32 %v908, 0.0
        %v1175 = vmax.f32 %v913, 0.0
        %v1176 = vmax.f32 %v918, 0.0
        %v1177 = vmax.f32 %v923, 0.0
        %v1178 = vmax.f32 %v928, 0.0
        %v1179 = vmax.f32 %v933, 0.0
        %v1180 = vmax.f32 %v938, 0.0
        %v1181 = vmax.f32 %v943, 0.0
        %v1182 = vmax.f32 %v948, 0.0
        %v1183 = vmax.f32 %v953, 0.0
        %v1184 = vmax.f32 %v958, 0.0
        %v1185 = vmax.f32 %v963, 0.0
        %v1186 = vmax.f32 %v968, 0.0
        %v1187 = vmax.f32 %v973, 0.0
        %v1188 = vmax.f32 %v978, 0.0
        %v1189 = vmax.f32 %v983, 0.0
        %v1190 = vmax.f32 %v988, 0.0
        %v1191 = vmax.f32 %v993, 0.0
        %v1192 = vmax.f32 %v998, 0.0
        %v1193 = vmax.f32 %v1003, 0.0
        %v1194 = vmax.f32 %v1008, 0.0
        %v1195 = vmax.f32 %v1013, 0.0
        %v1196 = vmax.f32 %v1018, 0.0
        %v1197 = vmax.f32 %v1023, 0.0
        %v1198 = vmax.f32 %v1028, 0.0
        %v1199 = vmax.f32 %v1033, 0.0
        %v1200 = vmax.f32 %v1038, 0.0
        %v1201 = vmax.f32 %v1043, 0.0
        %v1202 = vmax.f32 %v1048, 0.0
        %v1203 = vmax.f32 %v1053, 0.0
        %v1204 = vmax.f32 %v1058, 0.0
        %v1205 = vmax.f32 %v1063, 0.0
        %v1206 = vmax.f32 %v1068, 0.0
        %v1207 = vmax.f32 %v1073, 0.0
        %v1208 = vmax.f32 %v1078, 0.0
        %v1209 = vmax.f32 %v1083, 0.0
        %v1210 = vmax.f32 %v1088, 0.0
        %v1211 = vmax.f32 %v1093, 0.0
        %v1212 = vmax.f32 %v1098, 0.0
        %v1213 = vmax.f32 %v1103, 0.0
        %v1214 = vmax.f32 %v1108, 0.0
        %v1215 = vmax.f32 %v1113, 0.0
        %v1216 = vmax.f32 %v1118, 0.0
        %v1217 = vmax.f32 %v1123, 0.0
        %v1218 = vmax.f32 %v1128, 0.0
        %v1219 = vmax.f32 %v1133, 0.0
        %v1220 = vmax.f32 %v1138, 0.0
        %v1221 = vmax.f32 %v1143, 0.0
        %v1222 = vmax.f32 %v1148, 0.0
        %v1223 = vmax.f32 %v1153, 0.0
        %v1224 = vmax.f32 %v1158, 0.0
        %s1225 = scalar_lea.vmem [#allocation5], 256
        %v1226 = vld [vmem:[%s1225] sm:$0xff]
        %v1227 = vld [vmem:[%s1225 + $0x8] sm:$0xff]
        %v1228 = vld [vmem:[%s1225 + $0x10] sm:$0xff]
        %v1229 = vld [vmem:[%s1225 + $0x18] sm:$0xff]
        %v1230 = vld [vmem:[%s1225 + $0x20] sm:$0xff]
        %v1231 = vld [vmem:[%s1225 + $0x28] sm:$0xff]
        %v1232 = vld [vmem:[%s1225 + $0x30] sm:$0xff]
        %v1233 = vld [vmem:[%s1225 + $0x38] sm:$0xff]
        %v1234 = vld [vmem:[%s1225 + $0x40] sm:$0xff]
        %v1235 = vld [vmem:[%s1225 + $0x48] sm:$0xff]
        %v1236 = vld [vmem:[%s1225 + $0x50] sm:$0xff]
        %v1237 = vld [vmem:[%s1225 + $0x58] sm:$0xff]
        %v1238 = vld [vmem:[%s1225 + $0x60] sm:$0xff]
        %v1239 = vld [vmem:[%s1225 + $0x68] sm:$0xff]
        %v1240 = vld [vmem:[%s1225 + $0x70] sm:$0xff]
        %v1241 = vld [vmem:[%s1225 + $0x78] sm:$0xff]
        %v1242 = vld [vmem:[#allocation7 + $0x2] sm:$0x1]
        %v1243 = vlaneseq
        %v1244 = vshrl.u32 %v1243, 7
        %v1245 = vsub.s32 0, %v1244
        %v1246 = vrot.slane %v1242, %v1245
        %1247 = vmatprep.subr.mxu0 0.0
        %1248 = vmatpush1.msra.mxu0 %v1226
        %1249 = vmatprep.subr.mxu0 0.0
        %1250 = vmatpush1.msra.mxu0 %v1227
        %1251 = vmatprep.subr.mxu0 0.0
        %1252 = vmatpush1.msra.mxu0 %v1228
        %1253 = vmatprep.subr.mxu0 0.0
        %1254 = vmatpush1.msra.mxu0 %v1229
        %1255 = vmatprep.subr.mxu0 0.0
        %1256 = vmatpush1.msra.mxu0 %v1230
        %1257 = vmatprep.subr.mxu0 0.0
        %1258 = vmatpush1.msra.mxu0 %v1231
        %1259 = vmatprep.subr.mxu0 0.0
        %1260 = vmatpush1.msra.mxu0 %v1232
        %1261 = vmatprep.subr.mxu0 0.0
        %1262 = vmatpush1.msra.mxu0 %v1233
        %1263 = vmatprep.subr.mxu0 0.0
        %1264 = vmatpush1.msra.mxu0 %v1234
        %1265 = vmatprep.subr.mxu0 0.0
        %1266 = vmatpush1.msra.mxu0 %v1235
        %1267 = vmatprep.subr.mxu0 0.0
        %1268 = vmatpush1.msra.mxu0 %v1236
        %1269 = vmatprep.subr.mxu0 0.0
        %1270 = vmatpush1.msra.mxu0 %v1237
        %1271 = vmatprep.subr.mxu0 0.0
        %1272 = vmatpush1.msra.mxu0 %v1238
        %1273 = vmatprep.subr.mxu0 0.0
        %1274 = vmatpush1.msra.mxu0 %v1239
        %1275 = vmatprep.subr.mxu0 0.0
        %1276 = vmatpush1.msra.mxu0 %v1240
        %1277 = vmatprep.subr.mxu0 0.0
        %1278 = vmatpush1.msra.mxu0 %v1241
        %1279 = vmatprep.subr.mxu0 0.0
        %1280 = vmatpush1.msra.mxu0 0.0
        %1281 = vmatprep.subr.mxu0 0.0
        %1282 = vmatpush1.msra.mxu0 0.0
        %1283 = vmatprep.subr.mxu0 0.0
        %1284 = vmatpush1.msra.mxu0 0.0
        %1285 = vmatprep.subr.mxu0 0.0
        %1286 = vmatpush1.msra.mxu0 0.0
        %1287 = vmatprep.subr.mxu0 0.0
        %1288 = vmatpush1.msra.mxu0 0.0
        %1289 = vmatprep.subr.mxu0 0.0
        %1290 = vmatpush1.msra.mxu0 0.0
        %1291 = vmatprep.subr.mxu0 0.0
        %1292 = vmatpush1.msra.mxu0 0.0
        %1293 = vmatprep.subr.mxu0 0.0
        %1294 = vmatpush1.msra.mxu0 0.0
        %1295 = vmatprep.subr.mxu0 0.0
        %1296 = vmatpush1.msra.mxu0 0.0
        %1297 = vmatprep.subr.mxu0 0.0
        %1298 = vmatpush1.msra.mxu0 0.0
        %1299 = vmatprep.subr.mxu0 0.0
        %1300 = vmatpush1.msra.mxu0 0.0
        %1301 = vmatprep.subr.mxu0 0.0
        %1302 = vmatpush1.msra.mxu0 0.0
        %1303 = vmatprep.subr.mxu0 0.0
        %1304 = vmatpush1.msra.mxu0 0.0
        %1305 = vmatprep.subr.mxu0 0.0
        %1306 = vmatpush1.msra.mxu0 0.0
        %1307 = vmatprep.subr.mxu0 0.0
        %1308 = vmatpush1.msra.mxu0 0.0
        %1309 = vmatprep.subr.mxu0 0.0
        %1310 = vmatpush1.msra.mxu0 0.0
        %1311 = vmatprep.mubr.f32.mxu0 0.0
        %1312 = vmatmul.mubr.f32.gmra.mrb[0].mxu0 %v1161
        %v1313 = vpop.f32.mrb[0].mxu0
        %v1314 = vadd.f32 %v1246, %v1313
        %v1315 = vpop.f32.mrb[0].mxu0
        %1316 = vmatprep.mubr.f32.mxu0 0.0
        %1317 = vmatmul.mubr.f32.gmra.mrb[0].mxu0 %v1162
        %v1318 = vpop.f32.mrb[0].mxu0
        %v1319 = vadd.f32 %v1246, %v1318
        %v1320 = vpop.f32.mrb[0].mxu0
        %1321 = vmatprep.mubr.f32.mxu0 0.0
        %1322 = vmatmul.mubr.f32.gmra.mrb[0].mxu0 %v1163
        %v1323 = vpop.f32.mrb[0].mxu0
        %v1324 = vadd.f32 %v1246, %v1323
        %v1325 = vpop.f32.mrb[0].mxu0
        %1326 = vmatprep.mubr.f32.mxu0 0.0
        %1327 = vmatmul.mubr.f32.gmra.mrb[0].mxu0 %v1164
        %v1328 = vpop.f32.mrb[0].mxu0
        %v1329 = vadd.f32 %v1246, %v1328
        %v1330 = vpop.f32.mrb[0].mxu0
        %1331 = vmatprep.mubr.f32.mxu0 0.0
        %1332 = vmatmul.mubr.f32.gmra.mrb[0].mxu0 %v1165
        %v1333 = vpop.f32.mrb[0].mxu0
        %v1334 = vadd.f32 %v1246, %v1333
        %v1335 = vpop.f32.mrb[0].mxu0
        %1336 = vmatprep.mubr.f32.mxu0 0.0
        %1337 = vmatmul.mubr.f32.gmra.mrb[0].mxu0 %v1166
        %v1338 = vpop.f32.mrb[0].mxu0
        %v1339 = vadd.f32 %v1246, %v1338
        %v1340 = vpop.f32.mrb[0].mxu0
        %1341 = vmatprep.mubr.f32.mxu0 0.0
        %1342 = vmatmul.mubr.f32.gmra.mrb[0].mxu0 %v1167
        %v1343 = vpop.f32.mrb[0].mxu0
        %v1344 = vadd.f32 %v1246, %v1343
        %v1345 = vpop.f32.mrb[0].mxu0
        %1346 = vmatprep.mubr.f32.mxu0 0.0
        %1347 = vmatmul.mubr.f32.gmra.mrb[0].mxu0 %v1168
        %v1348 = vpop.f32.mrb[0].mxu0
        %v1349 = vadd.f32 %v1246, %v1348
        %v1350 = vpop.f32.mrb[0].mxu0
        %1351 = vmatprep.mubr.f32.mxu0 0.0
        %1352 = vmatmul.mubr.f32.gmra.mrb[0].mxu0 %v1169
        %v1353 = vpop.f32.mrb[0].mxu0
        %v1354 = vadd.f32 %v1246, %v1353
        %v1355 = vpop.f32.mrb[0].mxu0
        %1356 = vmatprep.mubr.f32.mxu0 0.0
        %1357 = vmatmul.mubr.f32.gmra.mrb[0].mxu0 %v1170
        %v1358 = vpop.f32.mrb[0].mxu0
        %v1359 = vadd.f32 %v1246, %v1358
        %v1360 = vpop.f32.mrb[0].mxu0
        %1361 = vmatprep.mubr.f32.mxu0 0.0
        %1362 = vmatmul.mubr.f32.gmra.mrb[0].mxu0 %v1171
        %v1363 = vpop.f32.mrb[0].mxu0
        %v1364 = vadd.f32 %v1246, %v1363
        %v1365 = vpop.f32.mrb[0].mxu0
        %1366 = vmatprep.mubr.f32.mxu0 0.0
        %1367 = vmatmul.mubr.f32.gmra.mrb[0].mxu0 %v1172
        %v1368 = vpop.f32.mrb[0].mxu0
        %v1369 = vadd.f32 %v1246, %v1368
        %v1370 = vpop.f32.mrb[0].mxu0
        %1371 = vmatprep.mubr.f32.mxu0 0.0
        %1372 = vmatmul.mubr.f32.gmra.mrb[0].mxu0 %v1173
        %v1373 = vpop.f32.mrb[0].mxu0
        %v1374 = vadd.f32 %v1246, %v1373
        %v1375 = vpop.f32.mrb[0].mxu0
        %1376 = vmatprep.mubr.f32.mxu0 0.0
        %1377 = vmatmul.mubr.f32.gmra.mrb[0].mxu0 %v1174
        %v1378 = vpop.f32.mrb[0].mxu0
        %v1379 = vadd.f32 %v1246, %v1378
        %v1380 = vpop.f32.mrb[0].mxu0
        %1381 = vmatprep.mubr.f32.mxu0 0.0
        %1382 = vmatmul.mubr.f32.gmra.mrb[0].mxu0 %v1175
        %v1383 = vpop.f32.mrb[0].mxu0
        %v1384 = vadd.f32 %v1246, %v1383
        %v1385 = vpop.f32.mrb[0].mxu0
        %1386 = vmatprep.mubr.f32.mxu0 0.0
        %1387 = vmatmul.mubr.f32.gmra.mrb[0].mxu0 %v1176
        %v1388 = vpop.f32.mrb[0].mxu0
        %v1389 = vadd.f32 %v1246, %v1388
        %v1390 = vpop.f32.mrb[0].mxu0
        %1391 = vmatprep.mubr.f32.mxu0 0.0
        %1392 = vmatmul.mubr.f32.gmra.mrb[0].mxu0 %v1177
        %v1393 = vpop.f32.mrb[0].mxu0
        %v1394 = vadd.f32 %v1246, %v1393
        %v1395 = vpop.f32.mrb[0].mxu0
        %1396 = vmatprep.mubr.f32.mxu0 0.0
        %1397 = vmatmul.mubr.f32.gmra.mrb[0].mxu0 %v1178
        %v1398 = vpop.f32.mrb[0].mxu0
        %v1399 = vadd.f32 %v1246, %v1398
        %v1400 = vpop.f32.mrb[0].mxu0
        %1401 = vmatprep.mubr.f32.mxu0 0.0
        %1402 = vmatmul.mubr.f32.gmra.mrb[0].mxu0 %v1179
        %v1403 = vpop.f32.mrb[0].mxu0
        %v1404 = vadd.f32 %v1246, %v1403
        %v1405 = vpop.f32.mrb[0].mxu0
        %1406 = vmatprep.mubr.f32.mxu0 0.0
        %1407 = vmatmul.mubr.f32.gmra.mrb[0].mxu0 %v1180
        %v1408 = vpop.f32.mrb[0].mxu0
        %v1409 = vadd.f32 %v1246, %v1408
        %v1410 = vpop.f32.mrb[0].mxu0
        %1411 = vmatprep.mubr.f32.mxu0 0.0
        %1412 = vmatmul.mubr.f32.gmra.mrb[0].mxu0 %v1181
        %v1413 = vpop.f32.mrb[0].mxu0
        %v1414 = vadd.f32 %v1246, %v1413
        %v1415 = vpop.f32.mrb[0].mxu0
        %1416 = vmatprep.mubr.f32.mxu0 0.0
        %1417 = vmatmul.mubr.f32.gmra.mrb[0].mxu0 %v1182
        %v1418 = vpop.f32.mrb[0].mxu0
        %v1419 = vadd.f32 %v1246, %v1418
        %v1420 = vpop.f32.mrb[0].mxu0
        %1421 = vmatprep.mubr.f32.mxu0 0.0
        %1422 = vmatmul.mubr.f32.gmra.mrb[0].mxu0 %v1183
        %v1423 = vpop.f32.mrb[0].mxu0
        %v1424 = vadd.f32 %v1246, %v1423
        %v1425 = vpop.f32.mrb[0].mxu0
        %1426 = vmatprep.mubr.f32.mxu0 0.0
        %1427 = vmatmul.mubr.f32.gmra.mrb[0].mxu0 %v1184
        %v1428 = vpop.f32.mrb[0].mxu0
        %v1429 = vadd.f32 %v1246, %v1428
        %v1430 = vpop.f32.mrb[0].mxu0
        %1431 = vmatprep.mubr.f32.mxu0 0.0
        %1432 = vmatmul.mubr.f32.gmra.mrb[0].mxu0 %v1185
        %v1433 = vpop.f32.mrb[0].mxu0
        %v1434 = vadd.f32 %v1246, %v1433
        %v1435 = vpop.f32.mrb[0].mxu0
        %1436 = vmatprep.mubr.f32.mxu0 0.0
        %1437 = vmatmul.mubr.f32.gmra.mrb[0].mxu0 %v1186
        %v1438 = vpop.f32.mrb[0].mxu0
        %v1439 = vadd.f32 %v1246, %v1438
        %v1440 = vpop.f32.mrb[0].mxu0
        %1441 = vmatprep.mubr.f32.mxu0 0.0
        %1442 = vmatmul.mubr.f32.gmra.mrb[0].mxu0 %v1187
        %v1443 = vpop.f32.mrb[0].mxu0
        %v1444 = vadd.f32 %v1246, %v1443
        %v1445 = vpop.f32.mrb[0].mxu0
        %1446 = vmatprep.mubr.f32.mxu0 0.0
        %1447 = vmatmul.mubr.f32.gmra.mrb[0].mxu0 %v1188
        %v1448 = vpop.f32.mrb[0].mxu0
        %v1449 = vadd.f32 %v1246, %v1448
        %v1450 = vpop.f32.mrb[0].mxu0
        %1451 = vmatprep.mubr.f32.mxu0 0.0
        %1452 = vmatmul.mubr.f32.gmra.mrb[0].mxu0 %v1189
        %v1453 = vpop.f32.mrb[0].mxu0
        %v1454 = vadd.f32 %v1246, %v1453
        %v1455 = vpop.f32.mrb[0].mxu0
        %1456 = vmatprep.mubr.f32.mxu0 0.0
        %1457 = vmatmul.mubr.f32.gmra.mrb[0].mxu0 %v1190
        %v1458 = vpop.f32.mrb[0].mxu0
        %v1459 = vadd.f32 %v1246, %v1458
        %v1460 = vpop.f32.mrb[0].mxu0
        %1461 = vmatprep.mubr.f32.mxu0 0.0
        %1462 = vmatmul.mubr.f32.gmra.mrb[0].mxu0 %v1191
        %v1463 = vpop.f32.mrb[0].mxu0
        %v1464 = vadd.f32 %v1246, %v1463
        %v1465 = vpop.f32.mrb[0].mxu0
        %1466 = vmatprep.mubr.f32.mxu0 0.0
        %1467 = vmatmul.mubr.f32.gmra.mrb[0].mxu0 %v1192
        %v1468 = vpop.f32.mrb[0].mxu0
        %v1469 = vadd.f32 %v1246, %v1468
        %v1470 = vpop.f32.mrb[0].mxu0
        %1471 = vmatprep.mubr.f32.mxu0 0.0
        %1472 = vmatmul.mubr.f32.gmra.mrb[0].mxu0 %v1193
        %v1473 = vpop.f32.mrb[0].mxu0
        %v1474 = vadd.f32 %v1246, %v1473
        %v1475 = vpop.f32.mrb[0].mxu0
        %1476 = vmatprep.mubr.f32.mxu0 0.0
        %1477 = vmatmul.mubr.f32.gmra.mrb[0].mxu0 %v1194
        %v1478 = vpop.f32.mrb[0].mxu0
        %v1479 = vadd.f32 %v1246, %v1478
        %v1480 = vpop.f32.mrb[0].mxu0
        %1481 = vmatprep.mubr.f32.mxu0 0.0
        %1482 = vmatmul.mubr.f32.gmra.mrb[0].mxu0 %v1195
        %v1483 = vpop.f32.mrb[0].mxu0
        %v1484 = vadd.f32 %v1246, %v1483
        %v1485 = vpop.f32.mrb[0].mxu0
        %1486 = vmatprep.mubr.f32.mxu0 0.0
        %1487 = vmatmul.mubr.f32.gmra.mrb[0].mxu0 %v1196
        %v1488 = vpop.f32.mrb[0].mxu0
        %v1489 = vadd.f32 %v1246, %v1488
        %v1490 = vpop.f32.mrb[0].mxu0
        %1491 = vmatprep.mubr.f32.mxu0 0.0
        %1492 = vmatmul.mubr.f32.gmra.mrb[0].mxu0 %v1197
        %v1493 = vpop.f32.mrb[0].mxu0
        %v1494 = vadd.f32 %v1246, %v1493
        %v1495 = vpop.f32.mrb[0].mxu0
        %1496 = vmatprep.mubr.f32.mxu0 0.0
        %1497 = vmatmul.mubr.f32.gmra.mrb[0].mxu0 %v1198
        %v1498 = vpop.f32.mrb[0].mxu0
        %v1499 = vadd.f32 %v1246, %v1498
        %v1500 = vpop.f32.mrb[0].mxu0
        %1501 = vmatprep.mubr.f32.mxu0 0.0
        %1502 = vmatmul.mubr.f32.gmra.mrb[0].mxu0 %v1199
        %v1503 = vpop.f32.mrb[0].mxu0
        %v1504 = vadd.f32 %v1246, %v1503
        %v1505 = vpop.f32.mrb[0].mxu0
        %1506 = vmatprep.mubr.f32.mxu0 0.0
        %1507 = vmatmul.mubr.f32.gmra.mrb[0].mxu0 %v1200
        %v1508 = vpop.f32.mrb[0].mxu0
        %v1509 = vadd.f32 %v1246, %v1508
        %v1510 = vpop.f32.mrb[0].mxu0
        %1511 = vmatprep.mubr.f32.mxu0 0.0
        %1512 = vmatmul.mubr.f32.gmra.mrb[0].mxu0 %v1201
        %v1513 = vpop.f32.mrb[0].mxu0
        %v1514 = vadd.f32 %v1246, %v1513
        %v1515 = vpop.f32.mrb[0].mxu0
        %1516 = vmatprep.mubr.f32.mxu0 0.0
        %1517 = vmatmul.mubr.f32.gmra.mrb[0].mxu0 %v1202
        %v1518 = vpop.f32.mrb[0].mxu0
        %v1519 = vadd.f32 %v1246, %v1518
        %v1520 = vpop.f32.mrb[0].mxu0
        %1521 = vmatprep.mubr.f32.mxu0 0.0
        %1522 = vmatmul.mubr.f32.gmra.mrb[0].mxu0 %v1203
        %v1523 = vpop.f32.mrb[0].mxu0
        %v1524 = vadd.f32 %v1246, %v1523
        %v1525 = vpop.f32.mrb[0].mxu0
        %1526 = vmatprep.mubr.f32.mxu0 0.0
        %1527 = vmatmul.mubr.f32.gmra.mrb[0].mxu0 %v1204
        %v1528 = vpop.f32.mrb[0].mxu0
        %v1529 = vadd.f32 %v1246, %v1528
        %v1530 = vpop.f32.mrb[0].mxu0
        %1531 = vmatprep.mubr.f32.mxu0 0.0
        %1532 = vmatmul.mubr.f32.gmra.mrb[0].mxu0 %v1205
        %v1533 = vpop.f32.mrb[0].mxu0
        %v1534 = vadd.f32 %v1246, %v1533
        %v1535 = vpop.f32.mrb[0].mxu0
        %1536 = vmatprep.mubr.f32.mxu0 0.0
        %1537 = vmatmul.mubr.f32.gmra.mrb[0].mxu0 %v1206
        %v1538 = vpop.f32.mrb[0].mxu0
        %v1539 = vadd.f32 %v1246, %v1538
        %v1540 = vpop.f32.mrb[0].mxu0
        %1541 = vmatprep.mubr.f32.mxu0 0.0
        %1542 = vmatmul.mubr.f32.gmra.mrb[0].mxu0 %v1207
        %v1543 = vpop.f32.mrb[0].mxu0
        %v1544 = vadd.f32 %v1246, %v1543
        %v1545 = vpop.f32.mrb[0].mxu0
        %1546 = vmatprep.mubr.f32.mxu0 0.0
        %1547 = vmatmul.mubr.f32.gmra.mrb[0].mxu0 %v1208
        %v1548 = vpop.f32.mrb[0].mxu0
        %v1549 = vadd.f32 %v1246, %v1548
        %v1550 = vpop.f32.mrb[0].mxu0
        %1551 = vmatprep.mubr.f32.mxu0 0.0
        %1552 = vmatmul.mubr.f32.gmra.mrb[0].mxu0 %v1209
        %v1553 = vpop.f32.mrb[0].mxu0
        %v1554 = vadd.f32 %v1246, %v1553
        %v1555 = vpop.f32.mrb[0].mxu0
        %1556 = vmatprep.mubr.f32.mxu0 0.0
        %1557 = vmatmul.mubr.f32.gmra.mrb[0].mxu0 %v1210
        %v1558 = vpop.f32.mrb[0].mxu0
        %v1559 = vadd.f32 %v1246, %v1558
        %v1560 = vpop.f32.mrb[0].mxu0
        %1561 = vmatprep.mubr.f32.mxu0 0.0
        %1562 = vmatmul.mubr.f32.gmra.mrb[0].mxu0 %v1211
        %v1563 = vpop.f32.mrb[0].mxu0
        %v1564 = vadd.f32 %v1246, %v1563
        %v1565 = vpop.f32.mrb[0].mxu0
        %1566 = vmatprep.mubr.f32.mxu0 0.0
        %1567 = vmatmul.mubr.f32.gmra.mrb[0].mxu0 %v1212
        %v1568 = vpop.f32.mrb[0].mxu0
        %v1569 = vadd.f32 %v1246, %v1568
        %v1570 = vpop.f32.mrb[0].mxu0
        %1571 = vmatprep.mubr.f32.mxu0 0.0
        %1572 = vmatmul.mubr.f32.gmra.mrb[0].mxu0 %v1213
        %v1573 = vpop.f32.mrb[0].mxu0
        %v1574 = vadd.f32 %v1246, %v1573
        %v1575 = vpop.f32.mrb[0].mxu0
        %1576 = vmatprep.mubr.f32.mxu0 0.0
        %1577 = vmatmul.mubr.f32.gmra.mrb[0].mxu0 %v1214
        %v1578 = vpop.f32.mrb[0].mxu0
        %v1579 = vadd.f32 %v1246, %v1578
        %v1580 = vpop.f32.mrb[0].mxu0
        %1581 = vmatprep.mubr.f32.mxu0 0.0
        %1582 = vmatmul.mubr.f32.gmra.mrb[0].mxu0 %v1215
        %v1583 = vpop.f32.mrb[0].mxu0
        %v1584 = vadd.f32 %v1246, %v1583
        %v1585 = vpop.f32.mrb[0].mxu0
        %1586 = vmatprep.mubr.f32.mxu0 0.0
        %1587 = vmatmul.mubr.f32.gmra.mrb[0].mxu0 %v1216
        %v1588 = vpop.f32.mrb[0].mxu0
        %v1589 = vadd.f32 %v1246, %v1588
        %v1590 = vpop.f32.mrb[0].mxu0
        %1591 = vmatprep.mubr.f32.mxu0 0.0
        %1592 = vmatmul.mubr.f32.gmra.mrb[0].mxu0 %v1217
        %v1593 = vpop.f32.mrb[0].mxu0
        %v1594 = vadd.f32 %v1246, %v1593
        %v1595 = vpop.f32.mrb[0].mxu0
        %1596 = vmatprep.mubr.f32.mxu0 0.0
        %1597 = vmatmul.mubr.f32.gmra.mrb[0].mxu0 %v1218
        %v1598 = vpop.f32.mrb[0].mxu0
        %v1599 = vadd.f32 %v1246, %v1598
        %v1600 = vpop.f32.mrb[0].mxu0
        %1601 = vmatprep.mubr.f32.mxu0 0.0
        %1602 = vmatmul.mubr.f32.gmra.mrb[0].mxu0 %v1219
        %v1603 = vpop.f32.mrb[0].mxu0
        %v1604 = vadd.f32 %v1246, %v1603
        %v1605 = vpop.f32.mrb[0].mxu0
        %1606 = vmatprep.mubr.f32.mxu0 0.0
        %1607 = vmatmul.mubr.f32.gmra.mrb[0].mxu0 %v1220
        %v1608 = vpop.f32.mrb[0].mxu0
        %v1609 = vadd.f32 %v1246, %v1608
        %v1610 = vpop.f32.mrb[0].mxu0
        %1611 = vmatprep.mubr.f32.mxu0 0.0
        %1612 = vmatmul.mubr.f32.gmra.mrb[0].mxu0 %v1221
        %v1613 = vpop.f32.mrb[0].mxu0
        %v1614 = vadd.f32 %v1246, %v1613
        %v1615 = vpop.f32.mrb[0].mxu0
        %1616 = vmatprep.mubr.f32.mxu0 0.0
        %1617 = vmatmul.mubr.f32.gmra.mrb[0].mxu0 %v1222
        %v1618 = vpop.f32.mrb[0].mxu0
        %v1619 = vadd.f32 %v1246, %v1618
        %v1620 = vpop.f32.mrb[0].mxu0
        %1621 = vmatprep.mubr.f32.mxu0 0.0
        %1622 = vmatmul.mubr.f32.gmra.mrb[0].mxu0 %v1223
        %v1623 = vpop.f32.mrb[0].mxu0
        %v1624 = vadd.f32 %v1246, %v1623
        %v1625 = vpop.f32.mrb[0].mxu0
        %1626 = vmatprep.mubr.f32.mxu0 0.0
        %1627 = vmatmul.mubr.f32.gmra.mrb[0].mxu0 %v1224
        %v1628 = vpop.f32.mrb[0].mxu0
        %v1629 = vadd.f32 %v1246, %v1628
        %v1630 = vpop.f32.mrb[0].mxu0
        %1631 = vdwg.mxu0
        %v1632 = vmax.f32 %v1314, 0.0
        %v1633 = vmax.f32 %v1319, 0.0
        %v1634 = vmax.f32 %v1324, 0.0
        %v1635 = vmax.f32 %v1329, 0.0
        %v1636 = vmax.f32 %v1334, 0.0
        %v1637 = vmax.f32 %v1339, 0.0
        %v1638 = vmax.f32 %v1344, 0.0
        %v1639 = vmax.f32 %v1349, 0.0
        %v1640 = vmax.f32 %v1354, 0.0
        %v1641 = vmax.f32 %v1359, 0.0
        %v1642 = vmax.f32 %v1364, 0.0
        %v1643 = vmax.f32 %v1369, 0.0
        %v1644 = vmax.f32 %v1374, 0.0
        %v1645 = vmax.f32 %v1379, 0.0
        %v1646 = vmax.f32 %v1384, 0.0
        %v1647 = vmax.f32 %v1389, 0.0
        %v1648 = vmax.f32 %v1394, 0.0
        %v1649 = vmax.f32 %v1399, 0.0
        %v1650 = vmax.f32 %v1404, 0.0
        %v1651 = vmax.f32 %v1409, 0.0
        %v1652 = vmax.f32 %v1414, 0.0
        %v1653 = vmax.f32 %v1419, 0.0
        %v1654 = vmax.f32 %v1424, 0.0
        %v1655 = vmax.f32 %v1429, 0.0
        %v1656 = vmax.f32 %v1434, 0.0
        %v1657 = vmax.f32 %v1439, 0.0
        %v1658 = vmax.f32 %v1444, 0.0
        %v1659 = vmax.f32 %v1449, 0.0
        %v1660 = vmax.f32 %v1454, 0.0
        %v1661 = vmax.f32 %v1459, 0.0
        %v1662 = vmax.f32 %v1464, 0.0
        %v1663 = vmax.f32 %v1469, 0.0
        %v1664 = vmax.f32 %v1474, 0.0
        %v1665 = vmax.f32 %v1479, 0.0
        %v1666 = vmax.f32 %v1484, 0.0
        %v1667 = vmax.f32 %v1489, 0.0
        %v1668 = vmax.f32 %v1494, 0.0
        %v1669 = vmax.f32 %v1499, 0.0
        %v1670 = vmax.f32 %v1504, 0.0
        %v1671 = vmax.f32 %v1509, 0.0
        %v1672 = vmax.f32 %v1514, 0.0
        %v1673 = vmax.f32 %v1519, 0.0
        %v1674 = vmax.f32 %v1524, 0.0
        %v1675 = vmax.f32 %v1529, 0.0
        %v1676 = vmax.f32 %v1534, 0.0
        %v1677 = vmax.f32 %v1539, 0.0
        %v1678 = vmax.f32 %v1544, 0.0
        %v1679 = vmax.f32 %v1549, 0.0
        %v1680 = vmax.f32 %v1554, 0.0
        %v1681 = vmax.f32 %v1559, 0.0
        %v1682 = vmax.f32 %v1564, 0.0
        %v1683 = vmax.f32 %v1569, 0.0
        %v1684 = vmax.f32 %v1574, 0.0
        %v1685 = vmax.f32 %v1579, 0.0
        %v1686 = vmax.f32 %v1584, 0.0
        %v1687 = vmax.f32 %v1589, 0.0
        %v1688 = vmax.f32 %v1594, 0.0
        %v1689 = vmax.f32 %v1599, 0.0
        %v1690 = vmax.f32 %v1604, 0.0
        %v1691 = vmax.f32 %v1609, 0.0
        %v1692 = vmax.f32 %v1614, 0.0
        %v1693 = vmax.f32 %v1619, 0.0
        %v1694 = vmax.f32 %v1624, 0.0
        %v1695 = vmax.f32 %v1629, 0.0
        %s1696 = scalar_lea.vmem [#allocation5], 384
        %v1697 = vld [vmem:[%s1696] sm:$0xff]
        %v1698 = vld [vmem:[%s1696 + $0x8] sm:$0xff]
        %v1699 = vld [vmem:[%s1696 + $0x10] sm:$0xff]
        %v1700 = vld [vmem:[%s1696 + $0x18] sm:$0xff]
        %v1701 = vld [vmem:[%s1696 + $0x20] sm:$0xff]
        %v1702 = vld [vmem:[%s1696 + $0x28] sm:$0xff]
        %v1703 = vld [vmem:[%s1696 + $0x30] sm:$0xff]
        %v1704 = vld [vmem:[%s1696 + $0x38] sm:$0xff]
        %v1705 = vld [vmem:[%s1696 + $0x40] sm:$0xff]
        %v1706 = vld [vmem:[%s1696 + $0x48] sm:$0xff]
        %v1707 = vld [vmem:[%s1696 + $0x50] sm:$0xff]
        %v1708 = vld [vmem:[%s1696 + $0x58] sm:$0xff]
        %v1709 = vld [vmem:[%s1696 + $0x60] sm:$0xff]
        %v1710 = vld [vmem:[%s1696 + $0x68] sm:$0xff]
        %v1711 = vld [vmem:[%s1696 + $0x70] sm:$0xff]
        %v1712 = vld [vmem:[%s1696 + $0x78] sm:$0xff]
        %v1713 = vld [vmem:[#allocation7 + $0x3] sm:$0x1]
        %v1714 = vlaneseq
        %v1715 = vshrl.u32 %v1714, 7
        %v1716 = vsub.s32 0, %v1715
        %v1717 = vrot.slane %v1713, %v1716
        %1718 = vmatprep.subr.mxu0 0.0
        %1719 = vmatpush1.msra.mxu0 %v1697
        %1720 = vmatprep.subr.mxu0 0.0
        %1721 = vmatpush1.msra.mxu0 %v1698
        %1722 = vmatprep.subr.mxu0 0.0
        %1723 = vmatpush1.msra.mxu0 %v1699
        %1724 = vmatprep.subr.mxu0 0.0
        %1725 = vmatpush1.msra.mxu0 %v1700
        %1726 = vmatprep.subr.mxu0 0.0
        %1727 = vmatpush1.msra.mxu0 %v1701
        %1728 = vmatprep.subr.mxu0 0.0
        %1729 = vmatpush1.msra.mxu0 %v1702
        %1730 = vmatprep.subr.mxu0 0.0
        %1731 = vmatpush1.msra.mxu0 %v1703
        %1732 = vmatprep.subr.mxu0 0.0
        %1733 = vmatpush1.msra.mxu0 %v1704
        %1734 = vmatprep.subr.mxu0 0.0
        %1735 = vmatpush1.msra.mxu0 %v1705
        %1736 = vmatprep.subr.mxu0 0.0
        %1737 = vmatpush1.msra.mxu0 %v1706
        %1738 = vmatprep.subr.mxu0 0.0
        %1739 = vmatpush1.msra.mxu0 %v1707
        %1740 = vmatprep.subr.mxu0 0.0
        %1741 = vmatpush1.msra.mxu0 %v1708
        %1742 = vmatprep.subr.mxu0 0.0
        %1743 = vmatpush1.msra.mxu0 %v1709
        %1744 = vmatprep.subr.mxu0 0.0
        %1745 = vmatpush1.msra.mxu0 %v1710
        %1746 = vmatprep.subr.mxu0 0.0
        %1747 = vmatpush1.msra.mxu0 %v1711
        %1748 = vmatprep.subr.mxu0 0.0
        %1749 = vmatpush1.msra.mxu0 %v1712
        %1750 = vmatprep.subr.mxu0 0.0
        %1751 = vmatpush1.msra.mxu0 0.0
        %1752 = vmatprep.subr.mxu0 0.0
        %1753 = vmatpush1.msra.mxu0 0.0
        %1754 = vmatprep.subr.mxu0 0.0
        %1755 = vmatpush1.msra.mxu0 0.0
        %1756 = vmatprep.subr.mxu0 0.0
        %1757 = vmatpush1.msra.mxu0 0.0
        %1758 = vmatprep.subr.mxu0 0.0
        %1759 = vmatpush1.msra.mxu0 0.0
        %1760 = vmatprep.subr.mxu0 0.0
        %1761 = vmatpush1.msra.mxu0 0.0
        %1762 = vmatprep.subr.mxu0 0.0
        %1763 = vmatpush1.msra.mxu0 0.0
        %1764 = vmatprep.subr.mxu0 0.0
        %1765 = vmatpush1.msra.mxu0 0.0
        %1766 = vmatprep.subr.mxu0 0.0
        %1767 = vmatpush1.msra.mxu0 0.0
        %1768 = vmatprep.subr.mxu0 0.0
        %1769 = vmatpush1.msra.mxu0 0.0
        %1770 = vmatprep.subr.mxu0 0.0
        %1771 = vmatpush1.msra.mxu0 0.0
        %1772 = vmatprep.subr.mxu0 0.0
        %1773 = vmatpush1.msra.mxu0 0.0
        %1774 = vmatprep.subr.mxu0 0.0
        %1775 = vmatpush1.msra.mxu0 0.0
        %1776 = vmatprep.subr.mxu0 0.0
        %1777 = vmatpush1.msra.mxu0 0.0
        %1778 = vmatprep.subr.mxu0 0.0
        %1779 = vmatpush1.msra.mxu0 0.0
        %1780 = vmatprep.subr.mxu0 0.0
        %1781 = vmatpush1.msra.mxu0 0.0
        %1782 = vmatprep.mubr.f32.mxu0 0.0
        %1783 = vmatmul.mubr.f32.gmra.mrb[0].mxu0 %v1632
        %v1784 = vpop.f32.mrb[0].mxu0
        %v1785 = vadd.f32 %v1717, %v1784
        %v1786 = vpop.f32.mrb[0].mxu0
        %1787 = vmatprep.mubr.f32.mxu0 0.0
        %1788 = vmatmul.mubr.f32.gmra.mrb[0].mxu0 %v1633
        %v1789 = vpop.f32.mrb[0].mxu0
        %v1790 = vadd.f32 %v1717, %v1789
        %v1791 = vpop.f32.mrb[0].mxu0
        %1792 = vmatprep.mubr.f32.mxu0 0.0
        %1793 = vmatmul.mubr.f32.gmra.mrb[0].mxu0 %v1634
        %v1794 = vpop.f32.mrb[0].mxu0
        %v1795 = vadd.f32 %v1717, %v1794
        %v1796 = vpop.f32.mrb[0].mxu0
        %1797 = vmatprep.mubr.f32.mxu0 0.0
        %1798 = vmatmul.mubr.f32.gmra.mrb[0].mxu0 %v1635
        %v1799 = vpop.f32.mrb[0].mxu0
        %v1800 = vadd.f32 %v1717, %v1799
        %v1801 = vpop.f32.mrb[0].mxu0
        %1802 = vmatprep.mubr.f32.mxu0 0.0
        %1803 = vmatmul.mubr.f32.gmra.mrb[0].mxu0 %v1636
        %v1804 = vpop.f32.mrb[0].mxu0
        %v1805 = vadd.f32 %v1717, %v1804
        %v1806 = vpop.f32.mrb[0].mxu0
        %1807 = vmatprep.mubr.f32.mxu0 0.0
        %1808 = vmatmul.mubr.f32.gmra.mrb[0].mxu0 %v1637
        %v1809 = vpop.f32.mrb[0].mxu0
        %v1810 = vadd.f32 %v1717, %v1809
        %v1811 = vpop.f32.mrb[0].mxu0
        %1812 = vmatprep.mubr.f32.mxu0 0.0
        %1813 = vmatmul.mubr.f32.gmra.mrb[0].mxu0 %v1638
        %v1814 = vpop.f32.mrb[0].mxu0
        %v1815 = vadd.f32 %v1717, %v1814
        %v1816 = vpop.f32.mrb[0].mxu0
        %1817 = vmatprep.mubr.f32.mxu0 0.0
        %1818 = vmatmul.mubr.f32.gmra.mrb[0].mxu0 %v1639
        %v1819 = vpop.f32.mrb[0].mxu0
        %v1820 = vadd.f32 %v1717, %v1819
        %v1821 = vpop.f32.mrb[0].mxu0
        %1822 = vmatprep.mubr.f32.mxu0 0.0
        %1823 = vmatmul.mubr.f32.gmra.mrb[0].mxu0 %v1640
        %v1824 = vpop.f32.mrb[0].mxu0
        %v1825 = vadd.f32 %v1717, %v1824
        %v1826 = vpop.f32.mrb[0].mxu0
        %1827 = vmatprep.mubr.f32.mxu0 0.0
        %1828 = vmatmul.mubr.f32.gmra.mrb[0].mxu0 %v1641
        %v1829 = vpop.f32.mrb[0].mxu0
        %v1830 = vadd.f32 %v1717, %v1829
        %v1831 = vpop.f32.mrb[0].mxu0
        %1832 = vmatprep.mubr.f32.mxu0 0.0
        %1833 = vmatmul.mubr.f32.gmra.mrb[0].mxu0 %v1642
        %v1834 = vpop.f32.mrb[0].mxu0
        %v1835 = vadd.f32 %v1717, %v1834
        %v1836 = vpop.f32.mrb[0].mxu0
        %1837 = vmatprep.mubr.f32.mxu0 0.0
        %1838 = vmatmul.mubr.f32.gmra.mrb[0].mxu0 %v1643
        %v1839 = vpop.f32.mrb[0].mxu0
        %v1840 = vadd.f32 %v1717, %v1839
        %v1841 = vpop.f32.mrb[0].mxu0
        %1842 = vmatprep.mubr.f32.mxu0 0.0
        %1843 = vmatmul.mubr.f32.gmra.mrb[0].mxu0 %v1644
        %v1844 = vpop.f32.mrb[0].mxu0
        %v1845 = vadd.f32 %v1717, %v1844
        %v1846 = vpop.f32.mrb[0].mxu0
        %1847 = vmatprep.mubr.f32.mxu0 0.0
        %1848 = vmatmul.mubr.f32.gmra.mrb[0].mxu0 %v1645
        %v1849 = vpop.f32.mrb[0].mxu0
        %v1850 = vadd.f32 %v1717, %v1849
        %v1851 = vpop.f32.mrb[0].mxu0
        %1852 = vmatprep.mubr.f32.mxu0 0.0
        %1853 = vmatmul.mubr.f32.gmra.mrb[0].mxu0 %v1646
        %v1854 = vpop.f32.mrb[0].mxu0
        %v1855 = vadd.f32 %v1717, %v1854
        %v1856 = vpop.f32.mrb[0].mxu0
        %1857 = vmatprep.mubr.f32.mxu0 0.0
        %1858 = vmatmul.mubr.f32.gmra.mrb[0].mxu0 %v1647
        %v1859 = vpop.f32.mrb[0].mxu0
        %v1860 = vadd.f32 %v1717, %v1859
        %v1861 = vpop.f32.mrb[0].mxu0
        %1862 = vmatprep.mubr.f32.mxu0 0.0
        %1863 = vmatmul.mubr.f32.gmra.mrb[0].mxu0 %v1648
        %v1864 = vpop.f32.mrb[0].mxu0
        %v1865 = vadd.f32 %v1717, %v1864
        %v1866 = vpop.f32.mrb[0].mxu0
        %1867 = vmatprep.mubr.f32.mxu0 0.0
        %1868 = vmatmul.mubr.f32.gmra.mrb[0].mxu0 %v1649
        %v1869 = vpop.f32.mrb[0].mxu0
        %v1870 = vadd.f32 %v1717, %v1869
        %v1871 = vpop.f32.mrb[0].mxu0
        %1872 = vmatprep.mubr.f32.mxu0 0.0
        %1873 = vmatmul.mubr.f32.gmra.mrb[0].mxu0 %v1650
        %v1874 = vpop.f32.mrb[0].mxu0
        %v1875 = vadd.f32 %v1717, %v1874
        %v1876 = vpop.f32.mrb[0].mxu0
        %1877 = vmatprep.mubr.f32.mxu0 0.0
        %1878 = vmatmul.mubr.f32.gmra.mrb[0].mxu0 %v1651
        %v1879 = vpop.f32.mrb[0].mxu0
        %v1880 = vadd.f32 %v1717, %v1879
        %v1881 = vpop.f32.mrb[0].mxu0
        %1882 = vmatprep.mubr.f32.mxu0 0.0
        %1883 = vmatmul.mubr.f32.gmra.mrb[0].mxu0 %v1652
        %v1884 = vpop.f32.mrb[0].mxu0
        %v1885 = vadd.f32 %v1717, %v1884
        %v1886 = vpop.f32.mrb[0].mxu0
        %1887 = vmatprep.mubr.f32.mxu0 0.0
        %1888 = vmatmul.mubr.f32.gmra.mrb[0].mxu0 %v1653
        %v1889 = vpop.f32.mrb[0].mxu0
        %v1890 = vadd.f32 %v1717, %v1889
        %v1891 = vpop.f32.mrb[0].mxu0
        %1892 = vmatprep.mubr.f32.mxu0 0.0
        %1893 = vmatmul.mubr.f32.gmra.mrb[0].mxu0 %v1654
        %v1894 = vpop.f32.mrb[0].mxu0
        %v1895 = vadd.f32 %v1717, %v1894
        %v1896 = vpop.f32.mrb[0].mxu0
        %1897 = vmatprep.mubr.f32.mxu0 0.0
        %1898 = vmatmul.mubr.f32.gmra.mrb[0].mxu0 %v1655
        %v1899 = vpop.f32.mrb[0].mxu0
        %v1900 = vadd.f32 %v1717, %v1899
        %v1901 = vpop.f32.mrb[0].mxu0
        %1902 = vmatprep.mubr.f32.mxu0 0.0
        %1903 = vmatmul.mubr.f32.gmra.mrb[0].mxu0 %v1656
        %v1904 = vpop.f32.mrb[0].mxu0
        %v1905 = vadd.f32 %v1717, %v1904
        %v1906 = vpop.f32.mrb[0].mxu0
        %1907 = vmatprep.mubr.f32.mxu0 0.0
        %1908 = vmatmul.mubr.f32.gmra.mrb[0].mxu0 %v1657
        %v1909 = vpop.f32.mrb[0].mxu0
        %v1910 = vadd.f32 %v1717, %v1909
        %v1911 = vpop.f32.mrb[0].mxu0
        %1912 = vmatprep.mubr.f32.mxu0 0.0
        %1913 = vmatmul.mubr.f32.gmra.mrb[0].mxu0 %v1658
        %v1914 = vpop.f32.mrb[0].mxu0
        %v1915 = vadd.f32 %v1717, %v1914
        %v1916 = vpop.f32.mrb[0].mxu0
        %1917 = vmatprep.mubr.f32.mxu0 0.0
        %1918 = vmatmul.mubr.f32.gmra.mrb[0].mxu0 %v1659
        %v1919 = vpop.f32.mrb[0].mxu0
        %v1920 = vadd.f32 %v1717, %v1919
        %v1921 = vpop.f32.mrb[0].mxu0
        %1922 = vmatprep.mubr.f32.mxu0 0.0
        %1923 = vmatmul.mubr.f32.gmra.mrb[0].mxu0 %v1660
        %v1924 = vpop.f32.mrb[0].mxu0
        %v1925 = vadd.f32 %v1717, %v1924
        %v1926 = vpop.f32.mrb[0].mxu0
        %1927 = vmatprep.mubr.f32.mxu0 0.0
        %1928 = vmatmul.mubr.f32.gmra.mrb[0].mxu0 %v1661
        %v1929 = vpop.f32.mrb[0].mxu0
        %v1930 = vadd.f32 %v1717, %v1929
        %v1931 = vpop.f32.mrb[0].mxu0
        %1932 = vmatprep.mubr.f32.mxu0 0.0
        %1933 = vmatmul.mubr.f32.gmra.mrb[0].mxu0 %v1662
        %v1934 = vpop.f32.mrb[0].mxu0
        %v1935 = vadd.f32 %v1717, %v1934
        %v1936 = vpop.f32.mrb[0].mxu0
        %1937 = vmatprep.mubr.f32.mxu0 0.0
        %1938 = vmatmul.mubr.f32.gmra.mrb[0].mxu0 %v1663
        %v1939 = vpop.f32.mrb[0].mxu0
        %v1940 = vadd.f32 %v1717, %v1939
        %v1941 = vpop.f32.mrb[0].mxu0
        %1942 = vmatprep.mubr.f32.mxu0 0.0
        %1943 = vmatmul.mubr.f32.gmra.mrb[0].mxu0 %v1664
        %v1944 = vpop.f32.mrb[0].mxu0
        %v1945 = vadd.f32 %v1717, %v1944
        %v1946 = vpop.f32.mrb[0].mxu0
        %1947 = vmatprep.mubr.f32.mxu0 0.0
        %1948 = vmatmul.mubr.f32.gmra.mrb[0].mxu0 %v1665
        %v1949 = vpop.f32.mrb[0].mxu0
        %v1950 = vadd.f32 %v1717, %v1949
        %v1951 = vpop.f32.mrb[0].mxu0
        %1952 = vmatprep.mubr.f32.mxu0 0.0
        %1953 = vmatmul.mubr.f32.gmra.mrb[0].mxu0 %v1666
        %v1954 = vpop.f32.mrb[0].mxu0
        %v1955 = vadd.f32 %v1717, %v1954
        %v1956 = vpop.f32.mrb[0].mxu0
        %1957 = vmatprep.mubr.f32.mxu0 0.0
        %1958 = vmatmul.mubr.f32.gmra.mrb[0].mxu0 %v1667
        %v1959 = vpop.f32.mrb[0].mxu0
        %v1960 = vadd.f32 %v1717, %v1959
        %v1961 = vpop.f32.mrb[0].mxu0
        %1962 = vmatprep.mubr.f32.mxu0 0.0
        %1963 = vmatmul.mubr.f32.gmra.mrb[0].mxu0 %v1668
        %v1964 = vpop.f32.mrb[0].mxu0
        %v1965 = vadd.f32 %v1717, %v1964
        %v1966 = vpop.f32.mrb[0].mxu0
        %1967 = vmatprep.mubr.f32.mxu0 0.0
        %1968 = vmatmul.mubr.f32.gmra.mrb[0].mxu0 %v1669
        %v1969 = vpop.f32.mrb[0].mxu0
        %v1970 = vadd.f32 %v1717, %v1969
        %v1971 = vpop.f32.mrb[0].mxu0
        %1972 = vmatprep.mubr.f32.mxu0 0.0
        %1973 = vmatmul.mubr.f32.gmra.mrb[0].mxu0 %v1670
        %v1974 = vpop.f32.mrb[0].mxu0
        %v1975 = vadd.f32 %v1717, %v1974
        %v1976 = vpop.f32.mrb[0].mxu0
        %1977 = vmatprep.mubr.f32.mxu0 0.0
        %1978 = vmatmul.mubr.f32.gmra.mrb[0].mxu0 %v1671
        %v1979 = vpop.f32.mrb[0].mxu0
        %v1980 = vadd.f32 %v1717, %v1979
        %v1981 = vpop.f32.mrb[0].mxu0
        %1982 = vmatprep.mubr.f32.mxu0 0.0
        %1983 = vmatmul.mubr.f32.gmra.mrb[0].mxu0 %v1672
        %v1984 = vpop.f32.mrb[0].mxu0
        %v1985 = vadd.f32 %v1717, %v1984
        %v1986 = vpop.f32.mrb[0].mxu0
        %1987 = vmatprep.mubr.f32.mxu0 0.0
        %1988 = vmatmul.mubr.f32.gmra.mrb[0].mxu0 %v1673
        %v1989 = vpop.f32.mrb[0].mxu0
        %v1990 = vadd.f32 %v1717, %v1989
        %v1991 = vpop.f32.mrb[0].mxu0
        %1992 = vmatprep.mubr.f32.mxu0 0.0
        %1993 = vmatmul.mubr.f32.gmra.mrb[0].mxu0 %v1674
        %v1994 = vpop.f32.mrb[0].mxu0
        %v1995 = vadd.f32 %v1717, %v1994
        %v1996 = vpop.f32.mrb[0].mxu0
        %1997 = vmatprep.mubr.f32.mxu0 0.0
        %1998 = vmatmul.mubr.f32.gmra.mrb[0].mxu0 %v1675
        %v1999 = vpop.f32.mrb[0].mxu0
        %v2000 = vadd.f32 %v1717, %v1999
        %v2001 = vpop.f32.mrb[0].mxu0
        %2002 = vmatprep.mubr.f32.mxu0 0.0
        %2003 = vmatmul.mubr.f32.gmra.mrb[0].mxu0 %v1676
        %v2004 = vpop.f32.mrb[0].mxu0
        %v2005 = vadd.f32 %v1717, %v2004
        %v2006 = vpop.f32.mrb[0].mxu0
        %2007 = vmatprep.mubr.f32.mxu0 0.0
        %2008 = vmatmul.mubr.f32.gmra.mrb[0].mxu0 %v1677
        %v2009 = vpop.f32.mrb[0].mxu0
        %v2010 = vadd.f32 %v1717, %v2009
        %v2011 = vpop.f32.mrb[0].mxu0
        %2012 = vmatprep.mubr.f32.mxu0 0.0
        %2013 = vmatmul.mubr.f32.gmra.mrb[0].mxu0 %v1678
        %v2014 = vpop.f32.mrb[0].mxu0
        %v2015 = vadd.f32 %v1717, %v2014
        %v2016 = vpop.f32.mrb[0].mxu0
        %2017 = vmatprep.mubr.f32.mxu0 0.0
        %2018 = vmatmul.mubr.f32.gmra.mrb[0].mxu0 %v1679
        %v2019 = vpop.f32.mrb[0].mxu0
        %v2020 = vadd.f32 %v1717, %v2019
        %v2021 = vpop.f32.mrb[0].mxu0
        %2022 = vmatprep.mubr.f32.mxu0 0.0
        %2023 = vmatmul.mubr.f32.gmra.mrb[0].mxu0 %v1680
        %v2024 = vpop.f32.mrb[0].mxu0
        %v2025 = vadd.f32 %v1717, %v2024
        %v2026 = vpop.f32.mrb[0].mxu0
        %2027 = vmatprep.mubr.f32.mxu0 0.0
        %2028 = vmatmul.mubr.f32.gmra.mrb[0].mxu0 %v1681
        %v2029 = vpop.f32.mrb[0].mxu0
        %v2030 = vadd.f32 %v1717, %v2029
        %v2031 = vpop.f32.mrb[0].mxu0
        %2032 = vmatprep.mubr.f32.mxu0 0.0
        %2033 = vmatmul.mubr.f32.gmra.mrb[0].mxu0 %v1682
        %v2034 = vpop.f32.mrb[0].mxu0
        %v2035 = vadd.f32 %v1717, %v2034
        %v2036 = vpop.f32.mrb[0].mxu0
        %2037 = vmatprep.mubr.f32.mxu0 0.0
        %2038 = vmatmul.mubr.f32.gmra.mrb[0].mxu0 %v1683
        %v2039 = vpop.f32.mrb[0].mxu0
        %v2040 = vadd.f32 %v1717, %v2039
        %v2041 = vpop.f32.mrb[0].mxu0
        %2042 = vmatprep.mubr.f32.mxu0 0.0
        %2043 = vmatmul.mubr.f32.gmra.mrb[0].mxu0 %v1684
        %v2044 = vpop.f32.mrb[0].mxu0
        %v2045 = vadd.f32 %v1717, %v2044
        %v2046 = vpop.f32.mrb[0].mxu0
        %2047 = vmatprep.mubr.f32.mxu0 0.0
        %2048 = vmatmul.mubr.f32.gmra.mrb[0].mxu0 %v1685
        %v2049 = vpop.f32.mrb[0].mxu0
        %v2050 = vadd.f32 %v1717, %v2049
        %v2051 = vpop.f32.mrb[0].mxu0
        %2052 = vmatprep.mubr.f32.mxu0 0.0
        %2053 = vmatmul.mubr.f32.gmra.mrb[0].mxu0 %v1686
        %v2054 = vpop.f32.mrb[0].mxu0
        %v2055 = vadd.f32 %v1717, %v2054
        %v2056 = vpop.f32.mrb[0].mxu0
        %2057 = vmatprep.mubr.f32.mxu0 0.0
        %2058 = vmatmul.mubr.f32.gmra.mrb[0].mxu0 %v1687
        %v2059 = vpop.f32.mrb[0].mxu0
        %v2060 = vadd.f32 %v1717, %v2059
        %v2061 = vpop.f32.mrb[0].mxu0
        %2062 = vmatprep.mubr.f32.mxu0 0.0
        %2063 = vmatmul.mubr.f32.gmra.mrb[0].mxu0 %v1688
        %v2064 = vpop.f32.mrb[0].mxu0
        %v2065 = vadd.f32 %v1717, %v2064
        %v2066 = vpop.f32.mrb[0].mxu0
        %2067 = vmatprep.mubr.f32.mxu0 0.0
        %2068 = vmatmul.mubr.f32.gmra.mrb[0].mxu0 %v1689
        %v2069 = vpop.f32.mrb[0].mxu0
        %v2070 = vadd.f32 %v1717, %v2069
        %v2071 = vpop.f32.mrb[0].mxu0
        %2072 = vmatprep.mubr.f32.mxu0 0.0
        %2073 = vmatmul.mubr.f32.gmra.mrb[0].mxu0 %v1690
        %v2074 = vpop.f32.mrb[0].mxu0
        %v2075 = vadd.f32 %v1717, %v2074
        %v2076 = vpop.f32.mrb[0].mxu0
        %2077 = vmatprep.mubr.f32.mxu0 0.0
        %2078 = vmatmul.mubr.f32.gmra.mrb[0].mxu0 %v1691
        %v2079 = vpop.f32.mrb[0].mxu0
        %v2080 = vadd.f32 %v1717, %v2079
        %v2081 = vpop.f32.mrb[0].mxu0
        %2082 = vmatprep.mubr.f32.mxu0 0.0
        %2083 = vmatmul.mubr.f32.gmra.mrb[0].mxu0 %v1692
        %v2084 = vpop.f32.mrb[0].mxu0
        %v2085 = vadd.f32 %v1717, %v2084
        %v2086 = vpop.f32.mrb[0].mxu0
        %2087 = vmatprep.mubr.f32.mxu0 0.0
        %2088 = vmatmul.mubr.f32.gmra.mrb[0].mxu0 %v1693
        %v2089 = vpop.f32.mrb[0].mxu0
        %v2090 = vadd.f32 %v1717, %v2089
        %v2091 = vpop.f32.mrb[0].mxu0
        %2092 = vmatprep.mubr.f32.mxu0 0.0
        %2093 = vmatmul.mubr.f32.gmra.mrb[0].mxu0 %v1694
        %v2094 = vpop.f32.mrb[0].mxu0
        %v2095 = vadd.f32 %v1717, %v2094
        %v2096 = vpop.f32.mrb[0].mxu0
        %2097 = vmatprep.mubr.f32.mxu0 0.0
        %2098 = vmatmul.mubr.f32.gmra.mrb[0].mxu0 %v1695
        %v2099 = vpop.f32.mrb[0].mxu0
        %v2100 = vadd.f32 %v1717, %v2099
        %v2101 = vpop.f32.mrb[0].mxu0
        %2102 = vdwg.mxu0
        %v2103 = vmax.f32 %v1785, 0.0
        %v2104 = vmax.f32 %v1790, 0.0
        %v2105 = vmax.f32 %v1795, 0.0
        %v2106 = vmax.f32 %v1800, 0.0
        %v2107 = vmax.f32 %v1805, 0.0
        %v2108 = vmax.f32 %v1810, 0.0
        %v2109 = vmax.f32 %v1815, 0.0
        %v2110 = vmax.f32 %v1820, 0.0
        %v2111 = vmax.f32 %v1825, 0.0
        %v2112 = vmax.f32 %v1830, 0.0
        %v2113 = vmax.f32 %v1835, 0.0
        %v2114 = vmax.f32 %v1840, 0.0
        %v2115 = vmax.f32 %v1845, 0.0
        %v2116 = vmax.f32 %v1850, 0.0
        %v2117 = vmax.f32 %v1855, 0.0
        %v2118 = vmax.f32 %v1860, 0.0
        %v2119 = vmax.f32 %v1865, 0.0
        %v2120 = vmax.f32 %v1870, 0.0
        %v2121 = vmax.f32 %v1875, 0.0
        %v2122 = vmax.f32 %v1880, 0.0
        %v2123 = vmax.f32 %v1885, 0.0
        %v2124 = vmax.f32 %v1890, 0.0
        %v2125 = vmax.f32 %v1895, 0.0
        %v2126 = vmax.f32 %v1900, 0.0
        %v2127 = vmax.f32 %v1905, 0.0
        %v2128 = vmax.f32 %v1910, 0.0
        %v2129 = vmax.f32 %v1915, 0.0
        %v2130 = vmax.f32 %v1920, 0.0
        %v2131 = vmax.f32 %v1925, 0.0
        %v2132 = vmax.f32 %v1930, 0.0
        %v2133 = vmax.f32 %v1935, 0.0
        %v2134 = vmax.f32 %v1940, 0.0
        %v2135 = vmax.f32 %v1945, 0.0
        %v2136 = vmax.f32 %v1950, 0.0
        %v2137 = vmax.f32 %v1955, 0.0
        %v2138 = vmax.f32 %v1960, 0.0
        %v2139 = vmax.f32 %v1965, 0.0
        %v2140 = vmax.f32 %v1970, 0.0
        %v2141 = vmax.f32 %v1975, 0.0
        %v2142 = vmax.f32 %v1980, 0.0
        %v2143 = vmax.f32 %v1985, 0.0
        %v2144 = vmax.f32 %v1990, 0.0
        %v2145 = vmax.f32 %v1995, 0.0
        %v2146 = vmax.f32 %v2000, 0.0
        %v2147 = vmax.f32 %v2005, 0.0
        %v2148 = vmax.f32 %v2010, 0.0
        %v2149 = vmax.f32 %v2015, 0.0
        %v2150 = vmax.f32 %v2020, 0.0
        %v2151 = vmax.f32 %v2025, 0.0
        %v2152 = vmax.f32 %v2030, 0.0
        %v2153 = vmax.f32 %v2035, 0.0
        %v2154 = vmax.f32 %v2040, 0.0
        %v2155 = vmax.f32 %v2045, 0.0
        %v2156 = vmax.f32 %v2050, 0.0
        %v2157 = vmax.f32 %v2055, 0.0
        %v2158 = vmax.f32 %v2060, 0.0
        %v2159 = vmax.f32 %v2065, 0.0
        %v2160 = vmax.f32 %v2070, 0.0
        %v2161 = vmax.f32 %v2075, 0.0
        %v2162 = vmax.f32 %v2080, 0.0
        %v2163 = vmax.f32 %v2085, 0.0
        %v2164 = vmax.f32 %v2090, 0.0
        %v2165 = vmax.f32 %v2095, 0.0
        %v2166 = vmax.f32 %v2100, 0.0
        %s2167 = scalar_lea.vmem [#allocation5], 512
        %v2168 = vld [vmem:[%s2167] sm:$0xff]
        %v2169 = vld [vmem:[%s2167 + $0x8] sm:$0xff]
        %v2170 = vld [vmem:[%s2167 + $0x10] sm:$0xff]
        %v2171 = vld [vmem:[%s2167 + $0x18] sm:$0xff]
        %v2172 = vld [vmem:[%s2167 + $0x20] sm:$0xff]
        %v2173 = vld [vmem:[%s2167 + $0x28] sm:$0xff]
        %v2174 = vld [vmem:[%s2167 + $0x30] sm:$0xff]
        %v2175 = vld [vmem:[%s2167 + $0x38] sm:$0xff]
        %v2176 = vld [vmem:[%s2167 + $0x40] sm:$0xff]
        %v2177 = vld [vmem:[%s2167 + $0x48] sm:$0xff]
        %v2178 = vld [vmem:[%s2167 + $0x50] sm:$0xff]
        %v2179 = vld [vmem:[%s2167 + $0x58] sm:$0xff]
        %v2180 = vld [vmem:[%s2167 + $0x60] sm:$0xff]
        %v2181 = vld [vmem:[%s2167 + $0x68] sm:$0xff]
        %v2182 = vld [vmem:[%s2167 + $0x70] sm:$0xff]
        %v2183 = vld [vmem:[%s2167 + $0x78] sm:$0xff]
        %v2184 = vld [vmem:[#allocation7 + $0x4] sm:$0x1]
        %v2185 = vlaneseq
        %v2186 = vshrl.u32 %v2185, 7
        %v2187 = vsub.s32 0, %v2186
        %v2188 = vrot.slane %v2184, %v2187
        %2189 = vmatprep.subr.mxu0 0.0
        %2190 = vmatpush1.msra.mxu0 %v2168
        %2191 = vmatprep.subr.mxu0 0.0
        %2192 = vmatpush1.msra.mxu0 %v2169
        %2193 = vmatprep.subr.mxu0 0.0
        %2194 = vmatpush1.msra.mxu0 %v2170
        %2195 = vmatprep.subr.mxu0 0.0
        %2196 = vmatpush1.msra.mxu0 %v2171
        %2197 = vmatprep.subr.mxu0 0.0
        %2198 = vmatpush1.msra.mxu0 %v2172
        %2199 = vmatprep.subr.mxu0 0.0
        %2200 = vmatpush1.msra.mxu0 %v2173
        %2201 = vmatprep.subr.mxu0 0.0
        %2202 = vmatpush1.msra.mxu0 %v2174
        %2203 = vmatprep.subr.mxu0 0.0
        %2204 = vmatpush1.msra.mxu0 %v2175
        %2205 = vmatprep.subr.mxu0 0.0
        %2206 = vmatpush1.msra.mxu0 %v2176
        %2207 = vmatprep.subr.mxu0 0.0
        %2208 = vmatpush1.msra.mxu0 %v2177
        %2209 = vmatprep.subr.mxu0 0.0
        %2210 = vmatpush1.msra.mxu0 %v2178
        %2211 = vmatprep.subr.mxu0 0.0
        %2212 = vmatpush1.msra.mxu0 %v2179
        %2213 = vmatprep.subr.mxu0 0.0
        %2214 = vmatpush1.msra.mxu0 %v2180
        %2215 = vmatprep.subr.mxu0 0.0
        %2216 = vmatpush1.msra.mxu0 %v2181
        %2217 = vmatprep.subr.mxu0 0.0
        %2218 = vmatpush1.msra.mxu0 %v2182
        %2219 = vmatprep.subr.mxu0 0.0
        %2220 = vmatpush1.msra.mxu0 %v2183
        %2221 = vmatprep.subr.mxu0 0.0
        %2222 = vmatpush1.msra.mxu0 0.0
        %2223 = vmatprep.subr.mxu0 0.0
        %2224 = vmatpush1.msra.mxu0 0.0
        %2225 = vmatprep.subr.mxu0 0.0
        %2226 = vmatpush1.msra.mxu0 0.0
        %2227 = vmatprep.subr.mxu0 0.0
        %2228 = vmatpush1.msra.mxu0 0.0
        %2229 = vmatprep.subr.mxu0 0.0
        %2230 = vmatpush1.msra.mxu0 0.0
        %2231 = vmatprep.subr.mxu0 0.0
        %2232 = vmatpush1.msra.mxu0 0.0
        %2233 = vmatprep.subr.mxu0 0.0
        %2234 = vmatpush1.msra.mxu0 0.0
        %2235 = vmatprep.subr.mxu0 0.0
        %2236 = vmatpush1.msra.mxu0 0.0
        %2237 = vmatprep.subr.mxu0 0.0
        %2238 = vmatpush1.msra.mxu0 0.0
        %2239 = vmatprep.subr.mxu0 0.0
        %2240 = vmatpush1.msra.mxu0 0.0
        %2241 = vmatprep.subr.mxu0 0.0
        %2242 = vmatpush1.msra.mxu0 0.0
        %2243 = vmatprep.subr.mxu0 0.0
        %2244 = vmatpush1.msra.mxu0 0.0
        %2245 = vmatprep.subr.mxu0 0.0
        %2246 = vmatpush1.msra.mxu0 0.0
        %2247 = vmatprep.subr.mxu0 0.0
        %2248 = vmatpush1.msra.mxu0 0.0
        %2249 = vmatprep.subr.mxu0 0.0
        %2250 = vmatpush1.msra.mxu0 0.0
        %2251 = vmatprep.subr.mxu0 0.0
        %2252 = vmatpush1.msra.mxu0 0.0
        %2253 = vmatprep.mubr.f32.mxu0 0.0
        %2254 = vmatmul.mubr.f32.gmra.mrb[0].mxu0 %v2103
        %v2255 = vpop.f32.mrb[0].mxu0
        %v2256 = vadd.f32 %v2188, %v2255
        %v2257 = vpop.f32.mrb[0].mxu0
        %2258 = vmatprep.mubr.f32.mxu0 0.0
        %2259 = vmatmul.mubr.f32.gmra.mrb[0].mxu0 %v2104
        %v2260 = vpop.f32.mrb[0].mxu0
        %v2261 = vadd.f32 %v2188, %v2260
        %v2262 = vpop.f32.mrb[0].mxu0
        %2263 = vmatprep.mubr.f32.mxu0 0.0
        %2264 = vmatmul.mubr.f32.gmra.mrb[0].mxu0 %v2105
        %v2265 = vpop.f32.mrb[0].mxu0
        %v2266 = vadd.f32 %v2188, %v2265
        %v2267 = vpop.f32.mrb[0].mxu0
        %2268 = vmatprep.mubr.f32.mxu0 0.0
        %2269 = vmatmul.mubr.f32.gmra.mrb[0].mxu0 %v2106
        %v2270 = vpop.f32.mrb[0].mxu0
        %v2271 = vadd.f32 %v2188, %v2270
        %v2272 = vpop.f32.mrb[0].mxu0
        %2273 = vmatprep.mubr.f32.mxu0 0.0
        %2274 = vmatmul.mubr.f32.gmra.mrb[0].mxu0 %v2107
        %v2275 = vpop.f32.mrb[0].mxu0
        %v2276 = vadd.f32 %v2188, %v2275
        %v2277 = vpop.f32.mrb[0].mxu0
        %2278 = vmatprep.mubr.f32.mxu0 0.0
        %2279 = vmatmul.mubr.f32.gmra.mrb[0].mxu0 %v2108
        %v2280 = vpop.f32.mrb[0].mxu0
        %v2281 = vadd.f32 %v2188, %v2280
        %v2282 = vpop.f32.mrb[0].mxu0
        %2283 = vmatprep.mubr.f32.mxu0 0.0
        %2284 = vmatmul.mubr.f32.gmra.mrb[0].mxu0 %v2109
        %v2285 = vpop.f32.mrb[0].mxu0
        %v2286 = vadd.f32 %v2188, %v2285
        %v2287 = vpop.f32.mrb[0].mxu0
        %2288 = vmatprep.mubr.f32.mxu0 0.0
        %2289 = vmatmul.mubr.f32.gmra.mrb[0].mxu0 %v2110
        %v2290 = vpop.f32.mrb[0].mxu0
        %v2291 = vadd.f32 %v2188, %v2290
        %v2292 = vpop.f32.mrb[0].mxu0
        %2293 = vmatprep.mubr.f32.mxu0 0.0
        %2294 = vmatmul.mubr.f32.gmra.mrb[0].mxu0 %v2111
        %v2295 = vpop.f32.mrb[0].mxu0
        %v2296 = vadd.f32 %v2188, %v2295
        %v2297 = vpop.f32.mrb[0].mxu0
        %2298 = vmatprep.mubr.f32.mxu0 0.0
        %2299 = vmatmul.mubr.f32.gmra.mrb[0].mxu0 %v2112
        %v2300 = vpop.f32.mrb[0].mxu0
        %v2301 = vadd.f32 %v2188, %v2300
        %v2302 = vpop.f32.mrb[0].mxu0
        %2303 = vmatprep.mubr.f32.mxu0 0.0
        %2304 = vmatmul.mubr.f32.gmra.mrb[0].mxu0 %v2113
        %v2305 = vpop.f32.mrb[0].mxu0
        %v2306 = vadd.f32 %v2188, %v2305
        %v2307 = vpop.f32.mrb[0].mxu0
        %2308 = vmatprep.mubr.f32.mxu0 0.0
        %2309 = vmatmul.mubr.f32.gmra.mrb[0].mxu0 %v2114
        %v2310 = vpop.f32.mrb[0].mxu0
        %v2311 = vadd.f32 %v2188, %v2310
        %v2312 = vpop.f32.mrb[0].mxu0
        %2313 = vmatprep.mubr.f32.mxu0 0.0
        %2314 = vmatmul.mubr.f32.gmra.mrb[0].mxu0 %v2115
        %v2315 = vpop.f32.mrb[0].mxu0
        %v2316 = vadd.f32 %v2188, %v2315
        %v2317 = vpop.f32.mrb[0].mxu0
        %2318 = vmatprep.mubr.f32.mxu0 0.0
        %2319 = vmatmul.mubr.f32.gmra.mrb[0].mxu0 %v2116
        %v2320 = vpop.f32.mrb[0].mxu0
        %v2321 = vadd.f32 %v2188, %v2320
        %v2322 = vpop.f32.mrb[0].mxu0
        %2323 = vmatprep.mubr.f32.mxu0 0.0
        %2324 = vmatmul.mubr.f32.gmra.mrb[0].mxu0 %v2117
        %v2325 = vpop.f32.mrb[0].mxu0
        %v2326 = vadd.f32 %v2188, %v2325
        %v2327 = vpop.f32.mrb[0].mxu0
        %2328 = vmatprep.mubr.f32.mxu0 0.0
        %2329 = vmatmul.mubr.f32.gmra.mrb[0].mxu0 %v2118
        %v2330 = vpop.f32.mrb[0].mxu0
        %v2331 = vadd.f32 %v2188, %v2330
        %v2332 = vpop.f32.mrb[0].mxu0
        %2333 = vmatprep.mubr.f32.mxu0 0.0
        %2334 = vmatmul.mubr.f32.gmra.mrb[0].mxu0 %v2119
        %v2335 = vpop.f32.mrb[0].mxu0
        %v2336 = vadd.f32 %v2188, %v2335
        %v2337 = vpop.f32.mrb[0].mxu0
        %2338 = vmatprep.mubr.f32.mxu0 0.0
        %2339 = vmatmul.mubr.f32.gmra.mrb[0].mxu0 %v2120
        %v2340 = vpop.f32.mrb[0].mxu0
        %v2341 = vadd.f32 %v2188, %v2340
        %v2342 = vpop.f32.mrb[0].mxu0
        %2343 = vmatprep.mubr.f32.mxu0 0.0
        %2344 = vmatmul.mubr.f32.gmra.mrb[0].mxu0 %v2121
        %v2345 = vpop.f32.mrb[0].mxu0
        %v2346 = vadd.f32 %v2188, %v2345
        %v2347 = vpop.f32.mrb[0].mxu0
        %2348 = vmatprep.mubr.f32.mxu0 0.0
        %2349 = vmatmul.mubr.f32.gmra.mrb[0].mxu0 %v2122
        %v2350 = vpop.f32.mrb[0].mxu0
        %v2351 = vadd.f32 %v2188, %v2350
        %v2352 = vpop.f32.mrb[0].mxu0
        %2353 = vmatprep.mubr.f32.mxu0 0.0
        %2354 = vmatmul.mubr.f32.gmra.mrb[0].mxu0 %v2123
        %v2355 = vpop.f32.mrb[0].mxu0
        %v2356 = vadd.f32 %v2188, %v2355
        %v2357 = vpop.f32.mrb[0].mxu0
        %2358 = vmatprep.mubr.f32.mxu0 0.0
        %2359 = vmatmul.mubr.f32.gmra.mrb[0].mxu0 %v2124
        %v2360 = vpop.f32.mrb[0].mxu0
        %v2361 = vadd.f32 %v2188, %v2360
        %v2362 = vpop.f32.mrb[0].mxu0
        %2363 = vmatprep.mubr.f32.mxu0 0.0
        %2364 = vmatmul.mubr.f32.gmra.mrb[0].mxu0 %v2125
        %v2365 = vpop.f32.mrb[0].mxu0
        %v2366 = vadd.f32 %v2188, %v2365
        %v2367 = vpop.f32.mrb[0].mxu0
        %2368 = vmatprep.mubr.f32.mxu0 0.0
        %2369 = vmatmul.mubr.f32.gmra.mrb[0].mxu0 %v2126
        %v2370 = vpop.f32.mrb[0].mxu0
        %v2371 = vadd.f32 %v2188, %v2370
        %v2372 = vpop.f32.mrb[0].mxu0
        %2373 = vmatprep.mubr.f32.mxu0 0.0
        %2374 = vmatmul.mubr.f32.gmra.mrb[0].mxu0 %v2127
        %v2375 = vpop.f32.mrb[0].mxu0
        %v2376 = vadd.f32 %v2188, %v2375
        %v2377 = vpop.f32.mrb[0].mxu0
        %2378 = vmatprep.mubr.f32.mxu0 0.0
        %2379 = vmatmul.mubr.f32.gmra.mrb[0].mxu0 %v2128
        %v2380 = vpop.f32.mrb[0].mxu0
        %v2381 = vadd.f32 %v2188, %v2380
        %v2382 = vpop.f32.mrb[0].mxu0
        %2383 = vmatprep.mubr.f32.mxu0 0.0
        %2384 = vmatmul.mubr.f32.gmra.mrb[0].mxu0 %v2129
        %v2385 = vpop.f32.mrb[0].mxu0
        %v2386 = vadd.f32 %v2188, %v2385
        %v2387 = vpop.f32.mrb[0].mxu0
        %2388 = vmatprep.mubr.f32.mxu0 0.0
        %2389 = vmatmul.mubr.f32.gmra.mrb[0].mxu0 %v2130
        %v2390 = vpop.f32.mrb[0].mxu0
        %v2391 = vadd.f32 %v2188, %v2390
        %v2392 = vpop.f32.mrb[0].mxu0
        %2393 = vmatprep.mubr.f32.mxu0 0.0
        %2394 = vmatmul.mubr.f32.gmra.mrb[0].mxu0 %v2131
        %v2395 = vpop.f32.mrb[0].mxu0
        %v2396 = vadd.f32 %v2188, %v2395
        %v2397 = vpop.f32.mrb[0].mxu0
        %2398 = vmatprep.mubr.f32.mxu0 0.0
        %2399 = vmatmul.mubr.f32.gmra.mrb[0].mxu0 %v2132
        %v2400 = vpop.f32.mrb[0].mxu0
        %v2401 = vadd.f32 %v2188, %v2400
        %v2402 = vpop.f32.mrb[0].mxu0
        %2403 = vmatprep.mubr.f32.mxu0 0.0
        %2404 = vmatmul.mubr.f32.gmra.mrb[0].mxu0 %v2133
        %v2405 = vpop.f32.mrb[0].mxu0
        %v2406 = vadd.f32 %v2188, %v2405
        %v2407 = vpop.f32.mrb[0].mxu0
        %2408 = vmatprep.mubr.f32.mxu0 0.0
        %2409 = vmatmul.mubr.f32.gmra.mrb[0].mxu0 %v2134
        %v2410 = vpop.f32.mrb[0].mxu0
        %v2411 = vadd.f32 %v2188, %v2410
        %v2412 = vpop.f32.mrb[0].mxu0
        %2413 = vmatprep.mubr.f32.mxu0 0.0
        %2414 = vmatmul.mubr.f32.gmra.mrb[0].mxu0 %v2135
        %v2415 = vpop.f32.mrb[0].mxu0
        %v2416 = vadd.f32 %v2188, %v2415
        %v2417 = vpop.f32.mrb[0].mxu0
        %2418 = vmatprep.mubr.f32.mxu0 0.0
        %2419 = vmatmul.mubr.f32.gmra.mrb[0].mxu0 %v2136
        %v2420 = vpop.f32.mrb[0].mxu0
        %v2421 = vadd.f32 %v2188, %v2420
        %v2422 = vpop.f32.mrb[0].mxu0
        %2423 = vmatprep.mubr.f32.mxu0 0.0
        %2424 = vmatmul.mubr.f32.gmra.mrb[0].mxu0 %v2137
        %v2425 = vpop.f32.mrb[0].mxu0
        %v2426 = vadd.f32 %v2188, %v2425
        %v2427 = vpop.f32.mrb[0].mxu0
        %2428 = vmatprep.mubr.f32.mxu0 0.0
        %2429 = vmatmul.mubr.f32.gmra.mrb[0].mxu0 %v2138
        %v2430 = vpop.f32.mrb[0].mxu0
        %v2431 = vadd.f32 %v2188, %v2430
        %v2432 = vpop.f32.mrb[0].mxu0
        %2433 = vmatprep.mubr.f32.mxu0 0.0
        %2434 = vmatmul.mubr.f32.gmra.mrb[0].mxu0 %v2139
        %v2435 = vpop.f32.mrb[0].mxu0
        %v2436 = vadd.f32 %v2188, %v2435
        %v2437 = vpop.f32.mrb[0].mxu0
        %2438 = vmatprep.mubr.f32.mxu0 0.0
        %2439 = vmatmul.mubr.f32.gmra.mrb[0].mxu0 %v2140
        %v2440 = vpop.f32.mrb[0].mxu0
        %v2441 = vadd.f32 %v2188, %v2440
        %v2442 = vpop.f32.mrb[0].mxu0
        %2443 = vmatprep.mubr.f32.mxu0 0.0
        %2444 = vmatmul.mubr.f32.gmra.mrb[0].mxu0 %v2141
        %v2445 = vpop.f32.mrb[0].mxu0
        %v2446 = vadd.f32 %v2188, %v2445
        %v2447 = vpop.f32.mrb[0].mxu0
        %2448 = vmatprep.mubr.f32.mxu0 0.0
        %2449 = vmatmul.mubr.f32.gmra.mrb[0].mxu0 %v2142
        %v2450 = vpop.f32.mrb[0].mxu0
        %v2451 = vadd.f32 %v2188, %v2450
        %v2452 = vpop.f32.mrb[0].mxu0
        %2453 = vmatprep.mubr.f32.mxu0 0.0
        %2454 = vmatmul.mubr.f32.gmra.mrb[0].mxu0 %v2143
        %v2455 = vpop.f32.mrb[0].mxu0
        %v2456 = vadd.f32 %v2188, %v2455
        %v2457 = vpop.f32.mrb[0].mxu0
        %2458 = vmatprep.mubr.f32.mxu0 0.0
        %2459 = vmatmul.mubr.f32.gmra.mrb[0].mxu0 %v2144
        %v2460 = vpop.f32.mrb[0].mxu0
        %v2461 = vadd.f32 %v2188, %v2460
        %v2462 = vpop.f32.mrb[0].mxu0
        %2463 = vmatprep.mubr.f32.mxu0 0.0
        %2464 = vmatmul.mubr.f32.gmra.mrb[0].mxu0 %v2145
        %v2465 = vpop.f32.mrb[0].mxu0
        %v2466 = vadd.f32 %v2188, %v2465
        %v2467 = vpop.f32.mrb[0].mxu0
        %2468 = vmatprep.mubr.f32.mxu0 0.0
        %2469 = vmatmul.mubr.f32.gmra.mrb[0].mxu0 %v2146
        %v2470 = vpop.f32.mrb[0].mxu0
        %v2471 = vadd.f32 %v2188, %v2470
        %v2472 = vpop.f32.mrb[0].mxu0
        %2473 = vmatprep.mubr.f32.mxu0 0.0
        %2474 = vmatmul.mubr.f32.gmra.mrb[0].mxu0 %v2147
        %v2475 = vpop.f32.mrb[0].mxu0
        %v2476 = vadd.f32 %v2188, %v2475
        %v2477 = vpop.f32.mrb[0].mxu0
        %2478 = vmatprep.mubr.f32.mxu0 0.0
        %2479 = vmatmul.mubr.f32.gmra.mrb[0].mxu0 %v2148
        %v2480 = vpop.f32.mrb[0].mxu0
        %v2481 = vadd.f32 %v2188, %v2480
        %v2482 = vpop.f32.mrb[0].mxu0
        %2483 = vmatprep.mubr.f32.mxu0 0.0
        %2484 = vmatmul.mubr.f32.gmra.mrb[0].mxu0 %v2149
        %v2485 = vpop.f32.mrb[0].mxu0
        %v2486 = vadd.f32 %v2188, %v2485
        %v2487 = vpop.f32.mrb[0].mxu0
        %2488 = vmatprep.mubr.f32.mxu0 0.0
        %2489 = vmatmul.mubr.f32.gmra.mrb[0].mxu0 %v2150
        %v2490 = vpop.f32.mrb[0].mxu0
        %v2491 = vadd.f32 %v2188, %v2490
        %v2492 = vpop.f32.mrb[0].mxu0
        %2493 = vmatprep.mubr.f32.mxu0 0.0
        %2494 = vmatmul.mubr.f32.gmra.mrb[0].mxu0 %v2151
        %v2495 = vpop.f32.mrb[0].mxu0
        %v2496 = vadd.f32 %v2188, %v2495
        %v2497 = vpop.f32.mrb[0].mxu0
        %2498 = vmatprep.mubr.f32.mxu0 0.0
        %2499 = vmatmul.mubr.f32.gmra.mrb[0].mxu0 %v2152
        %v2500 = vpop.f32.mrb[0].mxu0
        %v2501 = vadd.f32 %v2188, %v2500
        %v2502 = vpop.f32.mrb[0].mxu0
        %2503 = vmatprep.mubr.f32.mxu0 0.0
        %2504 = vmatmul.mubr.f32.gmra.mrb[0].mxu0 %v2153
        %v2505 = vpop.f32.mrb[0].mxu0
        %v2506 = vadd.f32 %v2188, %v2505
        %v2507 = vpop.f32.mrb[0].mxu0
        %2508 = vmatprep.mubr.f32.mxu0 0.0
        %2509 = vmatmul.mubr.f32.gmra.mrb[0].mxu0 %v2154
        %v2510 = vpop.f32.mrb[0].mxu0
        %v2511 = vadd.f32 %v2188, %v2510
        %v2512 = vpop.f32.mrb[0].mxu0
        %2513 = vmatprep.mubr.f32.mxu0 0.0
        %2514 = vmatmul.mubr.f32.gmra.mrb[0].mxu0 %v2155
        %v2515 = vpop.f32.mrb[0].mxu0
        %v2516 = vadd.f32 %v2188, %v2515
        %v2517 = vpop.f32.mrb[0].mxu0
        %2518 = vmatprep.mubr.f32.mxu0 0.0
        %2519 = vmatmul.mubr.f32.gmra.mrb[0].mxu0 %v2156
        %v2520 = vpop.f32.mrb[0].mxu0
        %v2521 = vadd.f32 %v2188, %v2520
        %v2522 = vpop.f32.mrb[0].mxu0
        %2523 = vmatprep.mubr.f32.mxu0 0.0
        %2524 = vmatmul.mubr.f32.gmra.mrb[0].mxu0 %v2157
        %v2525 = vpop.f32.mrb[0].mxu0
        %v2526 = vadd.f32 %v2188, %v2525
        %v2527 = vpop.f32.mrb[0].mxu0
        %2528 = vmatprep.mubr.f32.mxu0 0.0
        %2529 = vmatmul.mubr.f32.gmra.mrb[0].mxu0 %v2158
        %v2530 = vpop.f32.mrb[0].mxu0
        %v2531 = vadd.f32 %v2188, %v2530
        %v2532 = vpop.f32.mrb[0].mxu0
        %2533 = vmatprep.mubr.f32.mxu0 0.0
        %2534 = vmatmul.mubr.f32.gmra.mrb[0].mxu0 %v2159
        %v2535 = vpop.f32.mrb[0].mxu0
        %v2536 = vadd.f32 %v2188, %v2535
        %v2537 = vpop.f32.mrb[0].mxu0
        %2538 = vmatprep.mubr.f32.mxu0 0.0
        %2539 = vmatmul.mubr.f32.gmra.mrb[0].mxu0 %v2160
        %v2540 = vpop.f32.mrb[0].mxu0
        %v2541 = vadd.f32 %v2188, %v2540
        %v2542 = vpop.f32.mrb[0].mxu0
        %2543 = vmatprep.mubr.f32.mxu0 0.0
        %2544 = vmatmul.mubr.f32.gmra.mrb[0].mxu0 %v2161
        %v2545 = vpop.f32.mrb[0].mxu0
        %v2546 = vadd.f32 %v2188, %v2545
        %v2547 = vpop.f32.mrb[0].mxu0
        %2548 = vmatprep.mubr.f32.mxu0 0.0
        %2549 = vmatmul.mubr.f32.gmra.mrb[0].mxu0 %v2162
        %v2550 = vpop.f32.mrb[0].mxu0
        %v2551 = vadd.f32 %v2188, %v2550
        %v2552 = vpop.f32.mrb[0].mxu0
        %2553 = vmatprep.mubr.f32.mxu0 0.0
        %2554 = vmatmul.mubr.f32.gmra.mrb[0].mxu0 %v2163
        %v2555 = vpop.f32.mrb[0].mxu0
        %v2556 = vadd.f32 %v2188, %v2555
        %v2557 = vpop.f32.mrb[0].mxu0
        %2558 = vmatprep.mubr.f32.mxu0 0.0
        %2559 = vmatmul.mubr.f32.gmra.mrb[0].mxu0 %v2164
        %v2560 = vpop.f32.mrb[0].mxu0
        %v2561 = vadd.f32 %v2188, %v2560
        %v2562 = vpop.f32.mrb[0].mxu0
        %2563 = vmatprep.mubr.f32.mxu0 0.0
        %2564 = vmatmul.mubr.f32.gmra.mrb[0].mxu0 %v2165
        %v2565 = vpop.f32.mrb[0].mxu0
        %v2566 = vadd.f32 %v2188, %v2565
        %v2567 = vpop.f32.mrb[0].mxu0
        %2568 = vmatprep.mubr.f32.mxu0 0.0
        %2569 = vmatmul.mubr.f32.gmra.mrb[0].mxu0 %v2166
        %v2570 = vpop.f32.mrb[0].mxu0
        %v2571 = vadd.f32 %v2188, %v2570
        %v2572 = vpop.f32.mrb[0].mxu0
        %2573 = vdwg.mxu0
        %v2574 = vmax.f32 %v2256, 0.0
        %v2575 = vmax.f32 %v2261, 0.0
        %v2576 = vmax.f32 %v2266, 0.0
        %v2577 = vmax.f32 %v2271, 0.0
        %v2578 = vmax.f32 %v2276, 0.0
        %v2579 = vmax.f32 %v2281, 0.0
        %v2580 = vmax.f32 %v2286, 0.0
        %v2581 = vmax.f32 %v2291, 0.0
        %v2582 = vmax.f32 %v2296, 0.0
        %v2583 = vmax.f32 %v2301, 0.0
        %v2584 = vmax.f32 %v2306, 0.0
        %v2585 = vmax.f32 %v2311, 0.0
        %v2586 = vmax.f32 %v2316, 0.0
        %v2587 = vmax.f32 %v2321, 0.0
        %v2588 = vmax.f32 %v2326, 0.0
        %v2589 = vmax.f32 %v2331, 0.0
        %v2590 = vmax.f32 %v2336, 0.0
        %v2591 = vmax.f32 %v2341, 0.0
        %v2592 = vmax.f32 %v2346, 0.0
        %v2593 = vmax.f32 %v2351, 0.0
        %v2594 = vmax.f32 %v2356, 0.0
        %v2595 = vmax.f32 %v2361, 0.0
        %v2596 = vmax.f32 %v2366, 0.0
        %v2597 = vmax.f32 %v2371, 0.0
        %v2598 = vmax.f32 %v2376, 0.0
        %v2599 = vmax.f32 %v2381, 0.0
        %v2600 = vmax.f32 %v2386, 0.0
        %v2601 = vmax.f32 %v2391, 0.0
        %v2602 = vmax.f32 %v2396, 0.0
        %v2603 = vmax.f32 %v2401, 0.0
        %v2604 = vmax.f32 %v2406, 0.0
        %v2605 = vmax.f32 %v2411, 0.0
        %v2606 = vmax.f32 %v2416, 0.0
        %v2607 = vmax.f32 %v2421, 0.0
        %v2608 = vmax.f32 %v2426, 0.0
        %v2609 = vmax.f32 %v2431, 0.0
        %v2610 = vmax.f32 %v2436, 0.0
        %v2611 = vmax.f32 %v2441, 0.0
        %v2612 = vmax.f32 %v2446, 0.0
        %v2613 = vmax.f32 %v2451, 0.0
        %v2614 = vmax.f32 %v2456, 0.0
        %v2615 = vmax.f32 %v2461, 0.0
        %v2616 = vmax.f32 %v2466, 0.0
        %v2617 = vmax.f32 %v2471, 0.0
        %v2618 = vmax.f32 %v2476, 0.0
        %v2619 = vmax.f32 %v2481, 0.0
        %v2620 = vmax.f32 %v2486, 0.0
        %v2621 = vmax.f32 %v2491, 0.0
        %v2622 = vmax.f32 %v2496, 0.0
        %v2623 = vmax.f32 %v2501, 0.0
        %v2624 = vmax.f32 %v2506, 0.0
        %v2625 = vmax.f32 %v2511, 0.0
        %v2626 = vmax.f32 %v2516, 0.0
        %v2627 = vmax.f32 %v2521, 0.0
        %v2628 = vmax.f32 %v2526, 0.0
        %v2629 = vmax.f32 %v2531, 0.0
        %v2630 = vmax.f32 %v2536, 0.0
        %v2631 = vmax.f32 %v2541, 0.0
        %v2632 = vmax.f32 %v2546, 0.0
        %v2633 = vmax.f32 %v2551, 0.0
        %v2634 = vmax.f32 %v2556, 0.0
        %v2635 = vmax.f32 %v2561, 0.0
        %v2636 = vmax.f32 %v2566, 0.0
        %v2637 = vmax.f32 %v2571, 0.0
        %s2638 = scalar_lea.vmem [#allocation5], 640
        %v2639 = vld [vmem:[%s2638] sm:$0xff]
        %v2640 = vld [vmem:[%s2638 + $0x8] sm:$0xff]
        %v2641 = vld [vmem:[%s2638 + $0x10] sm:$0xff]
        %v2642 = vld [vmem:[%s2638 + $0x18] sm:$0xff]
        %v2643 = vld [vmem:[%s2638 + $0x20] sm:$0xff]
        %v2644 = vld [vmem:[%s2638 + $0x28] sm:$0xff]
        %v2645 = vld [vmem:[%s2638 + $0x30] sm:$0xff]
        %v2646 = vld [vmem:[%s2638 + $0x38] sm:$0xff]
        %v2647 = vld [vmem:[%s2638 + $0x40] sm:$0xff]
        %v2648 = vld [vmem:[%s2638 + $0x48] sm:$0xff]
        %v2649 = vld [vmem:[%s2638 + $0x50] sm:$0xff]
        %v2650 = vld [vmem:[%s2638 + $0x58] sm:$0xff]
        %v2651 = vld [vmem:[%s2638 + $0x60] sm:$0xff]
        %v2652 = vld [vmem:[%s2638 + $0x68] sm:$0xff]
        %v2653 = vld [vmem:[%s2638 + $0x70] sm:$0xff]
        %v2654 = vld [vmem:[%s2638 + $0x78] sm:$0xff]
        %v2655 = vld [vmem:[#allocation7 + $0x5] sm:$0x1]
        %v2656 = vlaneseq
        %v2657 = vshrl.u32 %v2656, 7
        %v2658 = vsub.s32 0, %v2657
        %v2659 = vrot.slane %v2655, %v2658
        %2660 = vmatprep.subr.mxu0 0.0
        %2661 = vmatpush1.msra.mxu0 %v2639
        %2662 = vmatprep.subr.mxu0 0.0
        %2663 = vmatpush1.msra.mxu0 %v2640
        %2664 = vmatprep.subr.mxu0 0.0
        %2665 = vmatpush1.msra.mxu0 %v2641
        %2666 = vmatprep.subr.mxu0 0.0
        %2667 = vmatpush1.msra.mxu0 %v2642
        %2668 = vmatprep.subr.mxu0 0.0
        %2669 = vmatpush1.msra.mxu0 %v2643
        %2670 = vmatprep.subr.mxu0 0.0
        %2671 = vmatpush1.msra.mxu0 %v2644
        %2672 = vmatprep.subr.mxu0 0.0
        %2673 = vmatpush1.msra.mxu0 %v2645
        %2674 = vmatprep.subr.mxu0 0.0
        %2675 = vmatpush1.msra.mxu0 %v2646
        %2676 = vmatprep.subr.mxu0 0.0
        %2677 = vmatpush1.msra.mxu0 %v2647
        %2678 = vmatprep.subr.mxu0 0.0
        %2679 = vmatpush1.msra.mxu0 %v2648
        %2680 = vmatprep.subr.mxu0 0.0
        %2681 = vmatpush1.msra.mxu0 %v2649
        %2682 = vmatprep.subr.mxu0 0.0
        %2683 = vmatpush1.msra.mxu0 %v2650
        %2684 = vmatprep.subr.mxu0 0.0
        %2685 = vmatpush1.msra.mxu0 %v2651
        %2686 = vmatprep.subr.mxu0 0.0
        %2687 = vmatpush1.msra.mxu0 %v2652
        %2688 = vmatprep.subr.mxu0 0.0
        %2689 = vmatpush1.msra.mxu0 %v2653
        %2690 = vmatprep.subr.mxu0 0.0
        %2691 = vmatpush1.msra.mxu0 %v2654
        %2692 = vmatprep.subr.mxu0 0.0
        %2693 = vmatpush1.msra.mxu0 0.0
        %2694 = vmatprep.subr.mxu0 0.0
        %2695 = vmatpush1.msra.mxu0 0.0
        %2696 = vmatprep.subr.mxu0 0.0
        %2697 = vmatpush1.msra.mxu0 0.0
        %2698 = vmatprep.subr.mxu0 0.0
        %2699 = vmatpush1.msra.mxu0 0.0
        %2700 = vmatprep.subr.mxu0 0.0
        %2701 = vmatpush1.msra.mxu0 0.0
        %2702 = vmatprep.subr.mxu0 0.0
        %2703 = vmatpush1.msra.mxu0 0.0
        %2704 = vmatprep.subr.mxu0 0.0
        %2705 = vmatpush1.msra.mxu0 0.0
        %2706 = vmatprep.subr.mxu0 0.0
        %2707 = vmatpush1.msra.mxu0 0.0
        %2708 = vmatprep.subr.mxu0 0.0
        %2709 = vmatpush1.msra.mxu0 0.0
        %2710 = vmatprep.subr.mxu0 0.0
        %2711 = vmatpush1.msra.mxu0 0.0
        %2712 = vmatprep.subr.mxu0 0.0
        %2713 = vmatpush1.msra.mxu0 0.0
        %2714 = vmatprep.subr.mxu0 0.0
        %2715 = vmatpush1.msra.mxu0 0.0
        %2716 = vmatprep.subr.mxu0 0.0
        %2717 = vmatpush1.msra.mxu0 0.0
        %2718 = vmatprep.subr.mxu0 0.0
        %2719 = vmatpush1.msra.mxu0 0.0
        %2720 = vmatprep.subr.mxu0 0.0
        %2721 = vmatpush1.msra.mxu0 0.0
        %2722 = vmatprep.subr.mxu0 0.0
        %2723 = vmatpush1.msra.mxu0 0.0
        %2724 = vmatprep.mubr.f32.mxu0 0.0
        %2725 = vmatmul.mubr.f32.gmra.mrb[0].mxu0 %v2574
        %v2726 = vpop.f32.mrb[0].mxu0
        %v2727 = vadd.f32 %v2659, %v2726
        %v2728 = vpop.f32.mrb[0].mxu0
        %2729 = vmatprep.mubr.f32.mxu0 0.0
        %2730 = vmatmul.mubr.f32.gmra.mrb[0].mxu0 %v2575
        %v2731 = vpop.f32.mrb[0].mxu0
        %v2732 = vadd.f32 %v2659, %v2731
        %v2733 = vpop.f32.mrb[0].mxu0
        %2734 = vmatprep.mubr.f32.mxu0 0.0
        %2735 = vmatmul.mubr.f32.gmra.mrb[0].mxu0 %v2576
        %v2736 = vpop.f32.mrb[0].mxu0
        %v2737 = vadd.f32 %v2659, %v2736
        %v2738 = vpop.f32.mrb[0].mxu0
        %2739 = vmatprep.mubr.f32.mxu0 0.0
        %2740 = vmatmul.mubr.f32.gmra.mrb[0].mxu0 %v2577
        %v2741 = vpop.f32.mrb[0].mxu0
        %v2742 = vadd.f32 %v2659, %v2741
        %v2743 = vpop.f32.mrb[0].mxu0
        %2744 = vmatprep.mubr.f32.mxu0 0.0
        %2745 = vmatmul.mubr.f32.gmra.mrb[0].mxu0 %v2578
        %v2746 = vpop.f32.mrb[0].mxu0
        %v2747 = vadd.f32 %v2659, %v2746
        %v2748 = vpop.f32.mrb[0].mxu0
        %2749 = vmatprep.mubr.f32.mxu0 0.0
        %2750 = vmatmul.mubr.f32.gmra.mrb[0].mxu0 %v2579
        %v2751 = vpop.f32.mrb[0].mxu0
        %v2752 = vadd.f32 %v2659, %v2751
        %v2753 = vpop.f32.mrb[0].mxu0
        %2754 = vmatprep.mubr.f32.mxu0 0.0
        %2755 = vmatmul.mubr.f32.gmra.mrb[0].mxu0 %v2580
        %v2756 = vpop.f32.mrb[0].mxu0
        %v2757 = vadd.f32 %v2659, %v2756
        %v2758 = vpop.f32.mrb[0].mxu0
        %2759 = vmatprep.mubr.f32.mxu0 0.0
        %2760 = vmatmul.mubr.f32.gmra.mrb[0].mxu0 %v2581
        %v2761 = vpop.f32.mrb[0].mxu0
        %v2762 = vadd.f32 %v2659, %v2761
        %v2763 = vpop.f32.mrb[0].mxu0
        %2764 = vmatprep.mubr.f32.mxu0 0.0
        %2765 = vmatmul.mubr.f32.gmra.mrb[0].mxu0 %v2582
        %v2766 = vpop.f32.mrb[0].mxu0
        %v2767 = vadd.f32 %v2659, %v2766
        %v2768 = vpop.f32.mrb[0].mxu0
        %2769 = vmatprep.mubr.f32.mxu0 0.0
        %2770 = vmatmul.mubr.f32.gmra.mrb[0].mxu0 %v2583
        %v2771 = vpop.f32.mrb[0].mxu0
        %v2772 = vadd.f32 %v2659, %v2771
        %v2773 = vpop.f32.mrb[0].mxu0
        %2774 = vmatprep.mubr.f32.mxu0 0.0
        %2775 = vmatmul.mubr.f32.gmra.mrb[0].mxu0 %v2584
        %v2776 = vpop.f32.mrb[0].mxu0
        %v2777 = vadd.f32 %v2659, %v2776
        %v2778 = vpop.f32.mrb[0].mxu0
        %2779 = vmatprep.mubr.f32.mxu0 0.0
        %2780 = vmatmul.mubr.f32.gmra.mrb[0].mxu0 %v2585
        %v2781 = vpop.f32.mrb[0].mxu0
        %v2782 = vadd.f32 %v2659, %v2781
        %v2783 = vpop.f32.mrb[0].mxu0
        %2784 = vmatprep.mubr.f32.mxu0 0.0
        %2785 = vmatmul.mubr.f32.gmra.mrb[0].mxu0 %v2586
        %v2786 = vpop.f32.mrb[0].mxu0
        %v2787 = vadd.f32 %v2659, %v2786
        %v2788 = vpop.f32.mrb[0].mxu0
        %2789 = vmatprep.mubr.f32.mxu0 0.0
        %2790 = vmatmul.mubr.f32.gmra.mrb[0].mxu0 %v2587
        %v2791 = vpop.f32.mrb[0].mxu0
        %v2792 = vadd.f32 %v2659, %v2791
        %v2793 = vpop.f32.mrb[0].mxu0
        %2794 = vmatprep.mubr.f32.mxu0 0.0
        %2795 = vmatmul.mubr.f32.gmra.mrb[0].mxu0 %v2588
        %v2796 = vpop.f32.mrb[0].mxu0
        %v2797 = vadd.f32 %v2659, %v2796
        %v2798 = vpop.f32.mrb[0].mxu0
        %2799 = vmatprep.mubr.f32.mxu0 0.0
        %2800 = vmatmul.mubr.f32.gmra.mrb[0].mxu0 %v2589
        %v2801 = vpop.f32.mrb[0].mxu0
        %v2802 = vadd.f32 %v2659, %v2801
        %v2803 = vpop.f32.mrb[0].mxu0
        %2804 = vmatprep.mubr.f32.mxu0 0.0
        %2805 = vmatmul.mubr.f32.gmra.mrb[0].mxu0 %v2590
        %v2806 = vpop.f32.mrb[0].mxu0
        %v2807 = vadd.f32 %v2659, %v2806
        %v2808 = vpop.f32.mrb[0].mxu0
        %2809 = vmatprep.mubr.f32.mxu0 0.0
        %2810 = vmatmul.mubr.f32.gmra.mrb[0].mxu0 %v2591
        %v2811 = vpop.f32.mrb[0].mxu0
        %v2812 = vadd.f32 %v2659, %v2811
        %v2813 = vpop.f32.mrb[0].mxu0
        %2814 = vmatprep.mubr.f32.mxu0 0.0
        %2815 = vmatmul.mubr.f32.gmra.mrb[0].mxu0 %v2592
        %v2816 = vpop.f32.mrb[0].mxu0
        %v2817 = vadd.f32 %v2659, %v2816
        %v2818 = vpop.f32.mrb[0].mxu0
        %2819 = vmatprep.mubr.f32.mxu0 0.0
        %2820 = vmatmul.mubr.f32.gmra.mrb[0].mxu0 %v2593
        %v2821 = vpop.f32.mrb[0].mxu0
        %v2822 = vadd.f32 %v2659, %v2821
        %v2823 = vpop.f32.mrb[0].mxu0
        %2824 = vmatprep.mubr.f32.mxu0 0.0
        %2825 = vmatmul.mubr.f32.gmra.mrb[0].mxu0 %v2594
        %v2826 = vpop.f32.mrb[0].mxu0
        %v2827 = vadd.f32 %v2659, %v2826
        %v2828 = vpop.f32.mrb[0].mxu0
        %2829 = vmatprep.mubr.f32.mxu0 0.0
        %2830 = vmatmul.mubr.f32.gmra.mrb[0].mxu0 %v2595
        %v2831 = vpop.f32.mrb[0].mxu0
        %v2832 = vadd.f32 %v2659, %v2831
        %v2833 = vpop.f32.mrb[0].mxu0
        %2834 = vmatprep.mubr.f32.mxu0 0.0
        %2835 = vmatmul.mubr.f32.gmra.mrb[0].mxu0 %v2596
        %v2836 = vpop.f32.mrb[0].mxu0
        %v2837 = vadd.f32 %v2659, %v2836
        %v2838 = vpop.f32.mrb[0].mxu0
        %2839 = vmatprep.mubr.f32.mxu0 0.0
        %2840 = vmatmul.mubr.f32.gmra.mrb[0].mxu0 %v2597
        %v2841 = vpop.f32.mrb[0].mxu0
        %v2842 = vadd.f32 %v2659, %v2841
        %v2843 = vpop.f32.mrb[0].mxu0
        %2844 = vmatprep.mubr.f32.mxu0 0.0
        %2845 = vmatmul.mubr.f32.gmra.mrb[0].mxu0 %v2598
        %v2846 = vpop.f32.mrb[0].mxu0
        %v2847 = vadd.f32 %v2659, %v2846
        %v2848 = vpop.f32.mrb[0].mxu0
        %2849 = vmatprep.mubr.f32.mxu0 0.0
        %2850 = vmatmul.mubr.f32.gmra.mrb[0].mxu0 %v2599
        %v2851 = vpop.f32.mrb[0].mxu0
        %v2852 = vadd.f32 %v2659, %v2851
        %v2853 = vpop.f32.mrb[0].mxu0
        %2854 = vmatprep.mubr.f32.mxu0 0.0
        %2855 = vmatmul.mubr.f32.gmra.mrb[0].mxu0 %v2600
        %v2856 = vpop.f32.mrb[0].mxu0
        %v2857 = vadd.f32 %v2659, %v2856
        %v2858 = vpop.f32.mrb[0].mxu0
        %2859 = vmatprep.mubr.f32.mxu0 0.0
        %2860 = vmatmul.mubr.f32.gmra.mrb[0].mxu0 %v2601
        %v2861 = vpop.f32.mrb[0].mxu0
        %v2862 = vadd.f32 %v2659, %v2861
        %v2863 = vpop.f32.mrb[0].mxu0
        %2864 = vmatprep.mubr.f32.mxu0 0.0
        %2865 = vmatmul.mubr.f32.gmra.mrb[0].mxu0 %v2602
        %v2866 = vpop.f32.mrb[0].mxu0
        %v2867 = vadd.f32 %v2659, %v2866
        %v2868 = vpop.f32.mrb[0].mxu0
        %2869 = vmatprep.mubr.f32.mxu0 0.0
        %2870 = vmatmul.mubr.f32.gmra.mrb[0].mxu0 %v2603
        %v2871 = vpop.f32.mrb[0].mxu0
        %v2872 = vadd.f32 %v2659, %v2871
        %v2873 = vpop.f32.mrb[0].mxu0
        %2874 = vmatprep.mubr.f32.mxu0 0.0
        %2875 = vmatmul.mubr.f32.gmra.mrb[0].mxu0 %v2604
        %v2876 = vpop.f32.mrb[0].mxu0
        %v2877 = vadd.f32 %v2659, %v2876
        %v2878 = vpop.f32.mrb[0].mxu0
        %2879 = vmatprep.mubr.f32.mxu0 0.0
        %2880 = vmatmul.mubr.f32.gmra.mrb[0].mxu0 %v2605
        %v2881 = vpop.f32.mrb[0].mxu0
        %v2882 = vadd.f32 %v2659, %v2881
        %v2883 = vpop.f32.mrb[0].mxu0
        %2884 = vmatprep.mubr.f32.mxu0 0.0
        %2885 = vmatmul.mubr.f32.gmra.mrb[0].mxu0 %v2606
        %v2886 = vpop.f32.mrb[0].mxu0
        %v2887 = vadd.f32 %v2659, %v2886
        %v2888 = vpop.f32.mrb[0].mxu0
        %2889 = vmatprep.mubr.f32.mxu0 0.0
        %2890 = vmatmul.mubr.f32.gmra.mrb[0].mxu0 %v2607
        %v2891 = vpop.f32.mrb[0].mxu0
        %v2892 = vadd.f32 %v2659, %v2891
        %v2893 = vpop.f32.mrb[0].mxu0
        %2894 = vmatprep.mubr.f32.mxu0 0.0
        %2895 = vmatmul.mubr.f32.gmra.mrb[0].mxu0 %v2608
        %v2896 = vpop.f32.mrb[0].mxu0
        %v2897 = vadd.f32 %v2659, %v2896
        %v2898 = vpop.f32.mrb[0].mxu0
        %2899 = vmatprep.mubr.f32.mxu0 0.0
        %2900 = vmatmul.mubr.f32.gmra.mrb[0].mxu0 %v2609
        %v2901 = vpop.f32.mrb[0].mxu0
        %v2902 = vadd.f32 %v2659, %v2901
        %v2903 = vpop.f32.mrb[0].mxu0
        %2904 = vmatprep.mubr.f32.mxu0 0.0
        %2905 = vmatmul.mubr.f32.gmra.mrb[0].mxu0 %v2610
        %v2906 = vpop.f32.mrb[0].mxu0
        %v2907 = vadd.f32 %v2659, %v2906
        %v2908 = vpop.f32.mrb[0].mxu0
        %2909 = vmatprep.mubr.f32.mxu0 0.0
        %2910 = vmatmul.mubr.f32.gmra.mrb[0].mxu0 %v2611
        %v2911 = vpop.f32.mrb[0].mxu0
        %v2912 = vadd.f32 %v2659, %v2911
        %v2913 = vpop.f32.mrb[0].mxu0
        %2914 = vmatprep.mubr.f32.mxu0 0.0
        %2915 = vmatmul.mubr.f32.gmra.mrb[0].mxu0 %v2612
        %v2916 = vpop.f32.mrb[0].mxu0
        %v2917 = vadd.f32 %v2659, %v2916
        %v2918 = vpop.f32.mrb[0].mxu0
        %2919 = vmatprep.mubr.f32.mxu0 0.0
        %2920 = vmatmul.mubr.f32.gmra.mrb[0].mxu0 %v2613
        %v2921 = vpop.f32.mrb[0].mxu0
        %v2922 = vadd.f32 %v2659, %v2921
        %v2923 = vpop.f32.mrb[0].mxu0
        %2924 = vmatprep.mubr.f32.mxu0 0.0
        %2925 = vmatmul.mubr.f32.gmra.mrb[0].mxu0 %v2614
        %v2926 = vpop.f32.mrb[0].mxu0
        %v2927 = vadd.f32 %v2659, %v2926
        %v2928 = vpop.f32.mrb[0].mxu0
        %2929 = vmatprep.mubr.f32.mxu0 0.0
        %2930 = vmatmul.mubr.f32.gmra.mrb[0].mxu0 %v2615
        %v2931 = vpop.f32.mrb[0].mxu0
        %v2932 = vadd.f32 %v2659, %v2931
        %v2933 = vpop.f32.mrb[0].mxu0
        %2934 = vmatprep.mubr.f32.mxu0 0.0
        %2935 = vmatmul.mubr.f32.gmra.mrb[0].mxu0 %v2616
        %v2936 = vpop.f32.mrb[0].mxu0
        %v2937 = vadd.f32 %v2659, %v2936
        %v2938 = vpop.f32.mrb[0].mxu0
        %2939 = vmatprep.mubr.f32.mxu0 0.0
        %2940 = vmatmul.mubr.f32.gmra.mrb[0].mxu0 %v2617
        %v2941 = vpop.f32.mrb[0].mxu0
        %v2942 = vadd.f32 %v2659, %v2941
        %v2943 = vpop.f32.mrb[0].mxu0
        %2944 = vmatprep.mubr.f32.mxu0 0.0
        %2945 = vmatmul.mubr.f32.gmra.mrb[0].mxu0 %v2618
        %v2946 = vpop.f32.mrb[0].mxu0
        %v2947 = vadd.f32 %v2659, %v2946
        %v2948 = vpop.f32.mrb[0].mxu0
        %2949 = vmatprep.mubr.f32.mxu0 0.0
        %2950 = vmatmul.mubr.f32.gmra.mrb[0].mxu0 %v2619
        %v2951 = vpop.f32.mrb[0].mxu0
        %v2952 = vadd.f32 %v2659, %v2951
        %v2953 = vpop.f32.mrb[0].mxu0
        %2954 = vmatprep.mubr.f32.mxu0 0.0
        %2955 = vmatmul.mubr.f32.gmra.mrb[0].mxu0 %v2620
        %v2956 = vpop.f32.mrb[0].mxu0
        %v2957 = vadd.f32 %v2659, %v2956
        %v2958 = vpop.f32.mrb[0].mxu0
        %2959 = vmatprep.mubr.f32.mxu0 0.0
        %2960 = vmatmul.mubr.f32.gmra.mrb[0].mxu0 %v2621
        %v2961 = vpop.f32.mrb[0].mxu0
        %v2962 = vadd.f32 %v2659, %v2961
        %v2963 = vpop.f32.mrb[0].mxu0
        %2964 = vmatprep.mubr.f32.mxu0 0.0
        %2965 = vmatmul.mubr.f32.gmra.mrb[0].mxu0 %v2622
        %v2966 = vpop.f32.mrb[0].mxu0
        %v2967 = vadd.f32 %v2659, %v2966
        %v2968 = vpop.f32.mrb[0].mxu0
        %2969 = vmatprep.mubr.f32.mxu0 0.0
        %2970 = vmatmul.mubr.f32.gmra.mrb[0].mxu0 %v2623
        %v2971 = vpop.f32.mrb[0].mxu0
        %v2972 = vadd.f32 %v2659, %v2971
        %v2973 = vpop.f32.mrb[0].mxu0
        %2974 = vmatprep.mubr.f32.mxu0 0.0
        %2975 = vmatmul.mubr.f32.gmra.mrb[0].mxu0 %v2624
        %v2976 = vpop.f32.mrb[0].mxu0
        %v2977 = vadd.f32 %v2659, %v2976
        %v2978 = vpop.f32.mrb[0].mxu0
        %2979 = vmatprep.mubr.f32.mxu0 0.0
        %2980 = vmatmul.mubr.f32.gmra.mrb[0].mxu0 %v2625
        %v2981 = vpop.f32.mrb[0].mxu0
        %v2982 = vadd.f32 %v2659, %v2981
        %v2983 = vpop.f32.mrb[0].mxu0
        %2984 = vmatprep.mubr.f32.mxu0 0.0
        %2985 = vmatmul.mubr.f32.gmra.mrb[0].mxu0 %v2626
        %v2986 = vpop.f32.mrb[0].mxu0
        %v2987 = vadd.f32 %v2659, %v2986
        %v2988 = vpop.f32.mrb[0].mxu0
        %2989 = vmatprep.mubr.f32.mxu0 0.0
        %2990 = vmatmul.mubr.f32.gmra.mrb[0].mxu0 %v2627
        %v2991 = vpop.f32.mrb[0].mxu0
        %v2992 = vadd.f32 %v2659, %v2991
        %v2993 = vpop.f32.mrb[0].mxu0
        %2994 = vmatprep.mubr.f32.mxu0 0.0
        %2995 = vmatmul.mubr.f32.gmra.mrb[0].mxu0 %v2628
        %v2996 = vpop.f32.mrb[0].mxu0
        %v2997 = vadd.f32 %v2659, %v2996
        %v2998 = vpop.f32.mrb[0].mxu0
        %2999 = vmatprep.mubr.f32.mxu0 0.0
        %3000 = vmatmul.mubr.f32.gmra.mrb[0].mxu0 %v2629
        %v3001 = vpop.f32.mrb[0].mxu0
        %v3002 = vadd.f32 %v2659, %v3001
        %v3003 = vpop.f32.mrb[0].mxu0
        %3004 = vmatprep.mubr.f32.mxu0 0.0
        %3005 = vmatmul.mubr.f32.gmra.mrb[0].mxu0 %v2630
        %v3006 = vpop.f32.mrb[0].mxu0
        %v3007 = vadd.f32 %v2659, %v3006
        %v3008 = vpop.f32.mrb[0].mxu0
        %3009 = vmatprep.mubr.f32.mxu0 0.0
        %3010 = vmatmul.mubr.f32.gmra.mrb[0].mxu0 %v2631
        %v3011 = vpop.f32.mrb[0].mxu0
        %v3012 = vadd.f32 %v2659, %v3011
        %v3013 = vpop.f32.mrb[0].mxu0
        %3014 = vmatprep.mubr.f32.mxu0 0.0
        %3015 = vmatmul.mubr.f32.gmra.mrb[0].mxu0 %v2632
        %v3016 = vpop.f32.mrb[0].mxu0
        %v3017 = vadd.f32 %v2659, %v3016
        %v3018 = vpop.f32.mrb[0].mxu0
        %3019 = vmatprep.mubr.f32.mxu0 0.0
        %3020 = vmatmul.mubr.f32.gmra.mrb[0].mxu0 %v2633
        %v3021 = vpop.f32.mrb[0].mxu0
        %v3022 = vadd.f32 %v2659, %v3021
        %v3023 = vpop.f32.mrb[0].mxu0
        %3024 = vmatprep.mubr.f32.mxu0 0.0
        %3025 = vmatmul.mubr.f32.gmra.mrb[0].mxu0 %v2634
        %v3026 = vpop.f32.mrb[0].mxu0
        %v3027 = vadd.f32 %v2659, %v3026
        %v3028 = vpop.f32.mrb[0].mxu0
        %3029 = vmatprep.mubr.f32.mxu0 0.0
        %3030 = vmatmul.mubr.f32.gmra.mrb[0].mxu0 %v2635
        %v3031 = vpop.f32.mrb[0].mxu0
        %v3032 = vadd.f32 %v2659, %v3031
        %v3033 = vpop.f32.mrb[0].mxu0
        %3034 = vmatprep.mubr.f32.mxu0 0.0
        %3035 = vmatmul.mubr.f32.gmra.mrb[0].mxu0 %v2636
        %v3036 = vpop.f32.mrb[0].mxu0
        %v3037 = vadd.f32 %v2659, %v3036
        %v3038 = vpop.f32.mrb[0].mxu0
        %3039 = vmatprep.mubr.f32.mxu0 0.0
        %3040 = vmatmul.mubr.f32.gmra.mrb[0].mxu0 %v2637
        %v3041 = vpop.f32.mrb[0].mxu0
        %v3042 = vadd.f32 %v2659, %v3041
        %v3043 = vpop.f32.mrb[0].mxu0
        %3044 = vdwg.mxu0
        %v3045 = vmax.f32 %v2727, 0.0
        %v3046 = vmax.f32 %v2732, 0.0
        %v3047 = vmax.f32 %v2737, 0.0
        %v3048 = vmax.f32 %v2742, 0.0
        %v3049 = vmax.f32 %v2747, 0.0
        %v3050 = vmax.f32 %v2752, 0.0
        %v3051 = vmax.f32 %v2757, 0.0
        %v3052 = vmax.f32 %v2762, 0.0
        %v3053 = vmax.f32 %v2767, 0.0
        %v3054 = vmax.f32 %v2772, 0.0
        %v3055 = vmax.f32 %v2777, 0.0
        %v3056 = vmax.f32 %v2782, 0.0
        %v3057 = vmax.f32 %v2787, 0.0
        %v3058 = vmax.f32 %v2792, 0.0
        %v3059 = vmax.f32 %v2797, 0.0
        %v3060 = vmax.f32 %v2802, 0.0
        %v3061 = vmax.f32 %v2807, 0.0
        %v3062 = vmax.f32 %v2812, 0.0
        %v3063 = vmax.f32 %v2817, 0.0
        %v3064 = vmax.f32 %v2822, 0.0
        %v3065 = vmax.f32 %v2827, 0.0
        %v3066 = vmax.f32 %v2832, 0.0
        %v3067 = vmax.f32 %v2837, 0.0
        %v3068 = vmax.f32 %v2842, 0.0
        %v3069 = vmax.f32 %v2847, 0.0
        %v3070 = vmax.f32 %v2852, 0.0
        %v3071 = vmax.f32 %v2857, 0.0
        %v3072 = vmax.f32 %v2862, 0.0
        %v3073 = vmax.f32 %v2867, 0.0
        %v3074 = vmax.f32 %v2872, 0.0
        %v3075 = vmax.f32 %v2877, 0.0
        %v3076 = vmax.f32 %v2882, 0.0
        %v3077 = vmax.f32 %v2887, 0.0
        %v3078 = vmax.f32 %v2892, 0.0
        %v3079 = vmax.f32 %v2897, 0.0
        %v3080 = vmax.f32 %v2902, 0.0
        %v3081 = vmax.f32 %v2907, 0.0
        %v3082 = vmax.f32 %v2912, 0.0
        %v3083 = vmax.f32 %v2917, 0.0
        %v3084 = vmax.f32 %v2922, 0.0
        %v3085 = vmax.f32 %v2927, 0.0
        %v3086 = vmax.f32 %v2932, 0.0
        %v3087 = vmax.f32 %v2937, 0.0
        %v3088 = vmax.f32 %v2942, 0.0
        %v3089 = vmax.f32 %v2947, 0.0
        %v3090 = vmax.f32 %v2952, 0.0
        %v3091 = vmax.f32 %v2957, 0.0
        %v3092 = vmax.f32 %v2962, 0.0
        %v3093 = vmax.f32 %v2967, 0.0
        %v3094 = vmax.f32 %v2972, 0.0
        %v3095 = vmax.f32 %v2977, 0.0
        %v3096 = vmax.f32 %v2982, 0.0
        %v3097 = vmax.f32 %v2987, 0.0
        %v3098 = vmax.f32 %v2992, 0.0
        %v3099 = vmax.f32 %v2997, 0.0
        %v3100 = vmax.f32 %v3002, 0.0
        %v3101 = vmax.f32 %v3007, 0.0
        %v3102 = vmax.f32 %v3012, 0.0
        %v3103 = vmax.f32 %v3017, 0.0
        %v3104 = vmax.f32 %v3022, 0.0
        %v3105 = vmax.f32 %v3027, 0.0
        %v3106 = vmax.f32 %v3032, 0.0
        %v3107 = vmax.f32 %v3037, 0.0
        %v3108 = vmax.f32 %v3042, 0.0
        %s3109 = scalar_lea.vmem [#allocation5], 768
        %v3110 = vld [vmem:[%s3109] sm:$0xff]
        %v3111 = vld [vmem:[%s3109 + $0x8] sm:$0xff]
        %v3112 = vld [vmem:[%s3109 + $0x10] sm:$0xff]
        %v3113 = vld [vmem:[%s3109 + $0x18] sm:$0xff]
        %v3114 = vld [vmem:[%s3109 + $0x20] sm:$0xff]
        %v3115 = vld [vmem:[%s3109 + $0x28] sm:$0xff]
        %v3116 = vld [vmem:[%s3109 + $0x30] sm:$0xff]
        %v3117 = vld [vmem:[%s3109 + $0x38] sm:$0xff]
        %v3118 = vld [vmem:[%s3109 + $0x40] sm:$0xff]
        %v3119 = vld [vmem:[%s3109 + $0x48] sm:$0xff]
        %v3120 = vld [vmem:[%s3109 + $0x50] sm:$0xff]
        %v3121 = vld [vmem:[%s3109 + $0x58] sm:$0xff]
        %v3122 = vld [vmem:[%s3109 + $0x60] sm:$0xff]
        %v3123 = vld [vmem:[%s3109 + $0x68] sm:$0xff]
        %v3124 = vld [vmem:[%s3109 + $0x70] sm:$0xff]
        %v3125 = vld [vmem:[%s3109 + $0x78] sm:$0xff]
        %v3126 = vld [vmem:[#allocation7 + $0x6] sm:$0x1]
        %v3127 = vlaneseq
        %v3128 = vshrl.u32 %v3127, 7
        %v3129 = vsub.s32 0, %v3128
        %v3130 = vrot.slane %v3126, %v3129
        %3131 = vmatprep.subr.mxu0 0.0
        %3132 = vmatpush1.msra.mxu0 %v3110
        %3133 = vmatprep.subr.mxu0 0.0
        %3134 = vmatpush1.msra.mxu0 %v3111
        %3135 = vmatprep.subr.mxu0 0.0
        %3136 = vmatpush1.msra.mxu0 %v3112
        %3137 = vmatprep.subr.mxu0 0.0
        %3138 = vmatpush1.msra.mxu0 %v3113
        %3139 = vmatprep.subr.mxu0 0.0
        %3140 = vmatpush1.msra.mxu0 %v3114
        %3141 = vmatprep.subr.mxu0 0.0
        %3142 = vmatpush1.msra.mxu0 %v3115
        %3143 = vmatprep.subr.mxu0 0.0
        %3144 = vmatpush1.msra.mxu0 %v3116
        %3145 = vmatprep.subr.mxu0 0.0
        %3146 = vmatpush1.msra.mxu0 %v3117
        %3147 = vmatprep.subr.mxu0 0.0
        %3148 = vmatpush1.msra.mxu0 %v3118
        %3149 = vmatprep.subr.mxu0 0.0
        %3150 = vmatpush1.msra.mxu0 %v3119
        %3151 = vmatprep.subr.mxu0 0.0
        %3152 = vmatpush1.msra.mxu0 %v3120
        %3153 = vmatprep.subr.mxu0 0.0
        %3154 = vmatpush1.msra.mxu0 %v3121
        %3155 = vmatprep.subr.mxu0 0.0
        %3156 = vmatpush1.msra.mxu0 %v3122
        %3157 = vmatprep.subr.mxu0 0.0
        %3158 = vmatpush1.msra.mxu0 %v3123
        %3159 = vmatprep.subr.mxu0 0.0
        %3160 = vmatpush1.msra.mxu0 %v3124
        %3161 = vmatprep.subr.mxu0 0.0
        %3162 = vmatpush1.msra.mxu0 %v3125
        %3163 = vmatprep.subr.mxu0 0.0
        %3164 = vmatpush1.msra.mxu0 0.0
        %3165 = vmatprep.subr.mxu0 0.0
        %3166 = vmatpush1.msra.mxu0 0.0
        %3167 = vmatprep.subr.mxu0 0.0
        %3168 = vmatpush1.msra.mxu0 0.0
        %3169 = vmatprep.subr.mxu0 0.0
        %3170 = vmatpush1.msra.mxu0 0.0
        %3171 = vmatprep.subr.mxu0 0.0
        %3172 = vmatpush1.msra.mxu0 0.0
        %3173 = vmatprep.subr.mxu0 0.0
        %3174 = vmatpush1.msra.mxu0 0.0
        %3175 = vmatprep.subr.mxu0 0.0
        %3176 = vmatpush1.msra.mxu0 0.0
        %3177 = vmatprep.subr.mxu0 0.0
        %3178 = vmatpush1.msra.mxu0 0.0
        %3179 = vmatprep.subr.mxu0 0.0
        %3180 = vmatpush1.msra.mxu0 0.0
        %3181 = vmatprep.subr.mxu0 0.0
        %3182 = vmatpush1.msra.mxu0 0.0
        %3183 = vmatprep.subr.mxu0 0.0
        %3184 = vmatpush1.msra.mxu0 0.0
        %3185 = vmatprep.subr.mxu0 0.0
        %3186 = vmatpush1.msra.mxu0 0.0
        %3187 = vmatprep.subr.mxu0 0.0
        %3188 = vmatpush1.msra.mxu0 0.0
        %3189 = vmatprep.subr.mxu0 0.0
        %3190 = vmatpush1.msra.mxu0 0.0
        %3191 = vmatprep.subr.mxu0 0.0
        %3192 = vmatpush1.msra.mxu0 0.0
        %3193 = vmatprep.subr.mxu0 0.0
        %3194 = vmatpush1.msra.mxu0 0.0
        %3195 = vmatprep.mubr.f32.mxu0 0.0
        %3196 = vmatmul.mubr.f32.gmra.mrb[0].mxu0 %v3045
        %v3197 = vpop.f32.mrb[0].mxu0
        %v3198 = vadd.f32 %v3130, %v3197
        %v3199 = vpop.f32.mrb[0].mxu0
        %3200 = vmatprep.mubr.f32.mxu0 0.0
        %3201 = vmatmul.mubr.f32.gmra.mrb[0].mxu0 %v3046
        %v3202 = vpop.f32.mrb[0].mxu0
        %v3203 = vadd.f32 %v3130, %v3202
        %v3204 = vpop.f32.mrb[0].mxu0
        %3205 = vmatprep.mubr.f32.mxu0 0.0
        %3206 = vmatmul.mubr.f32.gmra.mrb[0].mxu0 %v3047
        %v3207 = vpop.f32.mrb[0].mxu0
        %v3208 = vadd.f32 %v3130, %v3207
        %v3209 = vpop.f32.mrb[0].mxu0
        %3210 = vmatprep.mubr.f32.mxu0 0.0
        %3211 = vmatmul.mubr.f32.gmra.mrb[0].mxu0 %v3048
        %v3212 = vpop.f32.mrb[0].mxu0
        %v3213 = vadd.f32 %v3130, %v3212
        %v3214 = vpop.f32.mrb[0].mxu0
        %3215 = vmatprep.mubr.f32.mxu0 0.0
        %3216 = vmatmul.mubr.f32.gmra.mrb[0].mxu0 %v3049
        %v3217 = vpop.f32.mrb[0].mxu0
        %v3218 = vadd.f32 %v3130, %v3217
        %v3219 = vpop.f32.mrb[0].mxu0
        %3220 = vmatprep.mubr.f32.mxu0 0.0
        %3221 = vmatmul.mubr.f32.gmra.mrb[0].mxu0 %v3050
        %v3222 = vpop.f32.mrb[0].mxu0
        %v3223 = vadd.f32 %v3130, %v3222
        %v3224 = vpop.f32.mrb[0].mxu0
        %3225 = vmatprep.mubr.f32.mxu0 0.0
        %3226 = vmatmul.mubr.f32.gmra.mrb[0].mxu0 %v3051
        %v3227 = vpop.f32.mrb[0].mxu0
        %v3228 = vadd.f32 %v3130, %v3227
        %v3229 = vpop.f32.mrb[0].mxu0
        %3230 = vmatprep.mubr.f32.mxu0 0.0
        %3231 = vmatmul.mubr.f32.gmra.mrb[0].mxu0 %v3052
        %v3232 = vpop.f32.mrb[0].mxu0
        %v3233 = vadd.f32 %v3130, %v3232
        %v3234 = vpop.f32.mrb[0].mxu0
        %3235 = vmatprep.mubr.f32.mxu0 0.0
        %3236 = vmatmul.mubr.f32.gmra.mrb[0].mxu0 %v3053
        %v3237 = vpop.f32.mrb[0].mxu0
        %v3238 = vadd.f32 %v3130, %v3237
        %v3239 = vpop.f32.mrb[0].mxu0
        %3240 = vmatprep.mubr.f32.mxu0 0.0
        %3241 = vmatmul.mubr.f32.gmra.mrb[0].mxu0 %v3054
        %v3242 = vpop.f32.mrb[0].mxu0
        %v3243 = vadd.f32 %v3130, %v3242
        %v3244 = vpop.f32.mrb[0].mxu0
        %3245 = vmatprep.mubr.f32.mxu0 0.0
        %3246 = vmatmul.mubr.f32.gmra.mrb[0].mxu0 %v3055
        %v3247 = vpop.f32.mrb[0].mxu0
        %v3248 = vadd.f32 %v3130, %v3247
        %v3249 = vpop.f32.mrb[0].mxu0
        %3250 = vmatprep.mubr.f32.mxu0 0.0
        %3251 = vmatmul.mubr.f32.gmra.mrb[0].mxu0 %v3056
        %v3252 = vpop.f32.mrb[0].mxu0
        %v3253 = vadd.f32 %v3130, %v3252
        %v3254 = vpop.f32.mrb[0].mxu0
        %3255 = vmatprep.mubr.f32.mxu0 0.0
        %3256 = vmatmul.mubr.f32.gmra.mrb[0].mxu0 %v3057
        %v3257 = vpop.f32.mrb[0].mxu0
        %v3258 = vadd.f32 %v3130, %v3257
        %v3259 = vpop.f32.mrb[0].mxu0
        %3260 = vmatprep.mubr.f32.mxu0 0.0
        %3261 = vmatmul.mubr.f32.gmra.mrb[0].mxu0 %v3058
        %v3262 = vpop.f32.mrb[0].mxu0
        %v3263 = vadd.f32 %v3130, %v3262
        %v3264 = vpop.f32.mrb[0].mxu0
        %3265 = vmatprep.mubr.f32.mxu0 0.0
        %3266 = vmatmul.mubr.f32.gmra.mrb[0].mxu0 %v3059
        %v3267 = vpop.f32.mrb[0].mxu0
        %v3268 = vadd.f32 %v3130, %v3267
        %v3269 = vpop.f32.mrb[0].mxu0
        %3270 = vmatprep.mubr.f32.mxu0 0.0
        %3271 = vmatmul.mubr.f32.gmra.mrb[0].mxu0 %v3060
        %v3272 = vpop.f32.mrb[0].mxu0
        %v3273 = vadd.f32 %v3130, %v3272
        %v3274 = vpop.f32.mrb[0].mxu0
        %3275 = vmatprep.mubr.f32.mxu0 0.0
        %3276 = vmatmul.mubr.f32.gmra.mrb[0].mxu0 %v3061
        %v3277 = vpop.f32.mrb[0].mxu0
        %v3278 = vadd.f32 %v3130, %v3277
        %v3279 = vpop.f32.mrb[0].mxu0
        %3280 = vmatprep.mubr.f32.mxu0 0.0
        %3281 = vmatmul.mubr.f32.gmra.mrb[0].mxu0 %v3062
        %v3282 = vpop.f32.mrb[0].mxu0
        %v3283 = vadd.f32 %v3130, %v3282
        %v3284 = vpop.f32.mrb[0].mxu0
        %3285 = vmatprep.mubr.f32.mxu0 0.0
        %3286 = vmatmul.mubr.f32.gmra.mrb[0].mxu0 %v3063
        %v3287 = vpop.f32.mrb[0].mxu0
        %v3288 = vadd.f32 %v3130, %v3287
        %v3289 = vpop.f32.mrb[0].mxu0
        %3290 = vmatprep.mubr.f32.mxu0 0.0
        %3291 = vmatmul.mubr.f32.gmra.mrb[0].mxu0 %v3064
        %v3292 = vpop.f32.mrb[0].mxu0
        %v3293 = vadd.f32 %v3130, %v3292
        %v3294 = vpop.f32.mrb[0].mxu0
        %3295 = vmatprep.mubr.f32.mxu0 0.0
        %3296 = vmatmul.mubr.f32.gmra.mrb[0].mxu0 %v3065
        %v3297 = vpop.f32.mrb[0].mxu0
        %v3298 = vadd.f32 %v3130, %v3297
        %v3299 = vpop.f32.mrb[0].mxu0
        %3300 = vmatprep.mubr.f32.mxu0 0.0
        %3301 = vmatmul.mubr.f32.gmra.mrb[0].mxu0 %v3066
        %v3302 = vpop.f32.mrb[0].mxu0
        %v3303 = vadd.f32 %v3130, %v3302
        %v3304 = vpop.f32.mrb[0].mxu0
        %3305 = vmatprep.mubr.f32.mxu0 0.0
        %3306 = vmatmul.mubr.f32.gmra.mrb[0].mxu0 %v3067
        %v3307 = vpop.f32.mrb[0].mxu0
        %v3308 = vadd.f32 %v3130, %v3307
        %v3309 = vpop.f32.mrb[0].mxu0
        %3310 = vmatprep.mubr.f32.mxu0 0.0
        %3311 = vmatmul.mubr.f32.gmra.mrb[0].mxu0 %v3068
        %v3312 = vpop.f32.mrb[0].mxu0
        %v3313 = vadd.f32 %v3130, %v3312
        %v3314 = vpop.f32.mrb[0].mxu0
        %3315 = vmatprep.mubr.f32.mxu0 0.0
        %3316 = vmatmul.mubr.f32.gmra.mrb[0].mxu0 %v3069
        %v3317 = vpop.f32.mrb[0].mxu0
        %v3318 = vadd.f32 %v3130, %v3317
        %v3319 = vpop.f32.mrb[0].mxu0
        %3320 = vmatprep.mubr.f32.mxu0 0.0
        %3321 = vmatmul.mubr.f32.gmra.mrb[0].mxu0 %v3070
        %v3322 = vpop.f32.mrb[0].mxu0
        %v3323 = vadd.f32 %v3130, %v3322
        %v3324 = vpop.f32.mrb[0].mxu0
        %3325 = vmatprep.mubr.f32.mxu0 0.0
        %3326 = vmatmul.mubr.f32.gmra.mrb[0].mxu0 %v3071
        %v3327 = vpop.f32.mrb[0].mxu0
        %v3328 = vadd.f32 %v3130, %v3327
        %v3329 = vpop.f32.mrb[0].mxu0
        %3330 = vmatprep.mubr.f32.mxu0 0.0
        %3331 = vmatmul.mubr.f32.gmra.mrb[0].mxu0 %v3072
        %v3332 = vpop.f32.mrb[0].mxu0
        %v3333 = vadd.f32 %v3130, %v3332
        %v3334 = vpop.f32.mrb[0].mxu0
        %3335 = vmatprep.mubr.f32.mxu0 0.0
        %3336 = vmatmul.mubr.f32.gmra.mrb[0].mxu0 %v3073
        %v3337 = vpop.f32.mrb[0].mxu0
        %v3338 = vadd.f32 %v3130, %v3337
        %v3339 = vpop.f32.mrb[0].mxu0
        %3340 = vmatprep.mubr.f32.mxu0 0.0
        %3341 = vmatmul.mubr.f32.gmra.mrb[0].mxu0 %v3074
        %v3342 = vpop.f32.mrb[0].mxu0
        %v3343 = vadd.f32 %v3130, %v3342
        %v3344 = vpop.f32.mrb[0].mxu0
        %3345 = vmatprep.mubr.f32.mxu0 0.0
        %3346 = vmatmul.mubr.f32.gmra.mrb[0].mxu0 %v3075
        %v3347 = vpop.f32.mrb[0].mxu0
        %v3348 = vadd.f32 %v3130, %v3347
        %v3349 = vpop.f32.mrb[0].mxu0
        %3350 = vmatprep.mubr.f32.mxu0 0.0
        %3351 = vmatmul.mubr.f32.gmra.mrb[0].mxu0 %v3076
        %v3352 = vpop.f32.mrb[0].mxu0
        %v3353 = vadd.f32 %v3130, %v3352
        %v3354 = vpop.f32.mrb[0].mxu0
        %3355 = vmatprep.mubr.f32.mxu0 0.0
        %3356 = vmatmul.mubr.f32.gmra.mrb[0].mxu0 %v3077
        %v3357 = vpop.f32.mrb[0].mxu0
        %v3358 = vadd.f32 %v3130, %v3357
        %v3359 = vpop.f32.mrb[0].mxu0
        %3360 = vmatprep.mubr.f32.mxu0 0.0
        %3361 = vmatmul.mubr.f32.gmra.mrb[0].mxu0 %v3078
        %v3362 = vpop.f32.mrb[0].mxu0
        %v3363 = vadd.f32 %v3130, %v3362
        %v3364 = vpop.f32.mrb[0].mxu0
        %3365 = vmatprep.mubr.f32.mxu0 0.0
        %3366 = vmatmul.mubr.f32.gmra.mrb[0].mxu0 %v3079
        %v3367 = vpop.f32.mrb[0].mxu0
        %v3368 = vadd.f32 %v3130, %v3367
        %v3369 = vpop.f32.mrb[0].mxu0
        %3370 = vmatprep.mubr.f32.mxu0 0.0
        %3371 = vmatmul.mubr.f32.gmra.mrb[0].mxu0 %v3080
        %v3372 = vpop.f32.mrb[0].mxu0
        %v3373 = vadd.f32 %v3130, %v3372
        %v3374 = vpop.f32.mrb[0].mxu0
        %3375 = vmatprep.mubr.f32.mxu0 0.0
        %3376 = vmatmul.mubr.f32.gmra.mrb[0].mxu0 %v3081
        %v3377 = vpop.f32.mrb[0].mxu0
        %v3378 = vadd.f32 %v3130, %v3377
        %v3379 = vpop.f32.mrb[0].mxu0
        %3380 = vmatprep.mubr.f32.mxu0 0.0
        %3381 = vmatmul.mubr.f32.gmra.mrb[0].mxu0 %v3082
        %v3382 = vpop.f32.mrb[0].mxu0
        %v3383 = vadd.f32 %v3130, %v3382
        %v3384 = vpop.f32.mrb[0].mxu0
        %3385 = vmatprep.mubr.f32.mxu0 0.0
        %3386 = vmatmul.mubr.f32.gmra.mrb[0].mxu0 %v3083
        %v3387 = vpop.f32.mrb[0].mxu0
        %v3388 = vadd.f32 %v3130, %v3387
        %v3389 = vpop.f32.mrb[0].mxu0
        %3390 = vmatprep.mubr.f32.mxu0 0.0
        %3391 = vmatmul.mubr.f32.gmra.mrb[0].mxu0 %v3084
        %v3392 = vpop.f32.mrb[0].mxu0
        %v3393 = vadd.f32 %v3130, %v3392
        %v3394 = vpop.f32.mrb[0].mxu0
        %3395 = vmatprep.mubr.f32.mxu0 0.0
        %3396 = vmatmul.mubr.f32.gmra.mrb[0].mxu0 %v3085
        %v3397 = vpop.f32.mrb[0].mxu0
        %v3398 = vadd.f32 %v3130, %v3397
        %v3399 = vpop.f32.mrb[0].mxu0
        %3400 = vmatprep.mubr.f32.mxu0 0.0
        %3401 = vmatmul.mubr.f32.gmra.mrb[0].mxu0 %v3086
        %v3402 = vpop.f32.mrb[0].mxu0
        %v3403 = vadd.f32 %v3130, %v3402
        %v3404 = vpop.f32.mrb[0].mxu0
        %3405 = vmatprep.mubr.f32.mxu0 0.0
        %3406 = vmatmul.mubr.f32.gmra.mrb[0].mxu0 %v3087
        %v3407 = vpop.f32.mrb[0].mxu0
        %v3408 = vadd.f32 %v3130, %v3407
        %v3409 = vpop.f32.mrb[0].mxu0
        %3410 = vmatprep.mubr.f32.mxu0 0.0
        %3411 = vmatmul.mubr.f32.gmra.mrb[0].mxu0 %v3088
        %v3412 = vpop.f32.mrb[0].mxu0
        %v3413 = vadd.f32 %v3130, %v3412
        %v3414 = vpop.f32.mrb[0].mxu0
        %3415 = vmatprep.mubr.f32.mxu0 0.0
        %3416 = vmatmul.mubr.f32.gmra.mrb[0].mxu0 %v3089
        %v3417 = vpop.f32.mrb[0].mxu0
        %v3418 = vadd.f32 %v3130, %v3417
        %v3419 = vpop.f32.mrb[0].mxu0
        %3420 = vmatprep.mubr.f32.mxu0 0.0
        %3421 = vmatmul.mubr.f32.gmra.mrb[0].mxu0 %v3090
        %v3422 = vpop.f32.mrb[0].mxu0
        %v3423 = vadd.f32 %v3130, %v3422
        %v3424 = vpop.f32.mrb[0].mxu0
        %3425 = vmatprep.mubr.f32.mxu0 0.0
        %3426 = vmatmul.mubr.f32.gmra.mrb[0].mxu0 %v3091
        %v3427 = vpop.f32.mrb[0].mxu0
        %v3428 = vadd.f32 %v3130, %v3427
        %v3429 = vpop.f32.mrb[0].mxu0
        %3430 = vmatprep.mubr.f32.mxu0 0.0
        %3431 = vmatmul.mubr.f32.gmra.mrb[0].mxu0 %v3092
        %v3432 = vpop.f32.mrb[0].mxu0
        %v3433 = vadd.f32 %v3130, %v3432
        %v3434 = vpop.f32.mrb[0].mxu0
        %3435 = vmatprep.mubr.f32.mxu0 0.0
        %3436 = vmatmul.mubr.f32.gmra.mrb[0].mxu0 %v3093
        %v3437 = vpop.f32.mrb[0].mxu0
        %v3438 = vadd.f32 %v3130, %v3437
        %v3439 = vpop.f32.mrb[0].mxu0
        %3440 = vmatprep.mubr.f32.mxu0 0.0
        %3441 = vmatmul.mubr.f32.gmra.mrb[0].mxu0 %v3094
        %v3442 = vpop.f32.mrb[0].mxu0
        %v3443 = vadd.f32 %v3130, %v3442
        %v3444 = vpop.f32.mrb[0].mxu0
        %3445 = vmatprep.mubr.f32.mxu0 0.0
        %3446 = vmatmul.mubr.f32.gmra.mrb[0].mxu0 %v3095
        %v3447 = vpop.f32.mrb[0].mxu0
        %v3448 = vadd.f32 %v3130, %v3447
        %v3449 = vpop.f32.mrb[0].mxu0
        %3450 = vmatprep.mubr.f32.mxu0 0.0
        %3451 = vmatmul.mubr.f32.gmra.mrb[0].mxu0 %v3096
        %v3452 = vpop.f32.mrb[0].mxu0
        %v3453 = vadd.f32 %v3130, %v3452
        %v3454 = vpop.f32.mrb[0].mxu0
        %3455 = vmatprep.mubr.f32.mxu0 0.0
        %3456 = vmatmul.mubr.f32.gmra.mrb[0].mxu0 %v3097
        %v3457 = vpop.f32.mrb[0].mxu0
        %v3458 = vadd.f32 %v3130, %v3457
        %v3459 = vpop.f32.mrb[0].mxu0
        %3460 = vmatprep.mubr.f32.mxu0 0.0
        %3461 = vmatmul.mubr.f32.gmra.mrb[0].mxu0 %v3098
        %v3462 = vpop.f32.mrb[0].mxu0
        %v3463 = vadd.f32 %v3130, %v3462
        %v3464 = vpop.f32.mrb[0].mxu0
        %3465 = vmatprep.mubr.f32.mxu0 0.0
        %3466 = vmatmul.mubr.f32.gmra.mrb[0].mxu0 %v3099
        %v3467 = vpop.f32.mrb[0].mxu0
        %v3468 = vadd.f32 %v3130, %v3467
        %v3469 = vpop.f32.mrb[0].mxu0
        %3470 = vmatprep.mubr.f32.mxu0 0.0
        %3471 = vmatmul.mubr.f32.gmra.mrb[0].mxu0 %v3100
        %v3472 = vpop.f32.mrb[0].mxu0
        %v3473 = vadd.f32 %v3130, %v3472
        %v3474 = vpop.f32.mrb[0].mxu0
        %3475 = vmatprep.mubr.f32.mxu0 0.0
        %3476 = vmatmul.mubr.f32.gmra.mrb[0].mxu0 %v3101
        %v3477 = vpop.f32.mrb[0].mxu0
        %v3478 = vadd.f32 %v3130, %v3477
        %v3479 = vpop.f32.mrb[0].mxu0
        %3480 = vmatprep.mubr.f32.mxu0 0.0
        %3481 = vmatmul.mubr.f32.gmra.mrb[0].mxu0 %v3102
        %v3482 = vpop.f32.mrb[0].mxu0
        %v3483 = vadd.f32 %v3130, %v3482
        %v3484 = vpop.f32.mrb[0].mxu0
        %3485 = vmatprep.mubr.f32.mxu0 0.0
        %3486 = vmatmul.mubr.f32.gmra.mrb[0].mxu0 %v3103
        %v3487 = vpop.f32.mrb[0].mxu0
        %v3488 = vadd.f32 %v3130, %v3487
        %v3489 = vpop.f32.mrb[0].mxu0
        %3490 = vmatprep.mubr.f32.mxu0 0.0
        %3491 = vmatmul.mubr.f32.gmra.mrb[0].mxu0 %v3104
        %v3492 = vpop.f32.mrb[0].mxu0
        %v3493 = vadd.f32 %v3130, %v3492
        %v3494 = vpop.f32.mrb[0].mxu0
        %3495 = vmatprep.mubr.f32.mxu0 0.0
        %3496 = vmatmul.mubr.f32.gmra.mrb[0].mxu0 %v3105
        %v3497 = vpop.f32.mrb[0].mxu0
        %v3498 = vadd.f32 %v3130, %v3497
        %v3499 = vpop.f32.mrb[0].mxu0
        %3500 = vmatprep.mubr.f32.mxu0 0.0
        %3501 = vmatmul.mubr.f32.gmra.mrb[0].mxu0 %v3106
        %v3502 = vpop.f32.mrb[0].mxu0
        %v3503 = vadd.f32 %v3130, %v3502
        %v3504 = vpop.f32.mrb[0].mxu0
        %3505 = vmatprep.mubr.f32.mxu0 0.0
        %3506 = vmatmul.mubr.f32.gmra.mrb[0].mxu0 %v3107
        %v3507 = vpop.f32.mrb[0].mxu0
        %v3508 = vadd.f32 %v3130, %v3507
        %v3509 = vpop.f32.mrb[0].mxu0
        %3510 = vmatprep.mubr.f32.mxu0 0.0
        %3511 = vmatmul.mubr.f32.gmra.mrb[0].mxu0 %v3108
        %v3512 = vpop.f32.mrb[0].mxu0
        %v3513 = vadd.f32 %v3130, %v3512
        %v3514 = vpop.f32.mrb[0].mxu0
        %3515 = vdwg.mxu0
        %v3516 = vmax.f32 %v3198, 0.0
        %v3517 = vmax.f32 %v3203, 0.0
        %v3518 = vmax.f32 %v3208, 0.0
        %v3519 = vmax.f32 %v3213, 0.0
        %v3520 = vmax.f32 %v3218, 0.0
        %v3521 = vmax.f32 %v3223, 0.0
        %v3522 = vmax.f32 %v3228, 0.0
        %v3523 = vmax.f32 %v3233, 0.0
        %v3524 = vmax.f32 %v3238, 0.0
        %v3525 = vmax.f32 %v3243, 0.0
        %v3526 = vmax.f32 %v3248, 0.0
        %v3527 = vmax.f32 %v3253, 0.0
        %v3528 = vmax.f32 %v3258, 0.0
        %v3529 = vmax.f32 %v3263, 0.0
        %v3530 = vmax.f32 %v3268, 0.0
        %v3531 = vmax.f32 %v3273, 0.0
        %v3532 = vmax.f32 %v3278, 0.0
        %v3533 = vmax.f32 %v3283, 0.0
        %v3534 = vmax.f32 %v3288, 0.0
        %v3535 = vmax.f32 %v3293, 0.0
        %v3536 = vmax.f32 %v3298, 0.0
        %v3537 = vmax.f32 %v3303, 0.0
        %v3538 = vmax.f32 %v3308, 0.0
        %v3539 = vmax.f32 %v3313, 0.0
        %v3540 = vmax.f32 %v3318, 0.0
        %v3541 = vmax.f32 %v3323, 0.0
        %v3542 = vmax.f32 %v3328, 0.0
        %v3543 = vmax.f32 %v3333, 0.0
        %v3544 = vmax.f32 %v3338, 0.0
        %v3545 = vmax.f32 %v3343, 0.0
        %v3546 = vmax.f32 %v3348, 0.0
        %v3547 = vmax.f32 %v3353, 0.0
        %v3548 = vmax.f32 %v3358, 0.0
        %v3549 = vmax.f32 %v3363, 0.0
        %v3550 = vmax.f32 %v3368, 0.0
        %v3551 = vmax.f32 %v3373, 0.0
        %v3552 = vmax.f32 %v3378, 0.0
        %v3553 = vmax.f32 %v3383, 0.0
        %v3554 = vmax.f32 %v3388, 0.0
        %v3555 = vmax.f32 %v3393, 0.0
        %v3556 = vmax.f32 %v3398, 0.0
        %v3557 = vmax.f32 %v3403, 0.0
        %v3558 = vmax.f32 %v3408, 0.0
        %v3559 = vmax.f32 %v3413, 0.0
        %v3560 = vmax.f32 %v3418, 0.0
        %v3561 = vmax.f32 %v3423, 0.0
        %v3562 = vmax.f32 %v3428, 0.0
        %v3563 = vmax.f32 %v3433, 0.0
        %v3564 = vmax.f32 %v3438, 0.0
        %v3565 = vmax.f32 %v3443, 0.0
        %v3566 = vmax.f32 %v3448, 0.0
        %v3567 = vmax.f32 %v3453, 0.0
        %v3568 = vmax.f32 %v3458, 0.0
        %v3569 = vmax.f32 %v3463, 0.0
        %v3570 = vmax.f32 %v3468, 0.0
        %v3571 = vmax.f32 %v3473, 0.0
        %v3572 = vmax.f32 %v3478, 0.0
        %v3573 = vmax.f32 %v3483, 0.0
        %v3574 = vmax.f32 %v3488, 0.0
        %v3575 = vmax.f32 %v3493, 0.0
        %v3576 = vmax.f32 %v3498, 0.0
        %v3577 = vmax.f32 %v3503, 0.0
        %v3578 = vmax.f32 %v3508, 0.0
        %v3579 = vmax.f32 %v3513, 0.0
        %s3580 = scalar_lea.vmem [#allocation5], 896
        %v3581 = vld [vmem:[%s3580] sm:$0xff]
        %v3582 = vld [vmem:[%s3580 + $0x8] sm:$0xff]
        %v3583 = vld [vmem:[%s3580 + $0x10] sm:$0xff]
        %v3584 = vld [vmem:[%s3580 + $0x18] sm:$0xff]
        %v3585 = vld [vmem:[%s3580 + $0x20] sm:$0xff]
        %v3586 = vld [vmem:[%s3580 + $0x28] sm:$0xff]
        %v3587 = vld [vmem:[%s3580 + $0x30] sm:$0xff]
        %v3588 = vld [vmem:[%s3580 + $0x38] sm:$0xff]
        %v3589 = vld [vmem:[%s3580 + $0x40] sm:$0xff]
        %v3590 = vld [vmem:[%s3580 + $0x48] sm:$0xff]
        %v3591 = vld [vmem:[%s3580 + $0x50] sm:$0xff]
        %v3592 = vld [vmem:[%s3580 + $0x58] sm:$0xff]
        %v3593 = vld [vmem:[%s3580 + $0x60] sm:$0xff]
        %v3594 = vld [vmem:[%s3580 + $0x68] sm:$0xff]
        %v3595 = vld [vmem:[%s3580 + $0x70] sm:$0xff]
        %v3596 = vld [vmem:[%s3580 + $0x78] sm:$0xff]
        %v3597 = vld [vmem:[#allocation7 + $0x7] sm:$0x1]
        %v3598 = vlaneseq
        %v3599 = vshrl.u32 %v3598, 7
        %v3600 = vsub.s32 0, %v3599
        %v3601 = vrot.slane %v3597, %v3600
        %3602 = vmatprep.subr.mxu0 0.0
        %3603 = vmatpush1.msra.mxu0 %v3581
        %3604 = vmatprep.subr.mxu0 0.0
        %3605 = vmatpush1.msra.mxu0 %v3582
        %3606 = vmatprep.subr.mxu0 0.0
        %3607 = vmatpush1.msra.mxu0 %v3583
        %3608 = vmatprep.subr.mxu0 0.0
        %3609 = vmatpush1.msra.mxu0 %v3584
        %3610 = vmatprep.subr.mxu0 0.0
        %3611 = vmatpush1.msra.mxu0 %v3585
        %3612 = vmatprep.subr.mxu0 0.0
        %3613 = vmatpush1.msra.mxu0 %v3586
        %3614 = vmatprep.subr.mxu0 0.0
        %3615 = vmatpush1.msra.mxu0 %v3587
        %3616 = vmatprep.subr.mxu0 0.0
        %3617 = vmatpush1.msra.mxu0 %v3588
        %3618 = vmatprep.subr.mxu0 0.0
        %3619 = vmatpush1.msra.mxu0 %v3589
        %3620 = vmatprep.subr.mxu0 0.0
        %3621 = vmatpush1.msra.mxu0 %v3590
        %3622 = vmatprep.subr.mxu0 0.0
        %3623 = vmatpush1.msra.mxu0 %v3591
        %3624 = vmatprep.subr.mxu0 0.0
        %3625 = vmatpush1.msra.mxu0 %v3592
        %3626 = vmatprep.subr.mxu0 0.0
        %3627 = vmatpush1.msra.mxu0 %v3593
        %3628 = vmatprep.subr.mxu0 0.0
        %3629 = vmatpush1.msra.mxu0 %v3594
        %3630 = vmatprep.subr.mxu0 0.0
        %3631 = vmatpush1.msra.mxu0 %v3595
        %3632 = vmatprep.subr.mxu0 0.0
        %3633 = vmatpush1.msra.mxu0 %v3596
        %3634 = vmatprep.subr.mxu0 0.0
        %3635 = vmatpush1.msra.mxu0 0.0
        %3636 = vmatprep.subr.mxu0 0.0
        %3637 = vmatpush1.msra.mxu0 0.0
        %3638 = vmatprep.subr.mxu0 0.0
        %3639 = vmatpush1.msra.mxu0 0.0
        %3640 = vmatprep.subr.mxu0 0.0
        %3641 = vmatpush1.msra.mxu0 0.0
        %3642 = vmatprep.subr.mxu0 0.0
        %3643 = vmatpush1.msra.mxu0 0.0
        %3644 = vmatprep.subr.mxu0 0.0
        %3645 = vmatpush1.msra.mxu0 0.0
        %3646 = vmatprep.subr.mxu0 0.0
        %3647 = vmatpush1.msra.mxu0 0.0
        %3648 = vmatprep.subr.mxu0 0.0
        %3649 = vmatpush1.msra.mxu0 0.0
        %3650 = vmatprep.subr.mxu0 0.0
        %3651 = vmatpush1.msra.mxu0 0.0
        %3652 = vmatprep.subr.mxu0 0.0
        %3653 = vmatpush1.msra.mxu0 0.0
        %3654 = vmatprep.subr.mxu0 0.0
        %3655 = vmatpush1.msra.mxu0 0.0
        %3656 = vmatprep.subr.mxu0 0.0
        %3657 = vmatpush1.msra.mxu0 0.0
        %3658 = vmatprep.subr.mxu0 0.0
        %3659 = vmatpush1.msra.mxu0 0.0
        %3660 = vmatprep.subr.mxu0 0.0
        %3661 = vmatpush1.msra.mxu0 0.0
        %3662 = vmatprep.subr.mxu0 0.0
        %3663 = vmatpush1.msra.mxu0 0.0
        %3664 = vmatprep.subr.mxu0 0.0
        %3665 = vmatpush1.msra.mxu0 0.0
        %3666 = vmatprep.mubr.f32.mxu0 0.0
        %3667 = vmatmul.mubr.f32.gmra.mrb[0].mxu0 %v3516
        %v3668 = vpop.f32.mrb[0].mxu0
        %v3669 = vadd.f32 %v3601, %v3668
        %v3670 = vpop.f32.mrb[0].mxu0
        %3671 = vmatprep.mubr.f32.mxu0 0.0
        %3672 = vmatmul.mubr.f32.gmra.mrb[0].mxu0 %v3517
        %v3673 = vpop.f32.mrb[0].mxu0
        %v3674 = vadd.f32 %v3601, %v3673
        %v3675 = vpop.f32.mrb[0].mxu0
        %3676 = vmatprep.mubr.f32.mxu0 0.0
        %3677 = vmatmul.mubr.f32.gmra.mrb[0].mxu0 %v3518
        %v3678 = vpop.f32.mrb[0].mxu0
        %v3679 = vadd.f32 %v3601, %v3678
        %v3680 = vpop.f32.mrb[0].mxu0
        %3681 = vmatprep.mubr.f32.mxu0 0.0
        %3682 = vmatmul.mubr.f32.gmra.mrb[0].mxu0 %v3519
        %v3683 = vpop.f32.mrb[0].mxu0
        %v3684 = vadd.f32 %v3601, %v3683
        %v3685 = vpop.f32.mrb[0].mxu0
        %3686 = vmatprep.mubr.f32.mxu0 0.0
        %3687 = vmatmul.mubr.f32.gmra.mrb[0].mxu0 %v3520
        %v3688 = vpop.f32.mrb[0].mxu0
        %v3689 = vadd.f32 %v3601, %v3688
        %v3690 = vpop.f32.mrb[0].mxu0
        %3691 = vmatprep.mubr.f32.mxu0 0.0
        %3692 = vmatmul.mubr.f32.gmra.mrb[0].mxu0 %v3521
        %v3693 = vpop.f32.mrb[0].mxu0
        %v3694 = vadd.f32 %v3601, %v3693
        %v3695 = vpop.f32.mrb[0].mxu0
        %3696 = vmatprep.mubr.f32.mxu0 0.0
        %3697 = vmatmul.mubr.f32.gmra.mrb[0].mxu0 %v3522
        %v3698 = vpop.f32.mrb[0].mxu0
        %v3699 = vadd.f32 %v3601, %v3698
        %v3700 = vpop.f32.mrb[0].mxu0
        %3701 = vmatprep.mubr.f32.mxu0 0.0
        %3702 = vmatmul.mubr.f32.gmra.mrb[0].mxu0 %v3523
        %v3703 = vpop.f32.mrb[0].mxu0
        %v3704 = vadd.f32 %v3601, %v3703
        %v3705 = vpop.f32.mrb[0].mxu0
        %3706 = vmatprep.mubr.f32.mxu0 0.0
        %3707 = vmatmul.mubr.f32.gmra.mrb[0].mxu0 %v3524
        %v3708 = vpop.f32.mrb[0].mxu0
        %v3709 = vadd.f32 %v3601, %v3708
        %v3710 = vpop.f32.mrb[0].mxu0
        %3711 = vmatprep.mubr.f32.mxu0 0.0
        %3712 = vmatmul.mubr.f32.gmra.mrb[0].mxu0 %v3525
        %v3713 = vpop.f32.mrb[0].mxu0
        %v3714 = vadd.f32 %v3601, %v3713
        %v3715 = vpop.f32.mrb[0].mxu0
        %3716 = vmatprep.mubr.f32.mxu0 0.0
        %3717 = vmatmul.mubr.f32.gmra.mrb[0].mxu0 %v3526
        %v3718 = vpop.f32.mrb[0].mxu0
        %v3719 = vadd.f32 %v3601, %v3718
        %v3720 = vpop.f32.mrb[0].mxu0
        %3721 = vmatprep.mubr.f32.mxu0 0.0
        %3722 = vmatmul.mubr.f32.gmra.mrb[0].mxu0 %v3527
        %v3723 = vpop.f32.mrb[0].mxu0
        %v3724 = vadd.f32 %v3601, %v3723
        %v3725 = vpop.f32.mrb[0].mxu0
        %3726 = vmatprep.mubr.f32.mxu0 0.0
        %3727 = vmatmul.mubr.f32.gmra.mrb[0].mxu0 %v3528
        %v3728 = vpop.f32.mrb[0].mxu0
        %v3729 = vadd.f32 %v3601, %v3728
        %v3730 = vpop.f32.mrb[0].mxu0
        %3731 = vmatprep.mubr.f32.mxu0 0.0
        %3732 = vmatmul.mubr.f32.gmra.mrb[0].mxu0 %v3529
        %v3733 = vpop.f32.mrb[0].mxu0
        %v3734 = vadd.f32 %v3601, %v3733
        %v3735 = vpop.f32.mrb[0].mxu0
        %3736 = vmatprep.mubr.f32.mxu0 0.0
        %3737 = vmatmul.mubr.f32.gmra.mrb[0].mxu0 %v3530
        %v3738 = vpop.f32.mrb[0].mxu0
        %v3739 = vadd.f32 %v3601, %v3738
        %v3740 = vpop.f32.mrb[0].mxu0
        %3741 = vmatprep.mubr.f32.mxu0 0.0
        %3742 = vmatmul.mubr.f32.gmra.mrb[0].mxu0 %v3531
        %v3743 = vpop.f32.mrb[0].mxu0
        %v3744 = vadd.f32 %v3601, %v3743
        %v3745 = vpop.f32.mrb[0].mxu0
        %3746 = vmatprep.mubr.f32.mxu0 0.0
        %3747 = vmatmul.mubr.f32.gmra.mrb[0].mxu0 %v3532
        %v3748 = vpop.f32.mrb[0].mxu0
        %v3749 = vadd.f32 %v3601, %v3748
        %v3750 = vpop.f32.mrb[0].mxu0
        %3751 = vmatprep.mubr.f32.mxu0 0.0
        %3752 = vmatmul.mubr.f32.gmra.mrb[0].mxu0 %v3533
        %v3753 = vpop.f32.mrb[0].mxu0
        %v3754 = vadd.f32 %v3601, %v3753
        %v3755 = vpop.f32.mrb[0].mxu0
        %3756 = vmatprep.mubr.f32.mxu0 0.0
        %3757 = vmatmul.mubr.f32.gmra.mrb[0].mxu0 %v3534
        %v3758 = vpop.f32.mrb[0].mxu0
        %v3759 = vadd.f32 %v3601, %v3758
        %v3760 = vpop.f32.mrb[0].mxu0
        %3761 = vmatprep.mubr.f32.mxu0 0.0
        %3762 = vmatmul.mubr.f32.gmra.mrb[0].mxu0 %v3535
        %v3763 = vpop.f32.mrb[0].mxu0
        %v3764 = vadd.f32 %v3601, %v3763
        %v3765 = vpop.f32.mrb[0].mxu0
        %3766 = vmatprep.mubr.f32.mxu0 0.0
        %3767 = vmatmul.mubr.f32.gmra.mrb[0].mxu0 %v3536
        %v3768 = vpop.f32.mrb[0].mxu0
        %v3769 = vadd.f32 %v3601, %v3768
        %v3770 = vpop.f32.mrb[0].mxu0
        %3771 = vmatprep.mubr.f32.mxu0 0.0
        %3772 = vmatmul.mubr.f32.gmra.mrb[0].mxu0 %v3537
        %v3773 = vpop.f32.mrb[0].mxu0
        %v3774 = vadd.f32 %v3601, %v3773
        %v3775 = vpop.f32.mrb[0].mxu0
        %3776 = vmatprep.mubr.f32.mxu0 0.0
        %3777 = vmatmul.mubr.f32.gmra.mrb[0].mxu0 %v3538
        %v3778 = vpop.f32.mrb[0].mxu0
        %v3779 = vadd.f32 %v3601, %v3778
        %v3780 = vpop.f32.mrb[0].mxu0
        %3781 = vmatprep.mubr.f32.mxu0 0.0
        %3782 = vmatmul.mubr.f32.gmra.mrb[0].mxu0 %v3539
        %v3783 = vpop.f32.mrb[0].mxu0
        %v3784 = vadd.f32 %v3601, %v3783
        %v3785 = vpop.f32.mrb[0].mxu0
        %3786 = vmatprep.mubr.f32.mxu0 0.0
        %3787 = vmatmul.mubr.f32.gmra.mrb[0].mxu0 %v3540
        %v3788 = vpop.f32.mrb[0].mxu0
        %v3789 = vadd.f32 %v3601, %v3788
        %v3790 = vpop.f32.mrb[0].mxu0
        %3791 = vmatprep.mubr.f32.mxu0 0.0
        %3792 = vmatmul.mubr.f32.gmra.mrb[0].mxu0 %v3541
        %v3793 = vpop.f32.mrb[0].mxu0
        %v3794 = vadd.f32 %v3601, %v3793
        %v3795 = vpop.f32.mrb[0].mxu0
        %3796 = vmatprep.mubr.f32.mxu0 0.0
        %3797 = vmatmul.mubr.f32.gmra.mrb[0].mxu0 %v3542
        %v3798 = vpop.f32.mrb[0].mxu0
        %v3799 = vadd.f32 %v3601, %v3798
        %v3800 = vpop.f32.mrb[0].mxu0
        %3801 = vmatprep.mubr.f32.mxu0 0.0
        %3802 = vmatmul.mubr.f32.gmra.mrb[0].mxu0 %v3543
        %v3803 = vpop.f32.mrb[0].mxu0
        %v3804 = vadd.f32 %v3601, %v3803
        %v3805 = vpop.f32.mrb[0].mxu0
        %3806 = vmatprep.mubr.f32.mxu0 0.0
        %3807 = vmatmul.mubr.f32.gmra.mrb[0].mxu0 %v3544
        %v3808 = vpop.f32.mrb[0].mxu0
        %v3809 = vadd.f32 %v3601, %v3808
        %v3810 = vpop.f32.mrb[0].mxu0
        %3811 = vmatprep.mubr.f32.mxu0 0.0
        %3812 = vmatmul.mubr.f32.gmra.mrb[0].mxu0 %v3545
        %v3813 = vpop.f32.mrb[0].mxu0
        %v3814 = vadd.f32 %v3601, %v3813
        %v3815 = vpop.f32.mrb[0].mxu0
        %3816 = vmatprep.mubr.f32.mxu0 0.0
        %3817 = vmatmul.mubr.f32.gmra.mrb[0].mxu0 %v3546
        %v3818 = vpop.f32.mrb[0].mxu0
        %v3819 = vadd.f32 %v3601, %v3818
        %v3820 = vpop.f32.mrb[0].mxu0
        %3821 = vmatprep.mubr.f32.mxu0 0.0
        %3822 = vmatmul.mubr.f32.gmra.mrb[0].mxu0 %v3547
        %v3823 = vpop.f32.mrb[0].mxu0
        %v3824 = vadd.f32 %v3601, %v3823
        %v3825 = vpop.f32.mrb[0].mxu0
        %3826 = vmatprep.mubr.f32.mxu0 0.0
        %3827 = vmatmul.mubr.f32.gmra.mrb[0].mxu0 %v3548
        %v3828 = vpop.f32.mrb[0].mxu0
        %v3829 = vadd.f32 %v3601, %v3828
        %v3830 = vpop.f32.mrb[0].mxu0
        %3831 = vmatprep.mubr.f32.mxu0 0.0
        %3832 = vmatmul.mubr.f32.gmra.mrb[0].mxu0 %v3549
        %v3833 = vpop.f32.mrb[0].mxu0
        %v3834 = vadd.f32 %v3601, %v3833
        %v3835 = vpop.f32.mrb[0].mxu0
        %3836 = vmatprep.mubr.f32.mxu0 0.0
        %3837 = vmatmul.mubr.f32.gmra.mrb[0].mxu0 %v3550
        %v3838 = vpop.f32.mrb[0].mxu0
        %v3839 = vadd.f32 %v3601, %v3838
        %v3840 = vpop.f32.mrb[0].mxu0
        %3841 = vmatprep.mubr.f32.mxu0 0.0
        %3842 = vmatmul.mubr.f32.gmra.mrb[0].mxu0 %v3551
        %v3843 = vpop.f32.mrb[0].mxu0
        %v3844 = vadd.f32 %v3601, %v3843
        %v3845 = vpop.f32.mrb[0].mxu0
        %3846 = vmatprep.mubr.f32.mxu0 0.0
        %3847 = vmatmul.mubr.f32.gmra.mrb[0].mxu0 %v3552
        %v3848 = vpop.f32.mrb[0].mxu0
        %v3849 = vadd.f32 %v3601, %v3848
        %v3850 = vpop.f32.mrb[0].mxu0
        %3851 = vmatprep.mubr.f32.mxu0 0.0
        %3852 = vmatmul.mubr.f32.gmra.mrb[0].mxu0 %v3553
        %v3853 = vpop.f32.mrb[0].mxu0
        %v3854 = vadd.f32 %v3601, %v3853
        %v3855 = vpop.f32.mrb[0].mxu0
        %3856 = vmatprep.mubr.f32.mxu0 0.0
        %3857 = vmatmul.mubr.f32.gmra.mrb[0].mxu0 %v3554
        %v3858 = vpop.f32.mrb[0].mxu0
        %v3859 = vadd.f32 %v3601, %v3858
        %v3860 = vpop.f32.mrb[0].mxu0
        %3861 = vmatprep.mubr.f32.mxu0 0.0
        %3862 = vmatmul.mubr.f32.gmra.mrb[0].mxu0 %v3555
        %v3863 = vpop.f32.mrb[0].mxu0
        %v3864 = vadd.f32 %v3601, %v3863
        %v3865 = vpop.f32.mrb[0].mxu0
        %3866 = vmatprep.mubr.f32.mxu0 0.0
        %3867 = vmatmul.mubr.f32.gmra.mrb[0].mxu0 %v3556
        %v3868 = vpop.f32.mrb[0].mxu0
        %v3869 = vadd.f32 %v3601, %v3868
        %v3870 = vpop.f32.mrb[0].mxu0
        %3871 = vmatprep.mubr.f32.mxu0 0.0
        %3872 = vmatmul.mubr.f32.gmra.mrb[0].mxu0 %v3557
        %v3873 = vpop.f32.mrb[0].mxu0
        %v3874 = vadd.f32 %v3601, %v3873
        %v3875 = vpop.f32.mrb[0].mxu0
        %3876 = vmatprep.mubr.f32.mxu0 0.0
        %3877 = vmatmul.mubr.f32.gmra.mrb[0].mxu0 %v3558
        %v3878 = vpop.f32.mrb[0].mxu0
        %v3879 = vadd.f32 %v3601, %v3878
        %v3880 = vpop.f32.mrb[0].mxu0
        %3881 = vmatprep.mubr.f32.mxu0 0.0
        %3882 = vmatmul.mubr.f32.gmra.mrb[0].mxu0 %v3559
        %v3883 = vpop.f32.mrb[0].mxu0
        %v3884 = vadd.f32 %v3601, %v3883
        %v3885 = vpop.f32.mrb[0].mxu0
        %3886 = vmatprep.mubr.f32.mxu0 0.0
        %3887 = vmatmul.mubr.f32.gmra.mrb[0].mxu0 %v3560
        %v3888 = vpop.f32.mrb[0].mxu0
        %v3889 = vadd.f32 %v3601, %v3888
        %v3890 = vpop.f32.mrb[0].mxu0
        %3891 = vmatprep.mubr.f32.mxu0 0.0
        %3892 = vmatmul.mubr.f32.gmra.mrb[0].mxu0 %v3561
        %v3893 = vpop.f32.mrb[0].mxu0
        %v3894 = vadd.f32 %v3601, %v3893
        %v3895 = vpop.f32.mrb[0].mxu0
        %3896 = vmatprep.mubr.f32.mxu0 0.0
        %3897 = vmatmul.mubr.f32.gmra.mrb[0].mxu0 %v3562
        %v3898 = vpop.f32.mrb[0].mxu0
        %v3899 = vadd.f32 %v3601, %v3898
        %v3900 = vpop.f32.mrb[0].mxu0
        %3901 = vmatprep.mubr.f32.mxu0 0.0
        %3902 = vmatmul.mubr.f32.gmra.mrb[0].mxu0 %v3563
        %v3903 = vpop.f32.mrb[0].mxu0
        %v3904 = vadd.f32 %v3601, %v3903
        %v3905 = vpop.f32.mrb[0].mxu0
        %3906 = vmatprep.mubr.f32.mxu0 0.0
        %3907 = vmatmul.mubr.f32.gmra.mrb[0].mxu0 %v3564
        %v3908 = vpop.f32.mrb[0].mxu0
        %v3909 = vadd.f32 %v3601, %v3908
        %v3910 = vpop.f32.mrb[0].mxu0
        %3911 = vmatprep.mubr.f32.mxu0 0.0
        %3912 = vmatmul.mubr.f32.gmra.mrb[0].mxu0 %v3565
        %v3913 = vpop.f32.mrb[0].mxu0
        %v3914 = vadd.f32 %v3601, %v3913
        %v3915 = vpop.f32.mrb[0].mxu0
        %3916 = vmatprep.mubr.f32.mxu0 0.0
        %3917 = vmatmul.mubr.f32.gmra.mrb[0].mxu0 %v3566
        %v3918 = vpop.f32.mrb[0].mxu0
        %v3919 = vadd.f32 %v3601, %v3918
        %v3920 = vpop.f32.mrb[0].mxu0
        %3921 = vmatprep.mubr.f32.mxu0 0.0
        %3922 = vmatmul.mubr.f32.gmra.mrb[0].mxu0 %v3567
        %v3923 = vpop.f32.mrb[0].mxu0
        %v3924 = vadd.f32 %v3601, %v3923
        %v3925 = vpop.f32.mrb[0].mxu0
        %3926 = vmatprep.mubr.f32.mxu0 0.0
        %3927 = vmatmul.mubr.f32.gmra.mrb[0].mxu0 %v3568
        %v3928 = vpop.f32.mrb[0].mxu0
        %v3929 = vadd.f32 %v3601, %v3928
        %v3930 = vpop.f32.mrb[0].mxu0
        %3931 = vmatprep.mubr.f32.mxu0 0.0
        %3932 = vmatmul.mubr.f32.gmra.mrb[0].mxu0 %v3569
        %v3933 = vpop.f32.mrb[0].mxu0
        %v3934 = vadd.f32 %v3601, %v3933
        %v3935 = vpop.f32.mrb[0].mxu0
        %3936 = vmatprep.mubr.f32.mxu0 0.0
        %3937 = vmatmul.mubr.f32.gmra.mrb[0].mxu0 %v3570
        %v3938 = vpop.f32.mrb[0].mxu0
        %v3939 = vadd.f32 %v3601, %v3938
        %v3940 = vpop.f32.mrb[0].mxu0
        %3941 = vmatprep.mubr.f32.mxu0 0.0
        %3942 = vmatmul.mubr.f32.gmra.mrb[0].mxu0 %v3571
        %v3943 = vpop.f32.mrb[0].mxu0
        %v3944 = vadd.f32 %v3601, %v3943
        %v3945 = vpop.f32.mrb[0].mxu0
        %3946 = vmatprep.mubr.f32.mxu0 0.0
        %3947 = vmatmul.mubr.f32.gmra.mrb[0].mxu0 %v3572
        %v3948 = vpop.f32.mrb[0].mxu0
        %v3949 = vadd.f32 %v3601, %v3948
        %v3950 = vpop.f32.mrb[0].mxu0
        %3951 = vmatprep.mubr.f32.mxu0 0.0
        %3952 = vmatmul.mubr.f32.gmra.mrb[0].mxu0 %v3573
        %v3953 = vpop.f32.mrb[0].mxu0
        %v3954 = vadd.f32 %v3601, %v3953
        %v3955 = vpop.f32.mrb[0].mxu0
        %3956 = vmatprep.mubr.f32.mxu0 0.0
        %3957 = vmatmul.mubr.f32.gmra.mrb[0].mxu0 %v3574
        %v3958 = vpop.f32.mrb[0].mxu0
        %v3959 = vadd.f32 %v3601, %v3958
        %v3960 = vpop.f32.mrb[0].mxu0
        %3961 = vmatprep.mubr.f32.mxu0 0.0
        %3962 = vmatmul.mubr.f32.gmra.mrb[0].mxu0 %v3575
        %v3963 = vpop.f32.mrb[0].mxu0
        %v3964 = vadd.f32 %v3601, %v3963
        %v3965 = vpop.f32.mrb[0].mxu0
        %3966 = vmatprep.mubr.f32.mxu0 0.0
        %3967 = vmatmul.mubr.f32.gmra.mrb[0].mxu0 %v3576
        %v3968 = vpop.f32.mrb[0].mxu0
        %v3969 = vadd.f32 %v3601, %v3968
        %v3970 = vpop.f32.mrb[0].mxu0
        %3971 = vmatprep.mubr.f32.mxu0 0.0
        %3972 = vmatmul.mubr.f32.gmra.mrb[0].mxu0 %v3577
        %v3973 = vpop.f32.mrb[0].mxu0
        %v3974 = vadd.f32 %v3601, %v3973
        %v3975 = vpop.f32.mrb[0].mxu0
        %3976 = vmatprep.mubr.f32.mxu0 0.0
        %3977 = vmatmul.mubr.f32.gmra.mrb[0].mxu0 %v3578
        %v3978 = vpop.f32.mrb[0].mxu0
        %v3979 = vadd.f32 %v3601, %v3978
        %v3980 = vpop.f32.mrb[0].mxu0
        %3981 = vmatprep.mubr.f32.mxu0 0.0
        %3982 = vmatmul.mubr.f32.gmra.mrb[0].mxu0 %v3579
        %v3983 = vpop.f32.mrb[0].mxu0
        %v3984 = vadd.f32 %v3601, %v3983
        %v3985 = vpop.f32.mrb[0].mxu0
        %3986 = vdwg.mxu0
        %v3987 = vmax.f32 %v3669, 0.0
        %v3988 = vmax.f32 %v3674, 0.0
        %v3989 = vmax.f32 %v3679, 0.0
        %v3990 = vmax.f32 %v3684, 0.0
        %v3991 = vmax.f32 %v3689, 0.0
        %v3992 = vmax.f32 %v3694, 0.0
        %v3993 = vmax.f32 %v3699, 0.0
        %v3994 = vmax.f32 %v3704, 0.0
        %v3995 = vmax.f32 %v3709, 0.0
        %v3996 = vmax.f32 %v3714, 0.0
        %v3997 = vmax.f32 %v3719, 0.0
        %v3998 = vmax.f32 %v3724, 0.0
        %v3999 = vmax.f32 %v3729, 0.0
        %v4000 = vmax.f32 %v3734, 0.0
        %v4001 = vmax.f32 %v3739, 0.0
        %v4002 = vmax.f32 %v3744, 0.0
        %v4003 = vmax.f32 %v3749, 0.0
        %v4004 = vmax.f32 %v3754, 0.0
        %v4005 = vmax.f32 %v3759, 0.0
        %v4006 = vmax.f32 %v3764, 0.0
        %v4007 = vmax.f32 %v3769, 0.0
        %v4008 = vmax.f32 %v3774, 0.0
        %v4009 = vmax.f32 %v3779, 0.0
        %v4010 = vmax.f32 %v3784, 0.0
        %v4011 = vmax.f32 %v3789, 0.0
        %v4012 = vmax.f32 %v3794, 0.0
        %v4013 = vmax.f32 %v3799, 0.0
        %v4014 = vmax.f32 %v3804, 0.0
        %v4015 = vmax.f32 %v3809, 0.0
        %v4016 = vmax.f32 %v3814, 0.0
        %v4017 = vmax.f32 %v3819, 0.0
        %v4018 = vmax.f32 %v3824, 0.0
        %v4019 = vmax.f32 %v3829, 0.0
        %v4020 = vmax.f32 %v3834, 0.0
        %v4021 = vmax.f32 %v3839, 0.0
        %v4022 = vmax.f32 %v3844, 0.0
        %v4023 = vmax.f32 %v3849, 0.0
        %v4024 = vmax.f32 %v3854, 0.0
        %v4025 = vmax.f32 %v3859, 0.0
        %v4026 = vmax.f32 %v3864, 0.0
        %v4027 = vmax.f32 %v3869, 0.0
        %v4028 = vmax.f32 %v3874, 0.0
        %v4029 = vmax.f32 %v3879, 0.0
        %v4030 = vmax.f32 %v3884, 0.0
        %v4031 = vmax.f32 %v3889, 0.0
        %v4032 = vmax.f32 %v3894, 0.0
        %v4033 = vmax.f32 %v3899, 0.0
        %v4034 = vmax.f32 %v3904, 0.0
        %v4035 = vmax.f32 %v3909, 0.0
        %v4036 = vmax.f32 %v3914, 0.0
        %v4037 = vmax.f32 %v3919, 0.0
        %v4038 = vmax.f32 %v3924, 0.0
        %v4039 = vmax.f32 %v3929, 0.0
        %v4040 = vmax.f32 %v3934, 0.0
        %v4041 = vmax.f32 %v3939, 0.0
        %v4042 = vmax.f32 %v3944, 0.0
        %v4043 = vmax.f32 %v3949, 0.0
        %v4044 = vmax.f32 %v3954, 0.0
        %v4045 = vmax.f32 %v3959, 0.0
        %v4046 = vmax.f32 %v3964, 0.0
        %v4047 = vmax.f32 %v3969, 0.0
        %v4048 = vmax.f32 %v3974, 0.0
        %v4049 = vmax.f32 %v3979, 0.0
        %v4050 = vmax.f32 %v3984, 0.0
        %s4051 = scalar_lea.vmem [#allocation5], 1024
        %v4052 = vld [vmem:[%s4051] sm:$0xff]
        %v4053 = vld [vmem:[%s4051 + $0x8] sm:$0xff]
        %v4054 = vld [vmem:[%s4051 + $0x10] sm:$0xff]
        %v4055 = vld [vmem:[%s4051 + $0x18] sm:$0xff]
        %v4056 = vld [vmem:[%s4051 + $0x20] sm:$0xff]
        %v4057 = vld [vmem:[%s4051 + $0x28] sm:$0xff]
        %v4058 = vld [vmem:[%s4051 + $0x30] sm:$0xff]
        %v4059 = vld [vmem:[%s4051 + $0x38] sm:$0xff]
        %v4060 = vld [vmem:[%s4051 + $0x40] sm:$0xff]
        %v4061 = vld [vmem:[%s4051 + $0x48] sm:$0xff]
        %v4062 = vld [vmem:[%s4051 + $0x50] sm:$0xff]
        %v4063 = vld [vmem:[%s4051 + $0x58] sm:$0xff]
        %v4064 = vld [vmem:[%s4051 + $0x60] sm:$0xff]
        %v4065 = vld [vmem:[%s4051 + $0x68] sm:$0xff]
        %v4066 = vld [vmem:[%s4051 + $0x70] sm:$0xff]
        %v4067 = vld [vmem:[%s4051 + $0x78] sm:$0xff]
        %v4068 = vld [vmem:[#allocation7 + $0x8] sm:$0x1]
        %v4069 = vlaneseq
        %v4070 = vshrl.u32 %v4069, 7
        %v4071 = vsub.s32 0, %v4070
        %v4072 = vrot.slane %v4068, %v4071
        %4073 = vmatprep.subr.mxu0 0.0
        %4074 = vmatpush1.msra.mxu0 %v4052
        %4075 = vmatprep.subr.mxu0 0.0
        %4076 = vmatpush1.msra.mxu0 %v4053
        %4077 = vmatprep.subr.mxu0 0.0
        %4078 = vmatpush1.msra.mxu0 %v4054
        %4079 = vmatprep.subr.mxu0 0.0
        %4080 = vmatpush1.msra.mxu0 %v4055
        %4081 = vmatprep.subr.mxu0 0.0
        %4082 = vmatpush1.msra.mxu0 %v4056
        %4083 = vmatprep.subr.mxu0 0.0
        %4084 = vmatpush1.msra.mxu0 %v4057
        %4085 = vmatprep.subr.mxu0 0.0
        %4086 = vmatpush1.msra.mxu0 %v4058
        %4087 = vmatprep.subr.mxu0 0.0
        %4088 = vmatpush1.msra.mxu0 %v4059
        %4089 = vmatprep.subr.mxu0 0.0
        %4090 = vmatpush1.msra.mxu0 %v4060
        %4091 = vmatprep.subr.mxu0 0.0
        %4092 = vmatpush1.msra.mxu0 %v4061
        %4093 = vmatprep.subr.mxu0 0.0
        %4094 = vmatpush1.msra.mxu0 %v4062
        %4095 = vmatprep.subr.mxu0 0.0
        %4096 = vmatpush1.msra.mxu0 %v4063
        %4097 = vmatprep.subr.mxu0 0.0
        %4098 = vmatpush1.msra.mxu0 %v4064
        %4099 = vmatprep.subr.mxu0 0.0
        %4100 = vmatpush1.msra.mxu0 %v4065
        %4101 = vmatprep.subr.mxu0 0.0
        %4102 = vmatpush1.msra.mxu0 %v4066
        %4103 = vmatprep.subr.mxu0 0.0
        %4104 = vmatpush1.msra.mxu0 %v4067
        %4105 = vmatprep.subr.mxu0 0.0
        %4106 = vmatpush1.msra.mxu0 0.0
        %4107 = vmatprep.subr.mxu0 0.0
        %4108 = vmatpush1.msra.mxu0 0.0
        %4109 = vmatprep.subr.mxu0 0.0
        %4110 = vmatpush1.msra.mxu0 0.0
        %4111 = vmatprep.subr.mxu0 0.0
        %4112 = vmatpush1.msra.mxu0 0.0
        %4113 = vmatprep.subr.mxu0 0.0
        %4114 = vmatpush1.msra.mxu0 0.0
        %4115 = vmatprep.subr.mxu0 0.0
        %4116 = vmatpush1.msra.mxu0 0.0
        %4117 = vmatprep.subr.mxu0 0.0
        %4118 = vmatpush1.msra.mxu0 0.0
        %4119 = vmatprep.subr.mxu0 0.0
        %4120 = vmatpush1.msra.mxu0 0.0
        %4121 = vmatprep.subr.mxu0 0.0
        %4122 = vmatpush1.msra.mxu0 0.0
        %4123 = vmatprep.subr.mxu0 0.0
        %4124 = vmatpush1.msra.mxu0 0.0
        %4125 = vmatprep.subr.mxu0 0.0
        %4126 = vmatpush1.msra.mxu0 0.0
        %4127 = vmatprep.subr.mxu0 0.0
        %4128 = vmatpush1.msra.mxu0 0.0
        %4129 = vmatprep.subr.mxu0 0.0
        %4130 = vmatpush1.msra.mxu0 0.0
        %4131 = vmatprep.subr.mxu0 0.0
        %4132 = vmatpush1.msra.mxu0 0.0
        %4133 = vmatprep.subr.mxu0 0.0
        %4134 = vmatpush1.msra.mxu0 0.0
        %4135 = vmatprep.subr.mxu0 0.0
        %4136 = vmatpush1.msra.mxu0 0.0
        %4137 = vmatprep.mubr.f32.mxu0 0.0
        %4138 = vmatmul.mubr.f32.gmra.mrb[0].mxu0 %v3987
        %v4139 = vpop.f32.mrb[0].mxu0
        %v4140 = vadd.f32 %v4072, %v4139
        %v4141 = vpop.f32.mrb[0].mxu0
        %4142 = vmatprep.mubr.f32.mxu0 0.0
        %4143 = vmatmul.mubr.f32.gmra.mrb[0].mxu0 %v3988
        %v4144 = vpop.f32.mrb[0].mxu0
        %v4145 = vadd.f32 %v4072, %v4144
        %v4146 = vpop.f32.mrb[0].mxu0
        %4147 = vmatprep.mubr.f32.mxu0 0.0
        %4148 = vmatmul.mubr.f32.gmra.mrb[0].mxu0 %v3989
        %v4149 = vpop.f32.mrb[0].mxu0
        %v4150 = vadd.f32 %v4072, %v4149
        %v4151 = vpop.f32.mrb[0].mxu0
        %4152 = vmatprep.mubr.f32.mxu0 0.0
        %4153 = vmatmul.mubr.f32.gmra.mrb[0].mxu0 %v3990
        %v4154 = vpop.f32.mrb[0].mxu0
        %v4155 = vadd.f32 %v4072, %v4154
        %v4156 = vpop.f32.mrb[0].mxu0
        %4157 = vmatprep.mubr.f32.mxu0 0.0
        %4158 = vmatmul.mubr.f32.gmra.mrb[0].mxu0 %v3991
        %v4159 = vpop.f32.mrb[0].mxu0
        %v4160 = vadd.f32 %v4072, %v4159
        %v4161 = vpop.f32.mrb[0].mxu0
        %4162 = vmatprep.mubr.f32.mxu0 0.0
        %4163 = vmatmul.mubr.f32.gmra.mrb[0].mxu0 %v3992
        %v4164 = vpop.f32.mrb[0].mxu0
        %v4165 = vadd.f32 %v4072, %v4164
        %v4166 = vpop.f32.mrb[0].mxu0
        %4167 = vmatprep.mubr.f32.mxu0 0.0
        %4168 = vmatmul.mubr.f32.gmra.mrb[0].mxu0 %v3993
        %v4169 = vpop.f32.mrb[0].mxu0
        %v4170 = vadd.f32 %v4072, %v4169
        %v4171 = vpop.f32.mrb[0].mxu0
        %4172 = vmatprep.mubr.f32.mxu0 0.0
        %4173 = vmatmul.mubr.f32.gmra.mrb[0].mxu0 %v3994
        %v4174 = vpop.f32.mrb[0].mxu0
        %v4175 = vadd.f32 %v4072, %v4174
        %v4176 = vpop.f32.mrb[0].mxu0
        %4177 = vmatprep.mubr.f32.mxu0 0.0
        %4178 = vmatmul.mubr.f32.gmra.mrb[0].mxu0 %v3995
        %v4179 = vpop.f32.mrb[0].mxu0
        %v4180 = vadd.f32 %v4072, %v4179
        %v4181 = vpop.f32.mrb[0].mxu0
        %4182 = vmatprep.mubr.f32.mxu0 0.0
        %4183 = vmatmul.mubr.f32.gmra.mrb[0].mxu0 %v3996
        %v4184 = vpop.f32.mrb[0].mxu0
        %v4185 = vadd.f32 %v4072, %v4184
        %v4186 = vpop.f32.mrb[0].mxu0
        %4187 = vmatprep.mubr.f32.mxu0 0.0
        %4188 = vmatmul.mubr.f32.gmra.mrb[0].mxu0 %v3997
        %v4189 = vpop.f32.mrb[0].mxu0
        %v4190 = vadd.f32 %v4072, %v4189
        %v4191 = vpop.f32.mrb[0].mxu0
        %4192 = vmatprep.mubr.f32.mxu0 0.0
        %4193 = vmatmul.mubr.f32.gmra.mrb[0].mxu0 %v3998
        %v4194 = vpop.f32.mrb[0].mxu0
        %v4195 = vadd.f32 %v4072, %v4194
        %v4196 = vpop.f32.mrb[0].mxu0
        %4197 = vmatprep.mubr.f32.mxu0 0.0
        %4198 = vmatmul.mubr.f32.gmra.mrb[0].mxu0 %v3999
        %v4199 = vpop.f32.mrb[0].mxu0
        %v4200 = vadd.f32 %v4072, %v4199
        %v4201 = vpop.f32.mrb[0].mxu0
        %4202 = vmatprep.mubr.f32.mxu0 0.0
        %4203 = vmatmul.mubr.f32.gmra.mrb[0].mxu0 %v4000
        %v4204 = vpop.f32.mrb[0].mxu0
        %v4205 = vadd.f32 %v4072, %v4204
        %v4206 = vpop.f32.mrb[0].mxu0
        %4207 = vmatprep.mubr.f32.mxu0 0.0
        %4208 = vmatmul.mubr.f32.gmra.mrb[0].mxu0 %v4001
        %v4209 = vpop.f32.mrb[0].mxu0
        %v4210 = vadd.f32 %v4072, %v4209
        %v4211 = vpop.f32.mrb[0].mxu0
        %4212 = vmatprep.mubr.f32.mxu0 0.0
        %4213 = vmatmul.mubr.f32.gmra.mrb[0].mxu0 %v4002
        %v4214 = vpop.f32.mrb[0].mxu0
        %v4215 = vadd.f32 %v4072, %v4214
        %v4216 = vpop.f32.mrb[0].mxu0
        %4217 = vmatprep.mubr.f32.mxu0 0.0
        %4218 = vmatmul.mubr.f32.gmra.mrb[0].mxu0 %v4003
        %v4219 = vpop.f32.mrb[0].mxu0
        %v4220 = vadd.f32 %v4072, %v4219
        %v4221 = vpop.f32.mrb[0].mxu0
        %4222 = vmatprep.mubr.f32.mxu0 0.0
        %4223 = vmatmul.mubr.f32.gmra.mrb[0].mxu0 %v4004
        %v4224 = vpop.f32.mrb[0].mxu0
        %v4225 = vadd.f32 %v4072, %v4224
        %v4226 = vpop.f32.mrb[0].mxu0
        %4227 = vmatprep.mubr.f32.mxu0 0.0
        %4228 = vmatmul.mubr.f32.gmra.mrb[0].mxu0 %v4005
        %v4229 = vpop.f32.mrb[0].mxu0
        %v4230 = vadd.f32 %v4072, %v4229
        %v4231 = vpop.f32.mrb[0].mxu0
        %4232 = vmatprep.mubr.f32.mxu0 0.0
        %4233 = vmatmul.mubr.f32.gmra.mrb[0].mxu0 %v4006
        %v4234 = vpop.f32.mrb[0].mxu0
        %v4235 = vadd.f32 %v4072, %v4234
        %v4236 = vpop.f32.mrb[0].mxu0
        %4237 = vmatprep.mubr.f32.mxu0 0.0
        %4238 = vmatmul.mubr.f32.gmra.mrb[0].mxu0 %v4007
        %v4239 = vpop.f32.mrb[0].mxu0
        %v4240 = vadd.f32 %v4072, %v4239
        %v4241 = vpop.f32.mrb[0].mxu0
        %4242 = vmatprep.mubr.f32.mxu0 0.0
        %4243 = vmatmul.mubr.f32.gmra.mrb[0].mxu0 %v4008
        %v4244 = vpop.f32.mrb[0].mxu0
        %v4245 = vadd.f32 %v4072, %v4244
        %v4246 = vpop.f32.mrb[0].mxu0
        %4247 = vmatprep.mubr.f32.mxu0 0.0
        %4248 = vmatmul.mubr.f32.gmra.mrb[0].mxu0 %v4009
        %v4249 = vpop.f32.mrb[0].mxu0
        %v4250 = vadd.f32 %v4072, %v4249
        %v4251 = vpop.f32.mrb[0].mxu0
        %4252 = vmatprep.mubr.f32.mxu0 0.0
        %4253 = vmatmul.mubr.f32.gmra.mrb[0].mxu0 %v4010
        %v4254 = vpop.f32.mrb[0].mxu0
        %v4255 = vadd.f32 %v4072, %v4254
        %v4256 = vpop.f32.mrb[0].mxu0
        %4257 = vmatprep.mubr.f32.mxu0 0.0
        %4258 = vmatmul.mubr.f32.gmra.mrb[0].mxu0 %v4011
        %v4259 = vpop.f32.mrb[0].mxu0
        %v4260 = vadd.f32 %v4072, %v4259
        %v4261 = vpop.f32.mrb[0].mxu0
        %4262 = vmatprep.mubr.f32.mxu0 0.0
        %4263 = vmatmul.mubr.f32.gmra.mrb[0].mxu0 %v4012
        %v4264 = vpop.f32.mrb[0].mxu0
        %v4265 = vadd.f32 %v4072, %v4264
        %v4266 = vpop.f32.mrb[0].mxu0
        %4267 = vmatprep.mubr.f32.mxu0 0.0
        %4268 = vmatmul.mubr.f32.gmra.mrb[0].mxu0 %v4013
        %v4269 = vpop.f32.mrb[0].mxu0
        %v4270 = vadd.f32 %v4072, %v4269
        %v4271 = vpop.f32.mrb[0].mxu0
        %4272 = vmatprep.mubr.f32.mxu0 0.0
        %4273 = vmatmul.mubr.f32.gmra.mrb[0].mxu0 %v4014
        %v4274 = vpop.f32.mrb[0].mxu0
        %v4275 = vadd.f32 %v4072, %v4274
        %v4276 = vpop.f32.mrb[0].mxu0
        %4277 = vmatprep.mubr.f32.mxu0 0.0
        %4278 = vmatmul.mubr.f32.gmra.mrb[0].mxu0 %v4015
        %v4279 = vpop.f32.mrb[0].mxu0
        %v4280 = vadd.f32 %v4072, %v4279
        %v4281 = vpop.f32.mrb[0].mxu0
        %4282 = vmatprep.mubr.f32.mxu0 0.0
        %4283 = vmatmul.mubr.f32.gmra.mrb[0].mxu0 %v4016
        %v4284 = vpop.f32.mrb[0].mxu0
        %v4285 = vadd.f32 %v4072, %v4284
        %v4286 = vpop.f32.mrb[0].mxu0
        %4287 = vmatprep.mubr.f32.mxu0 0.0
        %4288 = vmatmul.mubr.f32.gmra.mrb[0].mxu0 %v4017
        %v4289 = vpop.f32.mrb[0].mxu0
        %v4290 = vadd.f32 %v4072, %v4289
        %v4291 = vpop.f32.mrb[0].mxu0
        %4292 = vmatprep.mubr.f32.mxu0 0.0
        %4293 = vmatmul.mubr.f32.gmra.mrb[0].mxu0 %v4018
        %v4294 = vpop.f32.mrb[0].mxu0
        %v4295 = vadd.f32 %v4072, %v4294
        %v4296 = vpop.f32.mrb[0].mxu0
        %4297 = vmatprep.mubr.f32.mxu0 0.0
        %4298 = vmatmul.mubr.f32.gmra.mrb[0].mxu0 %v4019
        %v4299 = vpop.f32.mrb[0].mxu0
        %v4300 = vadd.f32 %v4072, %v4299
        %v4301 = vpop.f32.mrb[0].mxu0
        %4302 = vmatprep.mubr.f32.mxu0 0.0
        %4303 = vmatmul.mubr.f32.gmra.mrb[0].mxu0 %v4020
        %v4304 = vpop.f32.mrb[0].mxu0
        %v4305 = vadd.f32 %v4072, %v4304
        %v4306 = vpop.f32.mrb[0].mxu0
        %4307 = vmatprep.mubr.f32.mxu0 0.0
        %4308 = vmatmul.mubr.f32.gmra.mrb[0].mxu0 %v4021
        %v4309 = vpop.f32.mrb[0].mxu0
        %v4310 = vadd.f32 %v4072, %v4309
        %v4311 = vpop.f32.mrb[0].mxu0
        %4312 = vmatprep.mubr.f32.mxu0 0.0
        %4313 = vmatmul.mubr.f32.gmra.mrb[0].mxu0 %v4022
        %v4314 = vpop.f32.mrb[0].mxu0
        %v4315 = vadd.f32 %v4072, %v4314
        %v4316 = vpop.f32.mrb[0].mxu0
        %4317 = vmatprep.mubr.f32.mxu0 0.0
        %4318 = vmatmul.mubr.f32.gmra.mrb[0].mxu0 %v4023
        %v4319 = vpop.f32.mrb[0].mxu0
        %v4320 = vadd.f32 %v4072, %v4319
        %v4321 = vpop.f32.mrb[0].mxu0
        %4322 = vmatprep.mubr.f32.mxu0 0.0
        %4323 = vmatmul.mubr.f32.gmra.mrb[0].mxu0 %v4024
        %v4324 = vpop.f32.mrb[0].mxu0
        %v4325 = vadd.f32 %v4072, %v4324
        %v4326 = vpop.f32.mrb[0].mxu0
        %4327 = vmatprep.mubr.f32.mxu0 0.0
        %4328 = vmatmul.mubr.f32.gmra.mrb[0].mxu0 %v4025
        %v4329 = vpop.f32.mrb[0].mxu0
        %v4330 = vadd.f32 %v4072, %v4329
        %v4331 = vpop.f32.mrb[0].mxu0
        %4332 = vmatprep.mubr.f32.mxu0 0.0
        %4333 = vmatmul.mubr.f32.gmra.mrb[0].mxu0 %v4026
        %v4334 = vpop.f32.mrb[0].mxu0
        %v4335 = vadd.f32 %v4072, %v4334
        %v4336 = vpop.f32.mrb[0].mxu0
        %4337 = vmatprep.mubr.f32.mxu0 0.0
        %4338 = vmatmul.mubr.f32.gmra.mrb[0].mxu0 %v4027
        %v4339 = vpop.f32.mrb[0].mxu0
        %v4340 = vadd.f32 %v4072, %v4339
        %v4341 = vpop.f32.mrb[0].mxu0
        %4342 = vmatprep.mubr.f32.mxu0 0.0
        %4343 = vmatmul.mubr.f32.gmra.mrb[0].mxu0 %v4028
        %v4344 = vpop.f32.mrb[0].mxu0
        %v4345 = vadd.f32 %v4072, %v4344
        %v4346 = vpop.f32.mrb[0].mxu0
        %4347 = vmatprep.mubr.f32.mxu0 0.0
        %4348 = vmatmul.mubr.f32.gmra.mrb[0].mxu0 %v4029
        %v4349 = vpop.f32.mrb[0].mxu0
        %v4350 = vadd.f32 %v4072, %v4349
        %v4351 = vpop.f32.mrb[0].mxu0
        %4352 = vmatprep.mubr.f32.mxu0 0.0
        %4353 = vmatmul.mubr.f32.gmra.mrb[0].mxu0 %v4030
        %v4354 = vpop.f32.mrb[0].mxu0
        %v4355 = vadd.f32 %v4072, %v4354
        %v4356 = vpop.f32.mrb[0].mxu0
        %4357 = vmatprep.mubr.f32.mxu0 0.0
        %4358 = vmatmul.mubr.f32.gmra.mrb[0].mxu0 %v4031
        %v4359 = vpop.f32.mrb[0].mxu0
        %v4360 = vadd.f32 %v4072, %v4359
        %v4361 = vpop.f32.mrb[0].mxu0
        %4362 = vmatprep.mubr.f32.mxu0 0.0
        %4363 = vmatmul.mubr.f32.gmra.mrb[0].mxu0 %v4032
        %v4364 = vpop.f32.mrb[0].mxu0
        %v4365 = vadd.f32 %v4072, %v4364
        %v4366 = vpop.f32.mrb[0].mxu0
        %4367 = vmatprep.mubr.f32.mxu0 0.0
        %4368 = vmatmul.mubr.f32.gmra.mrb[0].mxu0 %v4033
        %v4369 = vpop.f32.mrb[0].mxu0
        %v4370 = vadd.f32 %v4072, %v4369
        %v4371 = vpop.f32.mrb[0].mxu0
        %4372 = vmatprep.mubr.f32.mxu0 0.0
        %4373 = vmatmul.mubr.f32.gmra.mrb[0].mxu0 %v4034
        %v4374 = vpop.f32.mrb[0].mxu0
        %v4375 = vadd.f32 %v4072, %v4374
        %v4376 = vpop.f32.mrb[0].mxu0
        %4377 = vmatprep.mubr.f32.mxu0 0.0
        %4378 = vmatmul.mubr.f32.gmra.mrb[0].mxu0 %v4035
        %v4379 = vpop.f32.mrb[0].mxu0
        %v4380 = vadd.f32 %v4072, %v4379
        %v4381 = vpop.f32.mrb[0].mxu0
        %4382 = vmatprep.mubr.f32.mxu0 0.0
        %4383 = vmatmul.mubr.f32.gmra.mrb[0].mxu0 %v4036
        %v4384 = vpop.f32.mrb[0].mxu0
        %v4385 = vadd.f32 %v4072, %v4384
        %v4386 = vpop.f32.mrb[0].mxu0
        %4387 = vmatprep.mubr.f32.mxu0 0.0
        %4388 = vmatmul.mubr.f32.gmra.mrb[0].mxu0 %v4037
        %v4389 = vpop.f32.mrb[0].mxu0
        %v4390 = vadd.f32 %v4072, %v4389
        %v4391 = vpop.f32.mrb[0].mxu0
        %4392 = vmatprep.mubr.f32.mxu0 0.0
        %4393 = vmatmul.mubr.f32.gmra.mrb[0].mxu0 %v4038
        %v4394 = vpop.f32.mrb[0].mxu0
        %v4395 = vadd.f32 %v4072, %v4394
        %v4396 = vpop.f32.mrb[0].mxu0
        %4397 = vmatprep.mubr.f32.mxu0 0.0
        %4398 = vmatmul.mubr.f32.gmra.mrb[0].mxu0 %v4039
        %v4399 = vpop.f32.mrb[0].mxu0
        %v4400 = vadd.f32 %v4072, %v4399
        %v4401 = vpop.f32.mrb[0].mxu0
        %4402 = vmatprep.mubr.f32.mxu0 0.0
        %4403 = vmatmul.mubr.f32.gmra.mrb[0].mxu0 %v4040
        %v4404 = vpop.f32.mrb[0].mxu0
        %v4405 = vadd.f32 %v4072, %v4404
        %v4406 = vpop.f32.mrb[0].mxu0
        %4407 = vmatprep.mubr.f32.mxu0 0.0
        %4408 = vmatmul.mubr.f32.gmra.mrb[0].mxu0 %v4041
        %v4409 = vpop.f32.mrb[0].mxu0
        %v4410 = vadd.f32 %v4072, %v4409
        %v4411 = vpop.f32.mrb[0].mxu0
        %4412 = vmatprep.mubr.f32.mxu0 0.0
        %4413 = vmatmul.mubr.f32.gmra.mrb[0].mxu0 %v4042
        %v4414 = vpop.f32.mrb[0].mxu0
        %v4415 = vadd.f32 %v4072, %v4414
        %v4416 = vpop.f32.mrb[0].mxu0
        %4417 = vmatprep.mubr.f32.mxu0 0.0
        %4418 = vmatmul.mubr.f32.gmra.mrb[0].mxu0 %v4043
        %v4419 = vpop.f32.mrb[0].mxu0
        %v4420 = vadd.f32 %v4072, %v4419
        %v4421 = vpop.f32.mrb[0].mxu0
        %4422 = vmatprep.mubr.f32.mxu0 0.0
        %4423 = vmatmul.mubr.f32.gmra.mrb[0].mxu0 %v4044
        %v4424 = vpop.f32.mrb[0].mxu0
        %v4425 = vadd.f32 %v4072, %v4424
        %v4426 = vpop.f32.mrb[0].mxu0
        %4427 = vmatprep.mubr.f32.mxu0 0.0
        %4428 = vmatmul.mubr.f32.gmra.mrb[0].mxu0 %v4045
        %v4429 = vpop.f32.mrb[0].mxu0
        %v4430 = vadd.f32 %v4072, %v4429
        %v4431 = vpop.f32.mrb[0].mxu0
        %4432 = vmatprep.mubr.f32.mxu0 0.0
        %4433 = vmatmul.mubr.f32.gmra.mrb[0].mxu0 %v4046
        %v4434 = vpop.f32.mrb[0].mxu0
        %v4435 = vadd.f32 %v4072, %v4434
        %v4436 = vpop.f32.mrb[0].mxu0
        %4437 = vmatprep.mubr.f32.mxu0 0.0
        %4438 = vmatmul.mubr.f32.gmra.mrb[0].mxu0 %v4047
        %v4439 = vpop.f32.mrb[0].mxu0
        %v4440 = vadd.f32 %v4072, %v4439
        %v4441 = vpop.f32.mrb[0].mxu0
        %4442 = vmatprep.mubr.f32.mxu0 0.0
        %4443 = vmatmul.mubr.f32.gmra.mrb[0].mxu0 %v4048
        %v4444 = vpop.f32.mrb[0].mxu0
        %v4445 = vadd.f32 %v4072, %v4444
        %v4446 = vpop.f32.mrb[0].mxu0
        %4447 = vmatprep.mubr.f32.mxu0 0.0
        %4448 = vmatmul.mubr.f32.gmra.mrb[0].mxu0 %v4049
        %v4449 = vpop.f32.mrb[0].mxu0
        %v4450 = vadd.f32 %v4072, %v4449
        %v4451 = vpop.f32.mrb[0].mxu0
        %4452 = vmatprep.mubr.f32.mxu0 0.0
        %4453 = vmatmul.mubr.f32.gmra.mrb[0].mxu0 %v4050
        %v4454 = vpop.f32.mrb[0].mxu0
        %v4455 = vadd.f32 %v4072, %v4454
        %v4456 = vpop.f32.mrb[0].mxu0
        %4457 = vdwg.mxu0
        %4458 = vst [vmem:[%s217] sm:$0xff] %v4140
        %4459 = vst [vmem:[%s217 + $0x8] sm:$0xff] %v4145
        %4460 = vst [vmem:[%s217 + $0x10] sm:$0xff] %v4150
        %4461 = vst [vmem:[%s217 + $0x18] sm:$0xff] %v4155
        %4462 = vst [vmem:[%s217 + $0x20] sm:$0xff] %v4160
        %4463 = vst [vmem:[%s217 + $0x28] sm:$0xff] %v4165
        %4464 = vst [vmem:[%s217 + $0x30] sm:$0xff] %v4170
        %4465 = vst [vmem:[%s217 + $0x38] sm:$0xff] %v4175
        %4466 = vst [vmem:[%s217 + $0x40] sm:$0xff] %v4180
        %4467 = vst [vmem:[%s217 + $0x48] sm:$0xff] %v4185
        %4468 = vst [vmem:[%s217 + $0x50] sm:$0xff] %v4190
        %4469 = vst [vmem:[%s217 + $0x58] sm:$0xff] %v4195
        %4470 = vst [vmem:[%s217 + $0x60] sm:$0xff] %v4200
        %4471 = vst [vmem:[%s217 + $0x68] sm:$0xff] %v4205
        %4472 = vst [vmem:[%s217 + $0x70] sm:$0xff] %v4210
        %4473 = vst [vmem:[%s217 + $0x78] sm:$0xff] %v4215
        %4474 = vst [vmem:[%s217 + $0x80] sm:$0xff] %v4220
        %4475 = vst [vmem:[%s217 + $0x88] sm:$0xff] %v4225
        %4476 = vst [vmem:[%s217 + $0x90] sm:$0xff] %v4230
        %4477 = vst [vmem:[%s217 + $0x98] sm:$0xff] %v4235
        %4478 = vst [vmem:[%s217 + $0xa0] sm:$0xff] %v4240
        %4479 = vst [vmem:[%s217 + $0xa8] sm:$0xff] %v4245
        %4480 = vst [vmem:[%s217 + $0xb0] sm:$0xff] %v4250
        %4481 = vst [vmem:[%s217 + $0xb8] sm:$0xff] %v4255
        %4482 = vst [vmem:[%s217 + $0xc0] sm:$0xff] %v4260
        %4483 = vst [vmem:[%s217 + $0xc8] sm:$0xff] %v4265
        %4484 = vst [vmem:[%s217 + $0xd0] sm:$0xff] %v4270
        %4485 = vst [vmem:[%s217 + $0xd8] sm:$0xff] %v4275
        %4486 = vst [vmem:[%s217 + $0xe0] sm:$0xff] %v4280
        %4487 = vst [vmem:[%s217 + $0xe8] sm:$0xff] %v4285
        %4488 = vst [vmem:[%s217 + $0xf0] sm:$0xff] %v4290
        %4489 = vst [vmem:[%s217 + $0xf8] sm:$0xff] %v4295
        %4490 = vst [vmem:[%s217 + $0x100] sm:$0xff] %v4300
        %4491 = vst [vmem:[%s217 + $0x108] sm:$0xff] %v4305
        %4492 = vst [vmem:[%s217 + $0x110] sm:$0xff] %v4310
        %4493 = vst [vmem:[%s217 + $0x118] sm:$0xff] %v4315
        %4494 = vst [vmem:[%s217 + $0x120] sm:$0xff] %v4320
        %4495 = vst [vmem:[%s217 + $0x128] sm:$0xff] %v4325
        %4496 = vst [vmem:[%s217 + $0x130] sm:$0xff] %v4330
        %4497 = vst [vmem:[%s217 + $0x138] sm:$0xff] %v4335
        %4498 = vst [vmem:[%s217 + $0x140] sm:$0xff] %v4340
        %4499 = vst [vmem:[%s217 + $0x148] sm:$0xff] %v4345
        %4500 = vst [vmem:[%s217 + $0x150] sm:$0xff] %v4350
        %4501 = vst [vmem:[%s217 + $0x158] sm:$0xff] %v4355
        %4502 = vst [vmem:[%s217 + $0x160] sm:$0xff] %v4360
        %4503 = vst [vmem:[%s217 + $0x168] sm:$0xff] %v4365
        %4504 = vst [vmem:[%s217 + $0x170] sm:$0xff] %v4370
        %4505 = vst [vmem:[%s217 + $0x178] sm:$0xff] %v4375
        %4506 = vst [vmem:[%s217 + $0x180] sm:$0xff] %v4380
        %4507 = vst [vmem:[%s217 + $0x188] sm:$0xff] %v4385
        %4508 = vst [vmem:[%s217 + $0x190] sm:$0xff] %v4390
        %4509 = vst [vmem:[%s217 + $0x198] sm:$0xff] %v4395
        %4510 = vst [vmem:[%s217 + $0x1a0] sm:$0xff] %v4400
        %4511 = vst [vmem:[%s217 + $0x1a8] sm:$0xff] %v4405
        %4512 = vst [vmem:[%s217 + $0x1b0] sm:$0xff] %v4410
        %4513 = vst [vmem:[%s217 + $0x1b8] sm:$0xff] %v4415
        %4514 = vst [vmem:[%s217 + $0x1c0] sm:$0xff] %v4420
        %4515 = vst [vmem:[%s217 + $0x1c8] sm:$0xff] %v4425
        %4516 = vst [vmem:[%s217 + $0x1d0] sm:$0xff] %v4430
        %4517 = vst [vmem:[%s217 + $0x1d8] sm:$0xff] %v4435
        %4518 = vst [vmem:[%s217 + $0x1e0] sm:$0xff] %v4440
        %4519 = vst [vmem:[%s217 + $0x1e8] sm:$0xff] %v4445
        %4520 = vst [vmem:[%s217 + $0x1f0] sm:$0xff] %v4450
        %4521 = vst [vmem:[%s217 + $0x1f8] sm:$0xff] %v4455
        %s4522 = sand.u32 %s97, 1
        %s4523 = scalar_lea.sflag [#allocation4], %s4522
        %s4524 = sand.u32 %s97, 1
        %s4525 = smul.addr %s4524, 512
        %s4526 = scalar_lea.vmem [#allocation8], %s4525
        // Predicated region
        $region45: #{tpu_custom_call.1} parent=31 // pred_check
          %p4527 = pneg %p107
        $region46: #{tpu_custom_call.1} parent=31 // pred_check_branch
          %4529 = sbr.rel (%p4527) target = $region48
        $region47: #{tpu_custom_call.1} parent=31 // pred_region
          %s4530 = smul.u32 64, %s21
          %s4532 = ssub.s32 8192, 8192
          %4533 = vsyncadd %s4523, %s4532
          %s4534 = smul.addr %s4530, 128
          %s4535 = scalar_lea.hbm %s3, %s4534
          %s4536 = sshll.u32 %s4526, 4
          %s4537 = int_to_ptr.vmem [resolvable:$true] %s4536
          %4542 = dma.vmem_to_hbm [thread:$0]  %s4537, 8192, %s4535, %s4523, 128, 128, 8
        $region48: #{tpu_custom_call.1} parent=31 // pred_fallthru
          _
      $region32: #{tpu_custom_call.1} parent=5 // pred_fallthru
        _
      %p4543 = scmp.le.s32.totalorder 2, %s16
      // Predicated region
      $region49: #{tpu_custom_call.1} parent=5 // pred_check
        %p4544 = pneg %p4543
      $region50: #{tpu_custom_call.1} parent=5 // pred_check_branch
        %4546 = sbr.rel (%p4544) target = $region52
      $region51: #{tpu_custom_call.1} parent=5 // pred_region
        %s4547 = ssub.s32 %s16, 2
        // Predicated region
        $region53: #{tpu_custom_call.1} parent=51 // pred_check
          %p4548 = pneg %p113
        $region54: #{tpu_custom_call.1} parent=51 // pred_check_branch
          %4550 = sbr.rel (%p4548) target = $region56
        $region55: #{tpu_custom_call.1} parent=51 // pred_region
          %s4551 = sand.u32 %s98, 1
          %s4552 = scalar_lea.sflag [#allocation4], %s4551
          %s4553 = sand.u32 %s98, 1
          %s4554 = smul.addr %s4553, 512
          %s4555 = scalar_lea.vmem [#allocation8], %s4554
          %4556 = dma.done %s4552, 8192
        $region56: #{tpu_custom_call.1} parent=51 // pred_fallthru
          _
      $region52: #{tpu_custom_call.1} parent=5 // pred_fallthru
        _
    $region6: #{tpu_custom_call.1} parent=1 // loop_footer
      %s20 = sadd.s32 1, %s16
    $region7: #{tpu_custom_call.1} parent=1 // loop_footer_branch
      %15 = sbr.rel target = $region3
    $region8: #{tpu_custom_call.1} parent=1 // loop_exit
      _
    %4557 = vsyncpa [#allocation3], 1
    %s4558 = scalar_lea.sflag [#allocation3], 1
    %4559 = vsyncpa %s4558, 1
    %4560 = vsyncpa [#allocation6], 1
    %4561 = vsyncpa [#allocation4], 1
    %s4562 = scalar_lea.sflag [#allocation4], 1
    %4563 = vsyncpa %s4562, 1

</llo_original>
